<compile_context>
chip_gen: v7x
topology: tpu7x:2x2x1
jax: 0.10.0
libtpu: 0.0.40
codegen_flags: <defaults>
</compile_context>

<pallas_src>
import numpy as np
import jax
import jax.numpy as jnp
from jax.experimental import pallas as pl
from jax.experimental.pallas import tpu as pltpu


def _round_up(x, m):
    return (x + m - 1) // m * m


def lstm_model_kernel(x_ref, w1_ref, b1_ref, wih_ref, whh_ref, bg_ref,
                      w2_ref, b2_ref, out_ref):
    """Forward pass for one batch tile; all operands resident in VMEM.

    x_ref  : (Bblk, T, F)  bf16   batch-first input tile
    w1_ref : (F, Hp) bf16, b1_ref : (1, Hp) f32     linear_1 (transposed, H padded)
    wih_ref: (Hp, 4Hp) bf16, whh_ref: (Hp, 4Hp) bf16  LSTM weights (gate order i,f,g,o,
                                                      each gate in its own Hp-wide slot)
    bg_ref : (1, 4Hp) f32                            combined LSTM bias (b_ih + b_hh)
    w2_ref : (Hp, Op) bf16, b2_ref : (1, Op) f32     linear_2 (transposed, O padded)
    out_ref: (Bblk, Op) f32
    """
    Bblk, T, F = x_ref.shape
    Hp = w1_ref.shape[1]

    # ---- Phase 1: hoisted time-parallel precompute (one big MXU matmul) ----
    x2d = x_ref[...].reshape(Bblk * T, F)                         # bf16, layout-free reshape
    xt = jnp.maximum(
        jnp.dot(x2d, w1_ref[...], preferred_element_type=jnp.float32)
        + b1_ref[...], 0.0)                                       # (Bblk*T, Hp) f32
    gx = (jnp.dot(xt.astype(jnp.bfloat16), wih_ref[...],
                  preferred_element_type=jnp.float32)
          + bg_ref[...])                                          # (Bblk*T, 4Hp) f32
    gx = gx.reshape(Bblk, T, 4 * Hp)

    whh = whh_ref[...]                                            # (Hp, 4Hp) bf16

    # ---- Phase 2: serial recurrence (only h@Whh + elementwise per step) ----
    # Fully unrolled: T is static and small, so the per-step MXU push overlaps
    # the previous step's VPU/EUP tail.  Gate slices are 128-lane aligned.
    h = jnp.zeros((Bblk, Hp), jnp.float32)
    c = jnp.zeros((Bblk, Hp), jnp.float32)
    for t in range(T):  # static full unroll
        gates = gx[:, t, :] + jnp.dot(h.astype(jnp.bfloat16), whh,
                                      preferred_element_type=jnp.float32)
        i_g = jax.nn.sigmoid(gates[:, 0 * Hp:1 * Hp])
        f_g = jax.nn.sigmoid(gates[:, 1 * Hp:2 * Hp])
        g_g = jnp.tanh(gates[:, 2 * Hp:3 * Hp])
        o_g = jax.nn.sigmoid(gates[:, 3 * Hp:4 * Hp])
        c = f_g * c + i_g * g_g
        h = o_g * jnp.tanh(c)

    # TODO(synk): nn.Dropout(p=0.2) is identity in eval mode; training-mode
    # dropout is not applied here.
    out_ref[...] = (jnp.dot(h.astype(jnp.bfloat16), w2_ref[...],
                            preferred_element_type=jnp.float32)
                    + b2_ref[...])


def lstm_model_forward(x_btf, params):
    """x_btf: (B, T, F) float32 (PyTorch batch_first layout). Returns (B, O)."""
    (w1, b1, wih, whh, bg, w2, b2) = params
    B, T, F = x_btf.shape
    H = w1.shape[1]
    O = w2.shape[1]

    Hp = _round_up(H, 128)          # lane-aligned gate slots
    Op = _round_up(O, 128)          # lane-dense output store
    Bp = _round_up(B, 8)            # sublane-aligned batch
    if Bp > 128:
        Bp = _round_up(B, 128)
    block_b = min(Bp, 128)

    f32, bf16 = jnp.float32, jnp.bfloat16

    # Zero-padding is exact: padded hidden columns stay identically zero
    # through the recurrence; padded batch rows / output columns are sliced off.
    xp = jnp.zeros((Bp, T, F), bf16).at[:B].set(x_btf.astype(bf16))
    w1p = jnp.zeros((F, Hp), bf16).at[:, :H].set(w1.astype(bf16))
    b1p = jnp.zeros((1, Hp), f32).at[:, :H].set(b1)
    wihp = jnp.zeros((Hp, 4 * Hp), bf16)
    whhp = jnp.zeros((Hp, 4 * Hp), bf16)
    bgp = jnp.zeros((1, 4 * Hp), f32)
    for g in range(4):  # place each gate in its own 128-aligned Hp-wide slot
        wihp = wihp.at[:H, g * Hp:g * Hp + H].set(wih[:, g * H:(g + 1) * H].astype(bf16))
        whhp = whhp.at[:H, g * Hp:g * Hp + H].set(whh[:, g * H:(g + 1) * H].astype(bf16))
        bgp = bgp.at[:, g * Hp:g * Hp + H].set(bg[:, g * H:(g + 1) * H])
    w2p = jnp.zeros((Hp, Op), bf16).at[:H, :O].set(w2.astype(bf16))
    b2p = jnp.zeros((1, Op), f32).at[:, :O].set(b2)

    grid = (Bp // block_b,)
    out = pl.pallas_call(
        lstm_model_kernel,
        out_shape=jax.ShapeDtypeStruct((Bp, Op), jnp.float32),
        grid_spec=pltpu.PrefetchScalarGridSpec(
            num_scalar_prefetch=0,
            grid=grid,
            in_specs=[
                pl.BlockSpec((block_b, T, F), lambda i: (i, 0, 0)),
                pl.BlockSpec((F, Hp), lambda i: (0, 0)),
                pl.BlockSpec((1, Hp), lambda i: (0, 0)),
                pl.BlockSpec((Hp, 4 * Hp), lambda i: (0, 0)),
                pl.BlockSpec((Hp, 4 * Hp), lambda i: (0, 0)),
                pl.BlockSpec((1, 4 * Hp), lambda i: (0, 0)),
                pl.BlockSpec((Hp, Op), lambda i: (0, 0)),
                pl.BlockSpec((1, Op), lambda i: (0, 0)),
            ],
            out_specs=pl.BlockSpec((block_b, Op), lambda i: (i, 0)),
        ),
        compiler_params=pltpu.CompilerParams(
            dimension_semantics=("parallel",)),
    )(xp, w1p, b1p, wihp, whhp, bgp, w2p, b2p)
    return out[:B, :O]


def init_params(features, hidden_dim, output_size, seed=0):
    """Deterministic parameter init mirroring the module's init_weights():
       LSTM biases zero, weight_ih kaiming-normal, weight_hh orthogonal,
       linear layers small uniform. Stored transposed to (in, out)."""
    rng = np.random.RandomState(seed)
    H, F, O = hidden_dim, features, output_size

    # linear_1: PyTorch weight (H, F) -> store transposed (F, H)
    lim1 = 1.0 / np.sqrt(F)
    w1 = rng.uniform(-lim1, lim1, size=(F, H)).astype(np.float32)
    b1 = rng.uniform(-lim1, lim1, size=(1, H)).astype(np.float32)

    # LSTM weight_ih_l0: (4H, H), kaiming normal (fan_in = H) -> transposed (H, 4H)
    wih_pt = (rng.randn(4 * H, H) * np.sqrt(2.0 / H)).astype(np.float32)
    # LSTM weight_hh_l0: (4H, H), orthogonal -> transposed (H, 4H)
    a = rng.randn(4 * H, H).astype(np.float32)
    q, r = np.linalg.qr(a)
    q = q * np.sign(np.diag(r))[None, :]
    whh_pt = q.astype(np.float32)
    wih = wih_pt.T.copy()
    whh = whh_pt.T.copy()
    bg = np.zeros((1, 4 * H), np.float32)  # b_ih + b_hh, both zero by init_weights

    # linear_2: PyTorch weight (O, H) -> transposed (H, O)
    lim2 = 1.0 / np.sqrt(H)
    w2 = rng.uniform(-lim2, lim2, size=(H, O)).astype(np.float32)
    b2 = rng.uniform(-lim2, lim2, size=(1, O)).astype(np.float32)

    return tuple(jnp.asarray(p) for p in (w1, b1, wih, whh, bg, w2, b2))


def reference_forward(x_btf, params):
    """Plain-JAX f32 reference of the same forward pass (for verification)."""
    (w1, b1, wih, whh, bg, w2, b2) = params
    H = w1.shape[1]
    xp = jnp.maximum(jnp.einsum('btf,fh->bth', x_btf, w1) + b1[0], 0.0)

    def step(carry, xt):
        h, c = carry
        gates = xt @ wih + h @ whh + bg[0]
        i_g = jax.nn.sigmoid(gates[:, 0 * H:1 * H])
        f_g = jax.nn.sigmoid(gates[:, 1 * H:2 * H])
        g_g = jnp.tanh(gates[:, 2 * H:3 * H])
        o_g = jax.nn.sigmoid(gates[:, 3 * H:4 * H])
        c = f_g * c + i_g * g_g
        h = o_g * jnp.tanh(c)
        return (h, c), None

    B = x_btf.shape[0]
    h0 = jnp.zeros((B, H), jnp.float32)
    (h_n, _), _ = jax.lax.scan(step, (h0, h0), jnp.transpose(xp, (1, 0, 2)))
    return h_n @ w2 + b2[0]


if __name__ == "__main__":
    batch, seq, features = 2, 8, 4
    hidden_dim, output_size = 32, 4

    key = jax.random.PRNGKey(0)
    x = jax.random.normal(key, (batch, seq, features), dtype=jnp.float32)

    params = init_params(features, hidden_dim, output_size, seed=0)

    out = lstm_model_forward(x, params)
    out = jax.block_until_ready(out)

    ref = jax.block_until_ready(reference_forward(x, params))
    # bf16 MXU operands with f32 accumulation -> slightly looser tolerance than f32.
    np.testing.assert_allclose(np.asarray(out), np.asarray(ref), rtol=2e-2, atol=2e-2)

    assert out.shape == (batch, output_size)
    print("KERNEL_OK")
</pallas_src>

<mosaic_0001>
module attributes {stable_mosaic.version = 11 : i64} {
  func.func @lstm_model_kernel(%arg0: i32, %arg1: memref<8x8x4xbf16, #tpu.memory_space<vmem>>, %arg2: memref<4x128xbf16, #tpu.memory_space<vmem>>, %arg3: memref<1x128xf32, #tpu.memory_space<vmem>>, %arg4: memref<128x512xbf16, #tpu.memory_space<vmem>>, %arg5: memref<128x512xbf16, #tpu.memory_space<vmem>>, %arg6: memref<1x512xf32, #tpu.memory_space<vmem>>, %arg7: memref<128x128xbf16, #tpu.memory_space<vmem>>, %arg8: memref<1x128xf32, #tpu.memory_space<vmem>>, %arg9: memref<8x128xf32, #tpu.memory_space<vmem>>) attributes {dimension_semantics = [#tpu.dimension_semantics<parallel>], iteration_bounds = array<i64: 1>, scalar_prefetch = 0 : i64, scratch_operands = 0 : i64, tpu.core_type = #tpu.core_type<tc>, window_params = [{transform_indices = @transform_0, window_bounds = array<i64: 8, 8, 4>}, {pipeline_mode = #tpu.pipeline_mode<synchronous>, transform_indices = @transform_1, window_bounds = array<i64: 4, 128>}, {pipeline_mode = #tpu.pipeline_mode<synchronous>, transform_indices = @transform_2, window_bounds = array<i64: 1, 128>}, {pipeline_mode = #tpu.pipeline_mode<synchronous>, transform_indices = @transform_3, window_bounds = array<i64: 128, 512>}, {pipeline_mode = #tpu.pipeline_mode<synchronous>, transform_indices = @transform_4, window_bounds = array<i64: 128, 512>}, {pipeline_mode = #tpu.pipeline_mode<synchronous>, transform_indices = @transform_5, window_bounds = array<i64: 1, 512>}, {pipeline_mode = #tpu.pipeline_mode<synchronous>, transform_indices = @transform_6, window_bounds = array<i64: 128, 128>}, {pipeline_mode = #tpu.pipeline_mode<synchronous>, transform_indices = @transform_7, window_bounds = array<i64: 1, 128>}, {transform_indices = @transform_8, window_bounds = array<i64: 8, 128>}]} {
    %c0 = arith.constant 0 : index
    %c0_0 = arith.constant 0 : index
    %c0_1 = arith.constant 0 : index
    %0 = vector.load %arg1[%c0, %c0_0, %c0_1] : memref<8x8x4xbf16, #tpu.memory_space<vmem>>, vector<8x8x4xbf16>
    %1 = vector.shape_cast %0 : vector<8x8x4xbf16> to vector<64x4xbf16>
    %c0_2 = arith.constant 0 : index
    %c0_3 = arith.constant 0 : index
    %2 = vector.load %arg2[%c0_2, %c0_3] : memref<4x128xbf16, #tpu.memory_space<vmem>>, vector<4x128xbf16>
    %cst = arith.constant dense<0.000000e+00> : vector<64x128xf32>
    %3 = tpu.matmul %1, %2, %cst {dimension_numbers = #tpu.dot_dimension_numbers<[1], [0], [0], [1], [0, 0, 1, 1], [], []>} : vector<64x4xbf16>, vector<4x128xbf16>, vector<64x128xf32> -> vector<64x128xf32>
    %c0_4 = arith.constant 0 : index
    %c0_5 = arith.constant 0 : index
    %4 = vector.load %arg3[%c0_4, %c0_5] : memref<1x128xf32, #tpu.memory_space<vmem>>, vector<1x128xf32>
    %5 = vector.broadcast %4 : vector<1x128xf32> to vector<64x128xf32>
    %6 = arith.addf %3, %5 : vector<64x128xf32>
    %cst_6 = arith.constant 0.000000e+00 : f32
    %7 = vector.broadcast %cst_6 : f32 to vector<64x128xf32>
    %8 = arith.maximumf %6, %7 : vector<64x128xf32>
    %9 = arith.truncf %8 : vector<64x128xf32> to vector<64x128xbf16>
    %c0_7 = arith.constant 0 : index
    %c0_8 = arith.constant 0 : index
    %10 = vector.load %arg4[%c0_7, %c0_8] : memref<128x512xbf16, #tpu.memory_space<vmem>>, vector<128x512xbf16>
    %cst_9 = arith.constant dense<0.000000e+00> : vector<64x512xf32>
    %11 = tpu.matmul %9, %10, %cst_9 {dimension_numbers = #tpu.dot_dimension_numbers<[1], [0], [0], [1], [0, 0, 1, 1], [], []>} : vector<64x128xbf16>, vector<128x512xbf16>, vector<64x512xf32> -> vector<64x512xf32>
    %c0_10 = arith.constant 0 : index
    %c0_11 = arith.constant 0 : index
    %12 = vector.load %arg6[%c0_10, %c0_11] : memref<1x512xf32, #tpu.memory_space<vmem>>, vector<1x512xf32>
    %13 = vector.broadcast %12 : vector<1x512xf32> to vector<64x512xf32>
    %14 = arith.addf %11, %13 : vector<64x512xf32>
    %15 = vector.shape_cast %14 : vector<64x512xf32> to vector<8x8x512xf32>
    %c0_12 = arith.constant 0 : index
    %c0_13 = arith.constant 0 : index
    %16 = vector.load %arg5[%c0_12, %c0_13] : memref<128x512xbf16, #tpu.memory_space<vmem>>, vector<128x512xbf16>
    %cst_14 = arith.constant 0.000000e+00 : f32
    %17 = vector.broadcast %cst_14 : f32 to vector<8x128xf32>
    %cst_15 = arith.constant 0.000000e+00 : f32
    %18 = vector.broadcast %cst_15 : f32 to vector<8x128xf32>
    %19 = vector.extract_strided_slice %15 {offsets = [0, 0, 0], sizes = [8, 1, 512], strides = [1, 1, 1]} : vector<8x8x512xf32> to vector<8x1x512xf32>
    %20 = vector.shape_cast %19 : vector<8x1x512xf32> to vector<8x512xf32>
    %21 = arith.truncf %17 : vector<8x128xf32> to vector<8x128xbf16>
    %cst_16 = arith.constant dense<0.000000e+00> : vector<8x512xf32>
    %22 = tpu.matmul %21, %16, %cst_16 {dimension_numbers = #tpu.dot_dimension_numbers<[1], [0], [0], [1], [0, 0, 1, 1], [], []>} : vector<8x128xbf16>, vector<128x512xbf16>, vector<8x512xf32> -> vector<8x512xf32>
    %23 = arith.addf %20, %22 : vector<8x512xf32>
    %24 = vector.extract_strided_slice %23 {offsets = [0, 0], sizes = [8, 128], strides = [1, 1]} : vector<8x512xf32> to vector<8x128xf32>
    %25 = arith.negf %24 : vector<8x128xf32>
    %26 = math.exp %25 : vector<8x128xf32>
    %cst_17 = arith.constant 1.000000e+00 : f32
    %27 = vector.broadcast %cst_17 : f32 to vector<8x128xf32>
    %28 = arith.addf %27, %26 : vector<8x128xf32>
    %29 = arith.divf %27, %28 : vector<8x128xf32>
    %30 = vector.extract_strided_slice %23 {offsets = [0, 128], sizes = [8, 128], strides = [1, 1]} : vector<8x512xf32> to vector<8x128xf32>
    %31 = arith.negf %30 : vector<8x128xf32>
    %32 = math.exp %31 : vector<8x128xf32>
    %cst_18 = arith.constant 1.000000e+00 : f32
    %33 = vector.broadcast %cst_18 : f32 to vector<8x128xf32>
    %34 = arith.addf %33, %32 : vector<8x128xf32>
    %35 = arith.divf %33, %34 : vector<8x128xf32>
    %36 = vector.extract_strided_slice %23 {offsets = [0, 256], sizes = [8, 128], strides = [1, 1]} : vector<8x512xf32> to vector<8x128xf32>
    %37 = math.tanh %36 : vector<8x128xf32>
    %38 = vector.extract_strided_slice %23 {offsets = [0, 384], sizes = [8, 128], strides = [1, 1]} : vector<8x512xf32> to vector<8x128xf32>
    %39 = arith.negf %38 : vector<8x128xf32>
    %40 = math.exp %39 : vector<8x128xf32>
    %cst_19 = arith.constant 1.000000e+00 : f32
    %41 = vector.broadcast %cst_19 : f32 to vector<8x128xf32>
    %42 = arith.addf %41, %40 : vector<8x128xf32>
    %43 = arith.divf %41, %42 : vector<8x128xf32>
    %44 = arith.mulf %35, %18 : vector<8x128xf32>
    %45 = arith.mulf %29, %37 : vector<8x128xf32>
    %46 = arith.addf %44, %45 : vector<8x128xf32>
    %47 = math.tanh %46 : vector<8x128xf32>
    %48 = arith.mulf %43, %47 : vector<8x128xf32>
    %49 = vector.extract_strided_slice %15 {offsets = [0, 1, 0], sizes = [8, 1, 512], strides = [1, 1, 1]} : vector<8x8x512xf32> to vector<8x1x512xf32>
    %50 = vector.shape_cast %49 : vector<8x1x512xf32> to vector<8x512xf32>
    %51 = arith.truncf %48 : vector<8x128xf32> to vector<8x128xbf16>
    %cst_20 = arith.constant dense<0.000000e+00> : vector<8x512xf32>
    %52 = tpu.matmul %51, %16, %cst_20 {dimension_numbers = #tpu.dot_dimension_numbers<[1], [0], [0], [1], [0, 0, 1, 1], [], []>} : vector<8x128xbf16>, vector<128x512xbf16>, vector<8x512xf32> -> vector<8x512xf32>
    %53 = arith.addf %50, %52 : vector<8x512xf32>
    %54 = vector.extract_strided_slice %53 {offsets = [0, 0], sizes = [8, 128], strides = [1, 1]} : vector<8x512xf32> to vector<8x128xf32>
    %55 = arith.negf %54 : vector<8x128xf32>
    %56 = math.exp %55 : vector<8x128xf32>
    %cst_21 = arith.constant 1.000000e+00 : f32
    %57 = vector.broadcast %cst_21 : f32 to vector<8x128xf32>
    %58 = arith.addf %57, %56 : vector<8x128xf32>
    %59 = arith.divf %57, %58 : vector<8x128xf32>
    %60 = vector.extract_strided_slice %53 {offsets = [0, 128], sizes = [8, 128], strides = [1, 1]} : vector<8x512xf32> to vector<8x128xf32>
    %61 = arith.negf %60 : vector<8x128xf32>
    %62 = math.exp %61 : vector<8x128xf32>
    %cst_22 = arith.constant 1.000000e+00 : f32
    %63 = vector.broadcast %cst_22 : f32 to vector<8x128xf32>
    %64 = arith.addf %63, %62 : vector<8x128xf32>
    %65 = arith.divf %63, %64 : vector<8x128xf32>
    %66 = vector.extract_strided_slice %53 {offsets = [0, 256], sizes = [8, 128], strides = [1, 1]} : vector<8x512xf32> to vector<8x128xf32>
    %67 = math.tanh %66 : vector<8x128xf32>
    %68 = vector.extract_strided_slice %53 {offsets = [0, 384], sizes = [8, 128], strides = [1, 1]} : vector<8x512xf32> to vector<8x128xf32>
    %69 = arith.negf %68 : vector<8x128xf32>
    %70 = math.exp %69 : vector<8x128xf32>
    %cst_23 = arith.constant 1.000000e+00 : f32
    %71 = vector.broadcast %cst_23 : f32 to vector<8x128xf32>
    %72 = arith.addf %71, %70 : vector<8x128xf32>
    %73 = arith.divf %71, %72 : vector<8x128xf32>
    %74 = arith.mulf %65, %46 : vector<8x128xf32>
    %75 = arith.mulf %59, %67 : vector<8x128xf32>
    %76 = arith.addf %74, %75 : vector<8x128xf32>
    %77 = math.tanh %76 : vector<8x128xf32>
    %78 = arith.mulf %73, %77 : vector<8x128xf32>
    %79 = vector.extract_strided_slice %15 {offsets = [0, 2, 0], sizes = [8, 1, 512], strides = [1, 1, 1]} : vector<8x8x512xf32> to vector<8x1x512xf32>
    %80 = vector.shape_cast %79 : vector<8x1x512xf32> to vector<8x512xf32>
    %81 = arith.truncf %78 : vector<8x128xf32> to vector<8x128xbf16>
    %cst_24 = arith.constant dense<0.000000e+00> : vector<8x512xf32>
    %82 = tpu.matmul %81, %16, %cst_24 {dimension_numbers = #tpu.dot_dimension_numbers<[1], [0], [0], [1], [0, 0, 1, 1], [], []>} : vector<8x128xbf16>, vector<128x512xbf16>, vector<8x512xf32> -> vector<8x512xf32>
    %83 = arith.addf %80, %82 : vector<8x512xf32>
    %84 = vector.extract_strided_slice %83 {offsets = [0, 0], sizes = [8, 128], strides = [1, 1]} : vector<8x512xf32> to vector<8x128xf32>
    %85 = arith.negf %84 : vector<8x128xf32>
    %86 = math.exp %85 : vector<8x128xf32>
    %cst_25 = arith.constant 1.000000e+00 : f32
    %87 = vector.broadcast %cst_25 : f32 to vector<8x128xf32>
    %88 = arith.addf %87, %86 : vector<8x128xf32>
    %89 = arith.divf %87, %88 : vector<8x128xf32>
    %90 = vector.extract_strided_slice %83 {offsets = [0, 128], sizes = [8, 128], strides = [1, 1]} : vector<8x512xf32> to vector<8x128xf32>
    %91 = arith.negf %90 : vector<8x128xf32>
    %92 = math.exp %91 : vector<8x128xf32>
    %cst_26 = arith.constant 1.000000e+00 : f32
    %93 = vector.broadcast %cst_26 : f32 to vector<8x128xf32>
    %94 = arith.addf %93, %92 : vector<8x128xf32>
    %95 = arith.divf %93, %94 : vector<8x128xf32>
    %96 = vector.extract_strided_slice %83 {offsets = [0, 256], sizes = [8, 128], strides = [1, 1]} : vector<8x512xf32> to vector<8x128xf32>
    %97 = math.tanh %96 : vector<8x128xf32>
    %98 = vector.extract_strided_slice %83 {offsets = [0, 384], sizes = [8, 128], strides = [1, 1]} : vector<8x512xf32> to vector<8x128xf32>
    %99 = arith.negf %98 : vector<8x128xf32>
    %100 = math.exp %99 : vector<8x128xf32>
    %cst_27 = arith.constant 1.000000e+00 : f32
    %101 = vector.broadcast %cst_27 : f32 to vector<8x128xf32>
    %102 = arith.addf %101, %100 : vector<8x128xf32>
    %103 = arith.divf %101, %102 : vector<8x128xf32>
    %104 = arith.mulf %95, %76 : vector<8x128xf32>
    %105 = arith.mulf %89, %97 : vector<8x128xf32>
    %106 = arith.addf %104, %105 : vector<8x128xf32>
    %107 = math.tanh %106 : vector<8x128xf32>
    %108 = arith.mulf %103, %107 : vector<8x128xf32>
    %109 = vector.extract_strided_slice %15 {offsets = [0, 3, 0], sizes = [8, 1, 512], strides = [1, 1, 1]} : vector<8x8x512xf32> to vector<8x1x512xf32>
    %110 = vector.shape_cast %109 : vector<8x1x512xf32> to vector<8x512xf32>
    %111 = arith.truncf %108 : vector<8x128xf32> to vector<8x128xbf16>
    %cst_28 = arith.constant dense<0.000000e+00> : vector<8x512xf32>
    %112 = tpu.matmul %111, %16, %cst_28 {dimension_numbers = #tpu.dot_dimension_numbers<[1], [0], [0], [1], [0, 0, 1, 1], [], []>} : vector<8x128xbf16>, vector<128x512xbf16>, vector<8x512xf32> -> vector<8x512xf32>
    %113 = arith.addf %110, %112 : vector<8x512xf32>
    %114 = vector.extract_strided_slice %113 {offsets = [0, 0], sizes = [8, 128], strides = [1, 1]} : vector<8x512xf32> to vector<8x128xf32>
    %115 = arith.negf %114 : vector<8x128xf32>
    %116 = math.exp %115 : vector<8x128xf32>
    %cst_29 = arith.constant 1.000000e+00 : f32
    %117 = vector.broadcast %cst_29 : f32 to vector<8x128xf32>
    %118 = arith.addf %117, %116 : vector<8x128xf32>
    %119 = arith.divf %117, %118 : vector<8x128xf32>
    %120 = vector.extract_strided_slice %113 {offsets = [0, 128], sizes = [8, 128], strides = [1, 1]} : vector<8x512xf32> to vector<8x128xf32>
    %121 = arith.negf %120 : vector<8x128xf32>
    %122 = math.exp %121 : vector<8x128xf32>
    %cst_30 = arith.constant 1.000000e+00 : f32
    %123 = vector.broadcast %cst_30 : f32 to vector<8x128xf32>
    %124 = arith.addf %123, %122 : vector<8x128xf32>
    %125 = arith.divf %123, %124 : vector<8x128xf32>
    %126 = vector.extract_strided_slice %113 {offsets = [0, 256], sizes = [8, 128], strides = [1, 1]} : vector<8x512xf32> to vector<8x128xf32>
    %127 = math.tanh %126 : vector<8x128xf32>
    %128 = vector.extract_strided_slice %113 {offsets = [0, 384], sizes = [8, 128], strides = [1, 1]} : vector<8x512xf32> to vector<8x128xf32>
    %129 = arith.negf %128 : vector<8x128xf32>
    %130 = math.exp %129 : vector<8x128xf32>
    %cst_31 = arith.constant 1.000000e+00 : f32
    %131 = vector.broadcast %cst_31 : f32 to vector<8x128xf32>
    %132 = arith.addf %131, %130 : vector<8x128xf32>
    %133 = arith.divf %131, %132 : vector<8x128xf32>
    %134 = arith.mulf %125, %106 : vector<8x128xf32>
    %135 = arith.mulf %119, %127 : vector<8x128xf32>
    %136 = arith.addf %134, %135 : vector<8x128xf32>
    %137 = math.tanh %136 : vector<8x128xf32>
    %138 = arith.mulf %133, %137 : vector<8x128xf32>
    %139 = vector.extract_strided_slice %15 {offsets = [0, 4, 0], sizes = [8, 1, 512], strides = [1, 1, 1]} : vector<8x8x512xf32> to vector<8x1x512xf32>
    %140 = vector.shape_cast %139 : vector<8x1x512xf32> to vector<8x512xf32>
    %141 = arith.truncf %138 : vector<8x128xf32> to vector<8x128xbf16>
    %cst_32 = arith.constant dense<0.000000e+00> : vector<8x512xf32>
    %142 = tpu.matmul %141, %16, %cst_32 {dimension_numbers = #tpu.dot_dimension_numbers<[1], [0], [0], [1], [0, 0, 1, 1], [], []>} : vector<8x128xbf16>, vector<128x512xbf16>, vector<8x512xf32> -> vector<8x512xf32>
    %143 = arith.addf %140, %142 : vector<8x512xf32>
    %144 = vector.extract_strided_slice %143 {offsets = [0, 0], sizes = [8, 128], strides = [1, 1]} : vector<8x512xf32> to vector<8x128xf32>
    %145 = arith.negf %144 : vector<8x128xf32>
    %146 = math.exp %145 : vector<8x128xf32>
    %cst_33 = arith.constant 1.000000e+00 : f32
    %147 = vector.broadcast %cst_33 : f32 to vector<8x128xf32>
    %148 = arith.addf %147, %146 : vector<8x128xf32>
    %149 = arith.divf %147, %148 : vector<8x128xf32>
    %150 = vector.extract_strided_slice %143 {offsets = [0, 128], sizes = [8, 128], strides = [1, 1]} : vector<8x512xf32> to vector<8x128xf32>
    %151 = arith.negf %150 : vector<8x128xf32>
    %152 = math.exp %151 : vector<8x128xf32>
    %cst_34 = arith.constant 1.000000e+00 : f32
    %153 = vector.broadcast %cst_34 : f32 to vector<8x128xf32>
    %154 = arith.addf %153, %152 : vector<8x128xf32>
    %155 = arith.divf %153, %154 : vector<8x128xf32>
    %156 = vector.extract_strided_slice %143 {offsets = [0, 256], sizes = [8, 128], strides = [1, 1]} : vector<8x512xf32> to vector<8x128xf32>
    %157 = math.tanh %156 : vector<8x128xf32>
    %158 = vector.extract_strided_slice %143 {offsets = [0, 384], sizes = [8, 128], strides = [1, 1]} : vector<8x512xf32> to vector<8x128xf32>
    %159 = arith.negf %158 : vector<8x128xf32>
    %160 = math.exp %159 : vector<8x128xf32>
    %cst_35 = arith.constant 1.000000e+00 : f32
    %161 = vector.broadcast %cst_35 : f32 to vector<8x128xf32>
    %162 = arith.addf %161, %160 : vector<8x128xf32>
    %163 = arith.divf %161, %162 : vector<8x128xf32>
    %164 = arith.mulf %155, %136 : vector<8x128xf32>
    %165 = arith.mulf %149, %157 : vector<8x128xf32>
    %166 = arith.addf %164, %165 : vector<8x128xf32>
    %167 = math.tanh %166 : vector<8x128xf32>
    %168 = arith.mulf %163, %167 : vector<8x128xf32>
    %169 = vector.extract_strided_slice %15 {offsets = [0, 5, 0], sizes = [8, 1, 512], strides = [1, 1, 1]} : vector<8x8x512xf32> to vector<8x1x512xf32>
    %170 = vector.shape_cast %169 : vector<8x1x512xf32> to vector<8x512xf32>
    %171 = arith.truncf %168 : vector<8x128xf32> to vector<8x128xbf16>
    %cst_36 = arith.constant dense<0.000000e+00> : vector<8x512xf32>
    %172 = tpu.matmul %171, %16, %cst_36 {dimension_numbers = #tpu.dot_dimension_numbers<[1], [0], [0], [1], [0, 0, 1, 1], [], []>} : vector<8x128xbf16>, vector<128x512xbf16>, vector<8x512xf32> -> vector<8x512xf32>
    %173 = arith.addf %170, %172 : vector<8x512xf32>
    %174 = vector.extract_strided_slice %173 {offsets = [0, 0], sizes = [8, 128], strides = [1, 1]} : vector<8x512xf32> to vector<8x128xf32>
    %175 = arith.negf %174 : vector<8x128xf32>
    %176 = math.exp %175 : vector<8x128xf32>
    %cst_37 = arith.constant 1.000000e+00 : f32
    %177 = vector.broadcast %cst_37 : f32 to vector<8x128xf32>
    %178 = arith.addf %177, %176 : vector<8x128xf32>
    %179 = arith.divf %177, %178 : vector<8x128xf32>
    %180 = vector.extract_strided_slice %173 {offsets = [0, 128], sizes = [8, 128], strides = [1, 1]} : vector<8x512xf32> to vector<8x128xf32>
    %181 = arith.negf %180 : vector<8x128xf32>
    %182 = math.exp %181 : vector<8x128xf32>
    %cst_38 = arith.constant 1.000000e+00 : f32
    %183 = vector.broadcast %cst_38 : f32 to vector<8x128xf32>
    %184 = arith.addf %183, %182 : vector<8x128xf32>
    %185 = arith.divf %183, %184 : vector<8x128xf32>
    %186 = vector.extract_strided_slice %173 {offsets = [0, 256], sizes = [8, 128], strides = [1, 1]} : vector<8x512xf32> to vector<8x128xf32>
    %187 = math.tanh %186 : vector<8x128xf32>
    %188 = vector.extract_strided_slice %173 {offsets = [0, 384], sizes = [8, 128], strides = [1, 1]} : vector<8x512xf32> to vector<8x128xf32>
    %189 = arith.negf %188 : vector<8x128xf32>
    %190 = math.exp %189 : vector<8x128xf32>
    %cst_39 = arith.constant 1.000000e+00 : f32
    %191 = vector.broadcast %cst_39 : f32 to vector<8x128xf32>
    %192 = arith.addf %191, %190 : vector<8x128xf32>
    %193 = arith.divf %191, %192 : vector<8x128xf32>
    %194 = arith.mulf %185, %166 : vector<8x128xf32>
    %195 = arith.mulf %179, %187 : vector<8x128xf32>
    %196 = arith.addf %194, %195 : vector<8x128xf32>
    %197 = math.tanh %196 : vector<8x128xf32>
    %198 = arith.mulf %193, %197 : vector<8x128xf32>
    %199 = vector.extract_strided_slice %15 {offsets = [0, 6, 0], sizes = [8, 1, 512], strides = [1, 1, 1]} : vector<8x8x512xf32> to vector<8x1x512xf32>
    %200 = vector.shape_cast %199 : vector<8x1x512xf32> to vector<8x512xf32>
    %201 = arith.truncf %198 : vector<8x128xf32> to vector<8x128xbf16>
    %cst_40 = arith.constant dense<0.000000e+00> : vector<8x512xf32>
    %202 = tpu.matmul %201, %16, %cst_40 {dimension_numbers = #tpu.dot_dimension_numbers<[1], [0], [0], [1], [0, 0, 1, 1], [], []>} : vector<8x128xbf16>, vector<128x512xbf16>, vector<8x512xf32> -> vector<8x512xf32>
    %203 = arith.addf %200, %202 : vector<8x512xf32>
    %204 = vector.extract_strided_slice %203 {offsets = [0, 0], sizes = [8, 128], strides = [1, 1]} : vector<8x512xf32> to vector<8x128xf32>
    %205 = arith.negf %204 : vector<8x128xf32>
    %206 = math.exp %205 : vector<8x128xf32>
    %cst_41 = arith.constant 1.000000e+00 : f32
    %207 = vector.broadcast %cst_41 : f32 to vector<8x128xf32>
    %208 = arith.addf %207, %206 : vector<8x128xf32>
    %209 = arith.divf %207, %208 : vector<8x128xf32>
    %210 = vector.extract_strided_slice %203 {offsets = [0, 128], sizes = [8, 128], strides = [1, 1]} : vector<8x512xf32> to vector<8x128xf32>
    %211 = arith.negf %210 : vector<8x128xf32>
    %212 = math.exp %211 : vector<8x128xf32>
    %cst_42 = arith.constant 1.000000e+00 : f32
    %213 = vector.broadcast %cst_42 : f32 to vector<8x128xf32>
    %214 = arith.addf %213, %212 : vector<8x128xf32>
    %215 = arith.divf %213, %214 : vector<8x128xf32>
    %216 = vector.extract_strided_slice %203 {offsets = [0, 256], sizes = [8, 128], strides = [1, 1]} : vector<8x512xf32> to vector<8x128xf32>
    %217 = math.tanh %216 : vector<8x128xf32>
    %218 = vector.extract_strided_slice %203 {offsets = [0, 384], sizes = [8, 128], strides = [1, 1]} : vector<8x512xf32> to vector<8x128xf32>
    %219 = arith.negf %218 : vector<8x128xf32>
    %220 = math.exp %219 : vector<8x128xf32>
    %cst_43 = arith.constant 1.000000e+00 : f32
    %221 = vector.broadcast %cst_43 : f32 to vector<8x128xf32>
    %222 = arith.addf %221, %220 : vector<8x128xf32>
    %223 = arith.divf %221, %222 : vector<8x128xf32>
    %224 = arith.mulf %215, %196 : vector<8x128xf32>
    %225 = arith.mulf %209, %217 : vector<8x128xf32>
    %226 = arith.addf %224, %225 : vector<8x128xf32>
    %227 = math.tanh %226 : vector<8x128xf32>
    %228 = arith.mulf %223, %227 : vector<8x128xf32>
    %229 = vector.extract_strided_slice %15 {offsets = [0, 7, 0], sizes = [8, 1, 512], strides = [1, 1, 1]} : vector<8x8x512xf32> to vector<8x1x512xf32>
    %230 = vector.shape_cast %229 : vector<8x1x512xf32> to vector<8x512xf32>
    %231 = arith.truncf %228 : vector<8x128xf32> to vector<8x128xbf16>
    %cst_44 = arith.constant dense<0.000000e+00> : vector<8x512xf32>
    %232 = tpu.matmul %231, %16, %cst_44 {dimension_numbers = #tpu.dot_dimension_numbers<[1], [0], [0], [1], [0, 0, 1, 1], [], []>} : vector<8x128xbf16>, vector<128x512xbf16>, vector<8x512xf32> -> vector<8x512xf32>
    %233 = arith.addf %230, %232 : vector<8x512xf32>
    %234 = vector.extract_strided_slice %233 {offsets = [0, 0], sizes = [8, 128], strides = [1, 1]} : vector<8x512xf32> to vector<8x128xf32>
    %235 = arith.negf %234 : vector<8x128xf32>
    %236 = math.exp %235 : vector<8x128xf32>
    %cst_45 = arith.constant 1.000000e+00 : f32
    %237 = vector.broadcast %cst_45 : f32 to vector<8x128xf32>
    %238 = arith.addf %237, %236 : vector<8x128xf32>
    %239 = arith.divf %237, %238 : vector<8x128xf32>
    %240 = vector.extract_strided_slice %233 {offsets = [0, 128], sizes = [8, 128], strides = [1, 1]} : vector<8x512xf32> to vector<8x128xf32>
    %241 = arith.negf %240 : vector<8x128xf32>
    %242 = math.exp %241 : vector<8x128xf32>
    %cst_46 = arith.constant 1.000000e+00 : f32
    %243 = vector.broadcast %cst_46 : f32 to vector<8x128xf32>
    %244 = arith.addf %243, %242 : vector<8x128xf32>
    %245 = arith.divf %243, %244 : vector<8x128xf32>
    %246 = vector.extract_strided_slice %233 {offsets = [0, 256], sizes = [8, 128], strides = [1, 1]} : vector<8x512xf32> to vector<8x128xf32>
    %247 = math.tanh %246 : vector<8x128xf32>
    %248 = vector.extract_strided_slice %233 {offsets = [0, 384], sizes = [8, 128], strides = [1, 1]} : vector<8x512xf32> to vector<8x128xf32>
    %249 = arith.negf %248 : vector<8x128xf32>
    %250 = math.exp %249 : vector<8x128xf32>
    %cst_47 = arith.constant 1.000000e+00 : f32
    %251 = vector.broadcast %cst_47 : f32 to vector<8x128xf32>
    %252 = arith.addf %251, %250 : vector<8x128xf32>
    %253 = arith.divf %251, %252 : vector<8x128xf32>
    %254 = arith.mulf %245, %226 : vector<8x128xf32>
    %255 = arith.mulf %239, %247 : vector<8x128xf32>
    %256 = arith.addf %254, %255 : vector<8x128xf32>
    %257 = math.tanh %256 : vector<8x128xf32>
    %258 = arith.mulf %253, %257 : vector<8x128xf32>
    %259 = arith.truncf %258 : vector<8x128xf32> to vector<8x128xbf16>
    %c0_48 = arith.constant 0 : index
    %c0_49 = arith.constant 0 : index
    %260 = vector.load %arg7[%c0_48, %c0_49] : memref<128x128xbf16, #tpu.memory_space<vmem>>, vector<128x128xbf16>
    %cst_50 = arith.constant dense<0.000000e+00> : vector<8x128xf32>
    %261 = tpu.matmul %259, %260, %cst_50 {dimension_numbers = #tpu.dot_dimension_numbers<[1], [0], [0], [1], [0, 0, 1, 1], [], []>} : vector<8x128xbf16>, vector<128x128xbf16>, vector<8x128xf32> -> vector<8x128xf32>
    %c0_51 = arith.constant 0 : index
    %c0_52 = arith.constant 0 : index
    %262 = vector.load %arg8[%c0_51, %c0_52] : memref<1x128xf32, #tpu.memory_space<vmem>>, vector<1x128xf32>
    %263 = vector.broadcast %262 : vector<1x128xf32> to vector<8x128xf32>
    %264 = arith.addf %261, %263 : vector<8x128xf32>
    %c0_53 = arith.constant 0 : index
    %c0_54 = arith.constant 0 : index
    %265 = vector.load %arg9[%c0_53, %c0_54] : memref<8x128xf32, #tpu.memory_space<vmem>>, vector<8x128xf32>
    tpu.vector_store %arg9[%c0_53, %c0_54], %264 {strides = array<i32>} : memref<8x128xf32, #tpu.memory_space<vmem>>, vector<8x128xf32>,
    return
  }
  func.func @transform_0(%arg0: i32) -> (i32, i32, i32) {
    %c0_i32 = arith.constant 0 : i32
    %c0_i32_0 = arith.constant 0 : i32
    %c0_i32_1 = arith.constant 0 : i32
    return %arg0, %c0_i32, %c0_i32_0 : i32, i32, i32
  }
  func.func @transform_1(%arg0: i32) -> (i32, i32) {
    %c0_i32 = arith.constant 0 : i32
    %c0_i32_0 = arith.constant 0 : i32
    %c0_i32_1 = arith.constant 0 : i32
    return %c0_i32, %c0_i32_0 : i32, i32
  }
  func.func @transform_2(%arg0: i32) -> (i32, i32) {
    %c0_i32 = arith.constant 0 : i32
    %c0_i32_0 = arith.constant 0 : i32
    %c0_i32_1 = arith.constant 0 : i32
    return %c0_i32, %c0_i32_0 : i32, i32
  }
  func.func @transform_3(%arg0: i32) -> (i32, i32) {
    %c0_i32 = arith.constant 0 : i32
    %c0_i32_0 = arith.constant 0 : i32
    %c0_i32_1 = arith.constant 0 : i32
    return %c0_i32, %c0_i32_0 : i32, i32
  }
  func.func @transform_4(%arg0: i32) -> (i32, i32) {
    %c0_i32 = arith.constant 0 : i32
    %c0_i32_0 = arith.constant 0 : i32
    %c0_i32_1 = arith.constant 0 : i32
    return %c0_i32, %c0_i32_0 : i32, i32
  }
  func.func @transform_5(%arg0: i32) -> (i32, i32) {
    %c0_i32 = arith.constant 0 : i32
    %c0_i32_0 = arith.constant 0 : i32
    %c0_i32_1 = arith.constant 0 : i32
    return %c0_i32, %c0_i32_0 : i32, i32
  }
  func.func @transform_6(%arg0: i32) -> (i32, i32) {
    %c0_i32 = arith.constant 0 : i32
    %c0_i32_0 = arith.constant 0 : i32
    %c0_i32_1 = arith.constant 0 : i32
    return %c0_i32, %c0_i32_0 : i32, i32
  }
  func.func @transform_7(%arg0: i32) -> (i32, i32) {
    %c0_i32 = arith.constant 0 : i32
    %c0_i32_0 = arith.constant 0 : i32
    %c0_i32_1 = arith.constant 0 : i32
    return %c0_i32, %c0_i32_0 : i32, i32
  }
  func.func @transform_8(%arg0: i32) -> (i32, i32) {
    %c0_i32 = arith.constant 0 : i32
    %c0_i32_0 = arith.constant 0 : i32
    return %arg0, %c0_i32 : i32, i32
  }
}

</mosaic_0001>

<llo_original>
// kernel: tpu_custom_call.1
$region0: #{tpu_custom_call.1}
  #allocation0 [shape = 'u32[]', space=smem, size = 0x4, offset = 0x4, fixed_abs, tag = 'smem constant byte address 0x4 - core index']
  #allocation1 [shape = 'u32[144,128]{1,0:T(1,128)}', space=vmem, size = 0x12000, scoped, tag = 'internal scratch']
  %s0 = inlined_call_operand.vmem [shape: bf16[8,8,4], index: 0, kind: input, shape index: {}]
  %s1 = inlined_call_operand.vmem [shape: bf16[4,128], index: 1, kind: input, shape index: {}]
  %s2 = inlined_call_operand.hbm [shape: f32[1,128], index: 2, kind: input, shape index: {}]
  %s3 = inlined_call_operand.hbm [shape: bf16[128,512], index: 3, kind: input, shape index: {}]
  %s4 = inlined_call_operand.hbm [shape: bf16[128,512], index: 4, kind: input, shape index: {}]
  %s5 = inlined_call_operand.vmem [shape: f32[1,512], index: 5, kind: input, shape index: {}]
  %s6 = inlined_call_operand.vmem [shape: bf16[128,128], index: 6, kind: input, shape index: {}]
  %s7 = inlined_call_operand.vmem [shape: f32[1,128], index: 7, kind: input, shape index: {}]
  %s8 = inlined_call_operand.hbm [shape: f32[8,128], index: 8, kind: output, shape index: {}]
  %s9 = sld [smem:[#allocation0]]
  $region54: #{tpu_custom_call.1} parent=0
    _
  %s11 = ssub.s32 1, %s9
  %s12 = scalar_select 0, %s11, %s9
  $region1: #{tpu_custom_call.1} parent=0
    #allocation2 [shape = 'u8[512]{0}', space=vmem, size = 0x400, scoped, tag = 'input window, operand 2, single buffered']
    #allocation3 [shape = 's32[1]{0}', space=sflag, size = 0x4, scoped, tag = 'scoped memory for tpu_custom_call.1']
    #allocation4 [shape = 's32[1]{0}', space=sflag, size = 0x4, scoped, tag = 'scoped memory for tpu_custom_call.1']
    #allocation5 [shape = 'u8[131072]{0}', space=vmem, size = 0x20000, scoped, tag = 'input window, operand 3, single buffered']
    #allocation6 [shape = 's32[1]{0}', space=sflag, size = 0x4, scoped, tag = 'scoped memory for tpu_custom_call.1']
    #allocation7 [shape = 'u8[131072]{0}', space=vmem, size = 0x20000, scoped, tag = 'input window, operand 4, single buffered']
    #allocation8 [shape = 'u8[4096]{0}', space=vmem, size = 0x1000, scoped, tag = 'output window, operand 0, single buffered']
    %13 = vsyncpa [#allocation3], 0
    %14 = vsyncpa [#allocation6], 0
    %15 = vsyncpa [#allocation4], 0
    // Predicated region
    $region2: #{tpu_custom_call.1} parent=1 // pred_check
      _
    $region3: #{tpu_custom_call.1} parent=1 // pred_check_branch
      %17 = sbr.rel (0) target = $region5
    $region4: #{tpu_custom_call.1} parent=1 // pred_region
      _
    $region5: #{tpu_custom_call.1} parent=1 // pred_fallthru
      _
    // Predicated region
    $region6: #{tpu_custom_call.1} parent=1 // pred_check
      _
    $region7: #{tpu_custom_call.1} parent=1 // pred_check_branch
      %19 = sbr.rel (0) target = $region9
    $region8: #{tpu_custom_call.1} parent=1 // pred_region
      _
    $region9: #{tpu_custom_call.1} parent=1 // pred_fallthru
      _
    // Predicated region
    $region10: #{tpu_custom_call.1} parent=1 // pred_check
      _
    $region11: #{tpu_custom_call.1} parent=1 // pred_check_branch
      %21 = sbr.rel (0) target = $region13
    $region12: #{tpu_custom_call.1} parent=1 // pred_region
      %s23 = ssub.s32 16, 16
      %24 = vsyncadd [#allocation3], %s23
      %s26 = sshll.u32 [#allocation2], 4
      %s27 = int_to_ptr.vmem [resolvable:$true] %s26
      %29 = dma.hbm_to_vmem [thread:$0]  %s2, 16, %s27, [#allocation3]
    $region13: #{tpu_custom_call.1} parent=1 // pred_fallthru
      _
    // Predicated region
    $region14: #{tpu_custom_call.1} parent=1 // pred_check
      _
    $region15: #{tpu_custom_call.1} parent=1 // pred_check_branch
      %31 = sbr.rel (0) target = $region17
    $region16: #{tpu_custom_call.1} parent=1 // pred_region
      %s33 = ssub.s32 4096, 4096
      %34 = vsyncadd [#allocation6], %s33
      %s35 = sshll.u32 [#allocation5], 4
      %s36 = int_to_ptr.vmem [resolvable:$true] %s35
      %41 = dma.hbm_to_vmem [thread:$0]  %s3, 4096, %s36, [#allocation6], 256, 256, 16
    $region17: #{tpu_custom_call.1} parent=1 // pred_fallthru
      _
    // Predicated region
    $region18: #{tpu_custom_call.1} parent=1 // pred_check
      _
    $region19: #{tpu_custom_call.1} parent=1 // pred_check_branch
      %43 = sbr.rel (0) target = $region21
    $region20: #{tpu_custom_call.1} parent=1 // pred_region
      %s45 = ssub.s32 4096, 4096
      %46 = vsyncadd [#allocation6], %s45
      %s47 = sshll.u32 [#allocation7], 4
      %s48 = int_to_ptr.vmem [resolvable:$true] %s47
      %53 = dma.hbm_to_vmem [thread:$0]  %s4, 4096, %s48, [#allocation6], 256, 256, 16
    $region21: #{tpu_custom_call.1} parent=1 // pred_fallthru
      _
    // Predicated region
    $region22: #{tpu_custom_call.1} parent=1 // pred_check
      _
    $region23: #{tpu_custom_call.1} parent=1 // pred_check_branch
      %55 = sbr.rel (0) target = $region25
    $region24: #{tpu_custom_call.1} parent=1 // pred_region
      _
    $region25: #{tpu_custom_call.1} parent=1 // pred_fallthru
      _
    // Predicated region
    $region26: #{tpu_custom_call.1} parent=1 // pred_check
      _
    $region27: #{tpu_custom_call.1} parent=1 // pred_check_branch
      %57 = sbr.rel (0) target = $region29
    $region28: #{tpu_custom_call.1} parent=1 // pred_region
      _
    $region29: #{tpu_custom_call.1} parent=1 // pred_fallthru
      _
    // Predicated region
    $region30: #{tpu_custom_call.1} parent=1 // pred_check
      _
    $region31: #{tpu_custom_call.1} parent=1 // pred_check_branch
      %59 = sbr.rel (0) target = $region33
    $region32: #{tpu_custom_call.1} parent=1 // pred_region
      _
    $region33: #{tpu_custom_call.1} parent=1 // pred_fallthru
      _
    // Predicated region
    $region34: #{tpu_custom_call.1} parent=1 // pred_check
      _
    $region35: #{tpu_custom_call.1} parent=1 // pred_check_branch
      %61 = sbr.rel (0) target = $region37
    $region36: #{tpu_custom_call.1} parent=1 // pred_region
      %62 = dma.done [#allocation3], 16
    $region37: #{tpu_custom_call.1} parent=1 // pred_fallthru
      _
    // Predicated region
    $region38: #{tpu_custom_call.1} parent=1 // pred_check
      _
    $region39: #{tpu_custom_call.1} parent=1 // pred_check_branch
      %64 = sbr.rel (0) target = $region41
    $region40: #{tpu_custom_call.1} parent=1 // pred_region
      %65 = dma.done [#allocation6], 4096
    $region41: #{tpu_custom_call.1} parent=1 // pred_fallthru
      _
    // Predicated region
    $region42: #{tpu_custom_call.1} parent=1 // pred_check
      _
    $region43: #{tpu_custom_call.1} parent=1 // pred_check_branch
      %67 = sbr.rel (0) target = $region45
    $region44: #{tpu_custom_call.1} parent=1 // pred_region
      %68 = dma.done [#allocation6], 4096
    $region45: #{tpu_custom_call.1} parent=1 // pred_fallthru
      _
    %v70 = vld [vmem:[%s0] sm:$0xf]
    %v71 = vld [vmem:[%s0 + $0x4] sm:$0xf]
    %v72 = vld [vmem:[%s0 + $0x8] sm:$0xf]
    %v73 = vld [vmem:[%s0 + $0xc] sm:$0xf]
    %v74 = vld [vmem:[%s0 + $0x10] sm:$0xf]
    %v75 = vld [vmem:[%s0 + $0x14] sm:$0xf]
    %v76 = vld [vmem:[%s0 + $0x18] sm:$0xf]
    %v77 = vld [vmem:[%s0 + $0x1c] sm:$0xf]
    %v78 = vld [vmem:[%s1] sm:$0x3]
    %v79 = vld [vmem:[#allocation2] sm:$0x1]
    %v81 = vlaneseq
    %v82 = vshrl.u32 %v81, 7
    %v83 = vsub.s32 0, %v82
    %v84 = vrot.slane %v79, %v83
    %v94 = vunpack.c.l.b16 %v70
    %v95 = vunpack.c.l.b16 %v71
    %v96 = vunpack.c.l.b16 %v72
    %v97 = vunpack.c.l.b16 %v73
    %v98 = vunpack.c.l.b16 %v74
    %v99 = vunpack.c.l.b16 %v75
    %v100 = vunpack.c.l.b16 %v76
    %v101 = vunpack.c.l.b16 %v77
    %v102 = vpack.c.b16 %v95, %v94
    %v103 = vpack.c.b16 %v97, %v96
    %v104 = vpack.c.b16 %v99, %v98
    %v105 = vpack.c.b16 %v101, %v100
    %vm106 = vcmask 31744
    %v108 = vsel %vm106, %v102, 0
    %v111 = vsel %vm106, %v103, 0
    %v114 = vsel %vm106, %v104, 0
    %v117 = vsel %vm106, %v105, 0
    %vm119 = vcmask 1041408
    %v121 = vsel %vm119, %v78, 0
    %123 = vmatprep.subr.bf16.mxu0 0
    %124 = vmatpush1.bf16.msra.mxu0 %v121
    %125 = vmatprep.subr.bf16.mxu0 0
    %126 = vmatpush1.bf16.msra.mxu0 0
    %127 = vmatprep.subr.bf16.mxu0 0
    %128 = vmatpush1.bf16.msra.mxu0 0
    %129 = vmatprep.subr.bf16.mxu0 0
    %130 = vmatpush1.bf16.msra.mxu0 0
    %131 = vmatprep.subr.bf16.mxu0 0
    %132 = vmatpush1.bf16.msra.mxu0 0
    %133 = vmatprep.subr.bf16.mxu0 0
    %134 = vmatpush1.bf16.msra.mxu0 0
    %135 = vmatprep.subr.bf16.mxu0 0
    %136 = vmatpush1.bf16.msra.mxu0 0
    %137 = vmatprep.subr.bf16.mxu0 0
    %138 = vmatpush1.bf16.msra.mxu0 0
    %139 = vmatprep.subr.bf16.mxu0 0
    %140 = vmatpush1.bf16.msra.mxu0 0
    %141 = vmatprep.subr.bf16.mxu0 0
    %142 = vmatpush1.bf16.msra.mxu0 0
    %143 = vmatprep.subr.bf16.mxu0 0
    %144 = vmatpush1.bf16.msra.mxu0 0
    %145 = vmatprep.subr.bf16.mxu0 0
    %146 = vmatpush1.bf16.msra.mxu0 0
    %147 = vmatprep.subr.bf16.mxu0 0
    %148 = vmatpush1.bf16.msra.mxu0 0
    %149 = vmatprep.subr.bf16.mxu0 0
    %150 = vmatpush1.bf16.msra.mxu0 0
    %151 = vmatprep.subr.bf16.mxu0 0
    %152 = vmatpush1.bf16.msra.mxu0 0
    %153 = vmatprep.subr.bf16.mxu0 0
    %154 = vmatpush1.bf16.msra.mxu0 0
    %155 = vmatprep.mubr.bf16.mxu0 0
    %156 = vmatmul.mubr.bf16.gmra.mrb[0].mxu0 %v108
    %v157 = vpop.f32.mrb[0].mxu0
    %v158 = vadd.f32 %v84, %v157
    %v159 = vpop.f32.mrb[0].mxu0
    %v160 = vpop.f32.mrb[0].mxu0
    %v161 = vadd.f32 %v84, %v160
    %v162 = vpop.f32.mrb[0].mxu0
    %163 = vmatprep.mubr.bf16.mxu0 0
    %164 = vmatmul.mubr.bf16.gmra.mrb[0].mxu0 %v111
    %v165 = vpop.f32.mrb[0].mxu0
    %v166 = vadd.f32 %v84, %v165
    %v167 = vpop.f32.mrb[0].mxu0
    %v168 = vpop.f32.mrb[0].mxu0
    %v169 = vadd.f32 %v84, %v168
    %v170 = vpop.f32.mrb[0].mxu0
    %171 = vmatprep.mubr.bf16.mxu0 0
    %172 = vmatmul.mubr.bf16.gmra.mrb[0].mxu0 %v114
    %v173 = vpop.f32.mrb[0].mxu0
    %v174 = vadd.f32 %v84, %v173
    %v175 = vpop.f32.mrb[0].mxu0
    %v176 = vpop.f32.mrb[0].mxu0
    %v177 = vadd.f32 %v84, %v176
    %v178 = vpop.f32.mrb[0].mxu0
    %179 = vmatprep.mubr.bf16.mxu0 0
    %180 = vmatmul.mubr.bf16.gmra.mrb[0].mxu0 %v117
    %v181 = vpop.f32.mrb[0].mxu0
    %v182 = vadd.f32 %v84, %v181
    %v183 = vpop.f32.mrb[0].mxu0
    %v184 = vpop.f32.mrb[0].mxu0
    %v185 = vadd.f32 %v84, %v184
    %v186 = vpop.f32.mrb[0].mxu0
    %187 = vdwg.mxu0
    %v188 = vmax.f32 %v158, 0.0
    %v189 = vmax.f32 %v161, 0.0
    %v190 = vmax.f32 %v166, 0.0
    %v191 = vmax.f32 %v169, 0.0
    %v192 = vmax.f32 %v174, 0.0
    %v193 = vmax.f32 %v177, 0.0
    %v194 = vmax.f32 %v182, 0.0
    %v195 = vmax.f32 %v185, 0.0
    %v196 = vpack.c.bf16 %v189, %v188
    %v197 = vpack.c.bf16 %v191, %v190
    %v198 = vpack.c.bf16 %v193, %v192
    %v199 = vpack.c.bf16 %v195, %v194
    %v200 = vld [vmem:[#allocation5] sm:$0xff]
    %v201 = vld [vmem:[#allocation5 + $0x8] sm:$0xff]
    %v202 = vld [vmem:[#allocation5 + $0x10] sm:$0xff]
    %v203 = vld [vmem:[#allocation5 + $0x18] sm:$0xff]
    %v204 = vld [vmem:[#allocation5 + $0x20] sm:$0xff]
    %v205 = vld [vmem:[#allocation5 + $0x28] sm:$0xff]
    %v206 = vld [vmem:[#allocation5 + $0x30] sm:$0xff]
    %v207 = vld [vmem:[#allocation5 + $0x38] sm:$0xff]
    %v208 = vld [vmem:[#allocation5 + $0x40] sm:$0xff]
    %v209 = vld [vmem:[#allocation5 + $0x48] sm:$0xff]
    %v210 = vld [vmem:[#allocation5 + $0x50] sm:$0xff]
    %v211 = vld [vmem:[#allocation5 + $0x58] sm:$0xff]
    %v212 = vld [vmem:[#allocation5 + $0x60] sm:$0xff]
    %v213 = vld [vmem:[#allocation5 + $0x68] sm:$0xff]
    %v214 = vld [vmem:[#allocation5 + $0x70] sm:$0xff]
    %v215 = vld [vmem:[#allocation5 + $0x78] sm:$0xff]
    %v216 = vld [vmem:[#allocation5 + $0x80] sm:$0xff]
    %v217 = vld [vmem:[#allocation5 + $0x88] sm:$0xff]
    %v218 = vld [vmem:[#allocation5 + $0x90] sm:$0xff]
    %v219 = vld [vmem:[#allocation5 + $0x98] sm:$0xff]
    %v220 = vld [vmem:[#allocation5 + $0xa0] sm:$0xff]
    %v221 = vld [vmem:[#allocation5 + $0xa8] sm:$0xff]
    %v222 = vld [vmem:[#allocation5 + $0xb0] sm:$0xff]
    %v223 = vld [vmem:[#allocation5 + $0xb8] sm:$0xff]
    %v224 = vld [vmem:[#allocation5 + $0xc0] sm:$0xff]
    %v225 = vld [vmem:[#allocation5 + $0xc8] sm:$0xff]
    %v226 = vld [vmem:[#allocation5 + $0xd0] sm:$0xff]
    %v227 = vld [vmem:[#allocation5 + $0xd8] sm:$0xff]
    %v228 = vld [vmem:[#allocation5 + $0xe0] sm:$0xff]
    %v229 = vld [vmem:[#allocation5 + $0xe8] sm:$0xff]
    %v230 = vld [vmem:[#allocation5 + $0xf0] sm:$0xff]
    %v231 = vld [vmem:[#allocation5 + $0xf8] sm:$0xff]
    %v232 = vld [vmem:[%s5] sm:$0xf]
    %v234 = vlaneseq
    %v235 = vshrl.u32 %v234, 7
    %v236 = vsub.s32 0, %v235
    %v237 = vrot.slane %v232, %v236
    %v238 = vlaneseq
    %v239 = vshrl.u32 %v238, 7
    %v240 = vsub.s32 1, %v239
    %v241 = vrot.slane %v232, %v240
    %v242 = vlaneseq
    %v243 = vshrl.u32 %v242, 7
    %v244 = vsub.s32 2, %v243
    %v245 = vrot.slane %v232, %v244
    %v246 = vlaneseq
    %v247 = vshrl.u32 %v246, 7
    %v248 = vsub.s32 3, %v247
    %v249 = vrot.slane %v232, %v248
    %v286 = vunpack.c.l.b16 %v200
    %v287 = vunpack.c.h.b16 %v200
    %v288 = vunpack.c.l.b16 %v201
    %v289 = vunpack.c.h.b16 %v201
    %v290 = vunpack.c.l.b16 %v202
    %v291 = vunpack.c.h.b16 %v202
    %v292 = vunpack.c.l.b16 %v203
    %v293 = vunpack.c.h.b16 %v203
    %v294 = vunpack.c.l.b16 %v204
    %v295 = vunpack.c.h.b16 %v204
    %v296 = vunpack.c.l.b16 %v205
    %v297 = vunpack.c.h.b16 %v205
    %v298 = vunpack.c.l.b16 %v206
    %v299 = vunpack.c.h.b16 %v206
    %v300 = vunpack.c.l.b16 %v207
    %v301 = vunpack.c.h.b16 %v207
    %v302 = vunpack.c.l.b16 %v208
    %v303 = vunpack.c.h.b16 %v208
    %v304 = vunpack.c.l.b16 %v209
    %v305 = vunpack.c.h.b16 %v209
    %v306 = vunpack.c.l.b16 %v210
    %v307 = vunpack.c.h.b16 %v210
    %v308 = vunpack.c.l.b16 %v211
    %v309 = vunpack.c.h.b16 %v211
    %v310 = vunpack.c.l.b16 %v212
    %v311 = vunpack.c.h.b16 %v212
    %v312 = vunpack.c.l.b16 %v213
    %v313 = vunpack.c.h.b16 %v213
    %v314 = vunpack.c.l.b16 %v214
    %v315 = vunpack.c.h.b16 %v214
    %v316 = vunpack.c.l.b16 %v215
    %v317 = vunpack.c.h.b16 %v215
    %v318 = vunpack.c.l.b16 %v216
    %v319 = vunpack.c.h.b16 %v216
    %v320 = vunpack.c.l.b16 %v217
    %v321 = vunpack.c.h.b16 %v217
    %v322 = vunpack.c.l.b16 %v218
    %v323 = vunpack.c.h.b16 %v218
    %v324 = vunpack.c.l.b16 %v219
    %v325 = vunpack.c.h.b16 %v219
    %v326 = vunpack.c.l.b16 %v220
    %v327 = vunpack.c.h.b16 %v220
    %v328 = vunpack.c.l.b16 %v221
    %v329 = vunpack.c.h.b16 %v221
    %v330 = vunpack.c.l.b16 %v222
    %v331 = vunpack.c.h.b16 %v222
    %v332 = vunpack.c.l.b16 %v223
    %v333 = vunpack.c.h.b16 %v223
    %v334 = vunpack.c.l.b16 %v224
    %v335 = vunpack.c.h.b16 %v224
    %v336 = vunpack.c.l.b16 %v225
    %v337 = vunpack.c.h.b16 %v225
    %v338 = vunpack.c.l.b16 %v226
    %v339 = vunpack.c.h.b16 %v226
    %v340 = vunpack.c.l.b16 %v227
    %v341 = vunpack.c.h.b16 %v227
    %v342 = vunpack.c.l.b16 %v228
    %v343 = vunpack.c.h.b16 %v228
    %v344 = vunpack.c.l.b16 %v229
    %v345 = vunpack.c.h.b16 %v229
    %v346 = vunpack.c.l.b16 %v230
    %v347 = vunpack.c.h.b16 %v230
    %v348 = vunpack.c.l.b16 %v231
    %v349 = vunpack.c.h.b16 %v231
    %v350 = vpack.c.b16 %v290, %v286
    %v351 = vpack.c.b16 %v291, %v287
    %v352 = vpack.c.b16 %v292, %v288
    %v353 = vpack.c.b16 %v293, %v289
    %v354 = vpack.c.b16 %v298, %v294
    %v355 = vpack.c.b16 %v299, %v295
    %v356 = vpack.c.b16 %v300, %v296
    %v357 = vpack.c.b16 %v301, %v297
    %v358 = vpack.c.b16 %v306, %v302
    %v359 = vpack.c.b16 %v307, %v303
    %v360 = vpack.c.b16 %v308, %v304
    %v361 = vpack.c.b16 %v309, %v305
    %v362 = vpack.c.b16 %v314, %v310
    %v363 = vpack.c.b16 %v315, %v311
    %v364 = vpack.c.b16 %v316, %v312
    %v365 = vpack.c.b16 %v317, %v313
    %v366 = vpack.c.b16 %v322, %v318
    %v367 = vpack.c.b16 %v323, %v319
    %v368 = vpack.c.b16 %v324, %v320
    %v369 = vpack.c.b16 %v325, %v321
    %v370 = vpack.c.b16 %v330, %v326
    %v371 = vpack.c.b16 %v331, %v327
    %v372 = vpack.c.b16 %v332, %v328
    %v373 = vpack.c.b16 %v333, %v329
    %v374 = vpack.c.b16 %v338, %v334
    %v375 = vpack.c.b16 %v339, %v335
    %v376 = vpack.c.b16 %v340, %v336
    %v377 = vpack.c.b16 %v341, %v337
    %v378 = vpack.c.b16 %v346, %v342
    %v379 = vpack.c.b16 %v347, %v343
    %v380 = vpack.c.b16 %v348, %v344
    %v381 = vpack.c.b16 %v349, %v345
    %414 = vmatprep.subr.bf16.mxu0 %v351
    %415 = vmatpush1.bf16.msra.mxu0 %v350
    %416 = vmatprep.subr.bf16.mxu0 %v355
    %417 = vmatpush1.bf16.msra.mxu0 %v354
    %418 = vmatprep.subr.bf16.mxu0 %v359
    %419 = vmatpush1.bf16.msra.mxu0 %v358
    %420 = vmatprep.subr.bf16.mxu0 %v363
    %421 = vmatpush1.bf16.msra.mxu0 %v362
    %422 = vmatprep.subr.bf16.mxu0 %v367
    %423 = vmatpush1.bf16.msra.mxu0 %v366
    %424 = vmatprep.subr.bf16.mxu0 %v371
    %425 = vmatpush1.bf16.msra.mxu0 %v370
    %426 = vmatprep.subr.bf16.mxu0 %v375
    %427 = vmatpush1.bf16.msra.mxu0 %v374
    %428 = vmatprep.subr.bf16.mxu0 %v379
    %429 = vmatpush1.bf16.msra.mxu0 %v378
    %430 = vmatprep.subr.bf16.mxu0 0
    %431 = vmatpush1.bf16.msra.mxu0 0
    %432 = vmatprep.subr.bf16.mxu0 0
    %433 = vmatpush1.bf16.msra.mxu0 0
    %434 = vmatprep.subr.bf16.mxu0 0
    %435 = vmatpush1.bf16.msra.mxu0 0
    %436 = vmatprep.subr.bf16.mxu0 0
    %437 = vmatpush1.bf16.msra.mxu0 0
    %438 = vmatprep.subr.bf16.mxu0 0
    %439 = vmatpush1.bf16.msra.mxu0 0
    %440 = vmatprep.subr.bf16.mxu0 0
    %441 = vmatpush1.bf16.msra.mxu0 0
    %442 = vmatprep.subr.bf16.mxu0 0
    %443 = vmatpush1.bf16.msra.mxu0 0
    %444 = vmatprep.subr.bf16.mxu0 0
    %445 = vmatpush1.bf16.msra.mxu0 0
    %446 = vmatprep.mubr.bf16.mxu0 0
    %447 = vmatmul.mubr.bf16.gmra.mrb[0].mxu0 %v196
    %v448 = vpop.f32.mrb[0].mxu0
    %v449 = vadd.f32 %v237, %v448
    %v450 = vpop.f32.mrb[0].mxu0
    %v451 = vadd.f32 %v241, %v450
    %v452 = vpop.f32.mrb[0].mxu0
    %v453 = vadd.f32 %v237, %v452
    %v454 = vpop.f32.mrb[0].mxu0
    %v455 = vadd.f32 %v241, %v454
    %456 = vmatprep.mubr.bf16.mxu0 0
    %457 = vmatmul.mubr.bf16.gmra.mrb[0].mxu0 %v197
    %v458 = vpop.f32.mrb[0].mxu0
    %v459 = vadd.f32 %v237, %v458
    %v460 = vpop.f32.mrb[0].mxu0
    %v461 = vadd.f32 %v241, %v460
    %v462 = vpop.f32.mrb[0].mxu0
    %v463 = vadd.f32 %v237, %v462
    %v464 = vpop.f32.mrb[0].mxu0
    %v465 = vadd.f32 %v241, %v464
    %466 = vmatprep.mubr.bf16.mxu0 0
    %467 = vmatmul.mubr.bf16.gmra.mrb[0].mxu0 %v198
    %v468 = vpop.f32.mrb[0].mxu0
    %v469 = vadd.f32 %v237, %v468
    %v470 = vpop.f32.mrb[0].mxu0
    %v471 = vadd.f32 %v241, %v470
    %v472 = vpop.f32.mrb[0].mxu0
    %v473 = vadd.f32 %v237, %v472
    %v474 = vpop.f32.mrb[0].mxu0
    %v475 = vadd.f32 %v241, %v474
    %476 = vmatprep.mubr.bf16.mxu0 0
    %477 = vmatmul.mubr.bf16.gmra.mrb[0].mxu0 %v199
    %v478 = vpop.f32.mrb[0].mxu0
    %v479 = vadd.f32 %v237, %v478
    %v480 = vpop.f32.mrb[0].mxu0
    %v481 = vadd.f32 %v241, %v480
    %v482 = vpop.f32.mrb[0].mxu0
    %v483 = vadd.f32 %v237, %v482
    %v484 = vpop.f32.mrb[0].mxu0
    %v485 = vadd.f32 %v241, %v484
    %486 = vdwg.mxu0
    %487 = vmatprep.subr.bf16.mxu0 %v353
    %488 = vmatpush1.bf16.msra.mxu0 %v352
    %489 = vmatprep.subr.bf16.mxu0 %v357
    %490 = vmatpush1.bf16.msra.mxu0 %v356
    %491 = vmatprep.subr.bf16.mxu0 %v361
    %492 = vmatpush1.bf16.msra.mxu0 %v360
    %493 = vmatprep.subr.bf16.mxu0 %v365
    %494 = vmatpush1.bf16.msra.mxu0 %v364
    %495 = vmatprep.subr.bf16.mxu0 %v369
    %496 = vmatpush1.bf16.msra.mxu0 %v368
    %497 = vmatprep.subr.bf16.mxu0 %v373
    %498 = vmatpush1.bf16.msra.mxu0 %v372
    %499 = vmatprep.subr.bf16.mxu0 %v377
    %500 = vmatpush1.bf16.msra.mxu0 %v376
    %501 = vmatprep.subr.bf16.mxu0 %v381
    %502 = vmatpush1.bf16.msra.mxu0 %v380
    %503 = vmatprep.subr.bf16.mxu0 0
    %504 = vmatpush1.bf16.msra.mxu0 0
    %505 = vmatprep.subr.bf16.mxu0 0
    %506 = vmatpush1.bf16.msra.mxu0 0
    %507 = vmatprep.subr.bf16.mxu0 0
    %508 = vmatpush1.bf16.msra.mxu0 0
    %509 = vmatprep.subr.bf16.mxu0 0
    %510 = vmatpush1.bf16.msra.mxu0 0
    %511 = vmatprep.subr.bf16.mxu0 0
    %512 = vmatpush1.bf16.msra.mxu0 0
    %513 = vmatprep.subr.bf16.mxu0 0
    %514 = vmatpush1.bf16.msra.mxu0 0
    %515 = vmatprep.subr.bf16.mxu0 0
    %516 = vmatpush1.bf16.msra.mxu0 0
    %517 = vmatprep.subr.bf16.mxu0 0
    %518 = vmatpush1.bf16.msra.mxu0 0
    %519 = vmatprep.mubr.bf16.mxu0 0
    %520 = vmatmul.mubr.bf16.gmra.mrb[0].mxu0 %v196
    %v521 = vpop.f32.mrb[0].mxu0
    %v522 = vadd.f32 %v245, %v521
    %v523 = vpop.f32.mrb[0].mxu0
    %v524 = vadd.f32 %v249, %v523
    %v525 = vpop.f32.mrb[0].mxu0
    %v526 = vadd.f32 %v245, %v525
    %v527 = vpop.f32.mrb[0].mxu0
    %v528 = vadd.f32 %v249, %v527
    %529 = vmatprep.mubr.bf16.mxu0 0
    %530 = vmatmul.mubr.bf16.gmra.mrb[0].mxu0 %v197
    %v531 = vpop.f32.mrb[0].mxu0
    %v532 = vadd.f32 %v245, %v531
    %v533 = vpop.f32.mrb[0].mxu0
    %v534 = vadd.f32 %v249, %v533
    %v535 = vpop.f32.mrb[0].mxu0
    %v536 = vadd.f32 %v245, %v535
    %v537 = vpop.f32.mrb[0].mxu0
    %v538 = vadd.f32 %v249, %v537
    %539 = vmatprep.mubr.bf16.mxu0 0
    %540 = vmatmul.mubr.bf16.gmra.mrb[0].mxu0 %v198
    %v541 = vpop.f32.mrb[0].mxu0
    %v542 = vadd.f32 %v245, %v541
    %v543 = vpop.f32.mrb[0].mxu0
    %v544 = vadd.f32 %v249, %v543
    %v545 = vpop.f32.mrb[0].mxu0
    %v546 = vadd.f32 %v245, %v545
    %v547 = vpop.f32.mrb[0].mxu0
    %v548 = vadd.f32 %v249, %v547
    %549 = vmatprep.mubr.bf16.mxu0 0
    %550 = vmatmul.mubr.bf16.gmra.mrb[0].mxu0 %v199
    %v551 = vpop.f32.mrb[0].mxu0
    %v552 = vadd.f32 %v245, %v551
    %v553 = vpop.f32.mrb[0].mxu0
    %v554 = vadd.f32 %v249, %v553
    %v555 = vpop.f32.mrb[0].mxu0
    %v556 = vadd.f32 %v245, %v555
    %v557 = vpop.f32.mrb[0].mxu0
    %v558 = vadd.f32 %v249, %v557
    %559 = vdwg.mxu0
    %v560 = vld [vmem:[#allocation7] sm:$0xff]
    %v561 = vld [vmem:[#allocation7 + $0x8] sm:$0xff]
    %v562 = vld [vmem:[#allocation7 + $0x10] sm:$0xff]
    %v563 = vld [vmem:[#allocation7 + $0x18] sm:$0xff]
    %v564 = vld [vmem:[#allocation7 + $0x20] sm:$0xff]
    %v565 = vld [vmem:[#allocation7 + $0x28] sm:$0xff]
    %v566 = vld [vmem:[#allocation7 + $0x30] sm:$0xff]
    %v567 = vld [vmem:[#allocation7 + $0x38] sm:$0xff]
    %v568 = vld [vmem:[#allocation7 + $0x40] sm:$0xff]
    %v569 = vld [vmem:[#allocation7 + $0x48] sm:$0xff]
    %v570 = vld [vmem:[#allocation7 + $0x50] sm:$0xff]
    %v571 = vld [vmem:[#allocation7 + $0x58] sm:$0xff]
    %v572 = vld [vmem:[#allocation7 + $0x60] sm:$0xff]
    %v573 = vld [vmem:[#allocation7 + $0x68] sm:$0xff]
    %v574 = vld [vmem:[#allocation7 + $0x70] sm:$0xff]
    %v575 = vld [vmem:[#allocation7 + $0x78] sm:$0xff]
    %v576 = vld [vmem:[#allocation7 + $0x80] sm:$0xff]
    %v577 = vld [vmem:[#allocation7 + $0x88] sm:$0xff]
    %v578 = vld [vmem:[#allocation7 + $0x90] sm:$0xff]
    %v579 = vld [vmem:[#allocation7 + $0x98] sm:$0xff]
    %v580 = vld [vmem:[#allocation7 + $0xa0] sm:$0xff]
    %v581 = vld [vmem:[#allocation7 + $0xa8] sm:$0xff]
    %v582 = vld [vmem:[#allocation7 + $0xb0] sm:$0xff]
    %v583 = vld [vmem:[#allocation7 + $0xb8] sm:$0xff]
    %v584 = vld [vmem:[#allocation7 + $0xc0] sm:$0xff]
    %v585 = vld [vmem:[#allocation7 + $0xc8] sm:$0xff]
    %v586 = vld [vmem:[#allocation7 + $0xd0] sm:$0xff]
    %v587 = vld [vmem:[#allocation7 + $0xd8] sm:$0xff]
    %v588 = vld [vmem:[#allocation7 + $0xe0] sm:$0xff]
    %v589 = vld [vmem:[#allocation7 + $0xe8] sm:$0xff]
    %v590 = vld [vmem:[#allocation7 + $0xf0] sm:$0xff]
    %v591 = vld [vmem:[#allocation7 + $0xf8] sm:$0xff]
    %v624 = vunpack.c.l.b16 %v560
    %v625 = vunpack.c.h.b16 %v560
    %v626 = vunpack.c.l.b16 %v561
    %v627 = vunpack.c.h.b16 %v561
    %v628 = vunpack.c.l.b16 %v562
    %v629 = vunpack.c.h.b16 %v562
    %v630 = vunpack.c.l.b16 %v563
    %v631 = vunpack.c.h.b16 %v563
    %v632 = vunpack.c.l.b16 %v564
    %v633 = vunpack.c.h.b16 %v564
    %v634 = vunpack.c.l.b16 %v565
    %v635 = vunpack.c.h.b16 %v565
    %v636 = vunpack.c.l.b16 %v566
    %v637 = vunpack.c.h.b16 %v566
    %v638 = vunpack.c.l.b16 %v567
    %v639 = vunpack.c.h.b16 %v567
    %v640 = vunpack.c.l.b16 %v568
    %v641 = vunpack.c.h.b16 %v568
    %v642 = vunpack.c.l.b16 %v569
    %v643 = vunpack.c.h.b16 %v569
    %v644 = vunpack.c.l.b16 %v570
    %v645 = vunpack.c.h.b16 %v570
    %v646 = vunpack.c.l.b16 %v571
    %v647 = vunpack.c.h.b16 %v571
    %v648 = vunpack.c.l.b16 %v572
    %v649 = vunpack.c.h.b16 %v572
    %v650 = vunpack.c.l.b16 %v573
    %v651 = vunpack.c.h.b16 %v573
    %v652 = vunpack.c.l.b16 %v574
    %v653 = vunpack.c.h.b16 %v574
    %v654 = vunpack.c.l.b16 %v575
    %v655 = vunpack.c.h.b16 %v575
    %v656 = vunpack.c.l.b16 %v576
    %v657 = vunpack.c.h.b16 %v576
    %v658 = vunpack.c.l.b16 %v577
    %v659 = vunpack.c.h.b16 %v577
    %v660 = vunpack.c.l.b16 %v578
    %v661 = vunpack.c.h.b16 %v578
    %v662 = vunpack.c.l.b16 %v579
    %v663 = vunpack.c.h.b16 %v579
    %v664 = vunpack.c.l.b16 %v580
    %v665 = vunpack.c.h.b16 %v580
    %v666 = vunpack.c.l.b16 %v581
    %v667 = vunpack.c.h.b16 %v581
    %v668 = vunpack.c.l.b16 %v582
    %v669 = vunpack.c.h.b16 %v582
    %v670 = vunpack.c.l.b16 %v583
    %v671 = vunpack.c.h.b16 %v583
    %v672 = vunpack.c.l.b16 %v584
    %v673 = vunpack.c.h.b16 %v584
    %v674 = vunpack.c.l.b16 %v585
    %v675 = vunpack.c.h.b16 %v585
    %v676 = vunpack.c.l.b16 %v586
    %v677 = vunpack.c.h.b16 %v586
    %v678 = vunpack.c.l.b16 %v587
    %v679 = vunpack.c.h.b16 %v587
    %v680 = vunpack.c.l.b16 %v588
    %v681 = vunpack.c.h.b16 %v588
    %v682 = vunpack.c.l.b16 %v589
    %v683 = vunpack.c.h.b16 %v589
    %v684 = vunpack.c.l.b16 %v590
    %v685 = vunpack.c.h.b16 %v590
    %v686 = vunpack.c.l.b16 %v591
    %v687 = vunpack.c.h.b16 %v591
    %v688 = vpack.c.b16 %v628, %v624
    %v689 = vpack.c.b16 %v629, %v625
    %v690 = vpack.c.b16 %v630, %v626
    %v691 = vpack.c.b16 %v631, %v627
    %v692 = vpack.c.b16 %v636, %v632
    %v693 = vpack.c.b16 %v637, %v633
    %v694 = vpack.c.b16 %v638, %v634
    %v695 = vpack.c.b16 %v639, %v635
    %v696 = vpack.c.b16 %v644, %v640
    %v697 = vpack.c.b16 %v645, %v641
    %v698 = vpack.c.b16 %v646, %v642
    %v699 = vpack.c.b16 %v647, %v643
    %v700 = vpack.c.b16 %v652, %v648
    %v701 = vpack.c.b16 %v653, %v649
    %v702 = vpack.c.b16 %v654, %v650
    %v703 = vpack.c.b16 %v655, %v651
    %v704 = vpack.c.b16 %v660, %v656
    %v705 = vpack.c.b16 %v661, %v657
    %v706 = vpack.c.b16 %v662, %v658
    %v707 = vpack.c.b16 %v663, %v659
    %v708 = vpack.c.b16 %v668, %v664
    %v709 = vpack.c.b16 %v669, %v665
    %v710 = vpack.c.b16 %v670, %v666
    %v711 = vpack.c.b16 %v671, %v667
    %v712 = vpack.c.b16 %v676, %v672
    %v713 = vpack.c.b16 %v677, %v673
    %v714 = vpack.c.b16 %v678, %v674
    %v715 = vpack.c.b16 %v679, %v675
    %v716 = vpack.c.b16 %v684, %v680
    %v717 = vpack.c.b16 %v685, %v681
    %v718 = vpack.c.b16 %v686, %v682
    %v719 = vpack.c.b16 %v687, %v683
    %752 = vmatprep.subr.bf16.mxu0 %v689
    %753 = vmatpush1.bf16.msra.mxu0 %v688
    %754 = vmatprep.subr.bf16.mxu0 %v693
    %755 = vmatpush1.bf16.msra.mxu0 %v692
    %756 = vmatprep.subr.bf16.mxu0 %v697
    %757 = vmatpush1.bf16.msra.mxu0 %v696
    %758 = vmatprep.subr.bf16.mxu0 %v701
    %759 = vmatpush1.bf16.msra.mxu0 %v700
    %760 = vmatprep.subr.bf16.mxu0 %v705
    %761 = vmatpush1.bf16.msra.mxu0 %v704
    %762 = vmatprep.subr.bf16.mxu0 %v709
    %763 = vmatpush1.bf16.msra.mxu0 %v708
    %764 = vmatprep.subr.bf16.mxu0 %v713
    %765 = vmatpush1.bf16.msra.mxu0 %v712
    %766 = vmatprep.subr.bf16.mxu0 %v717
    %767 = vmatpush1.bf16.msra.mxu0 %v716
    %768 = vmatprep.subr.bf16.mxu0 0
    %769 = vmatpush1.bf16.msra.mxu0 0
    %770 = vmatprep.subr.bf16.mxu0 0
    %771 = vmatpush1.bf16.msra.mxu0 0
    %772 = vmatprep.subr.bf16.mxu0 0
    %773 = vmatpush1.bf16.msra.mxu0 0
    %774 = vmatprep.subr.bf16.mxu0 0
    %775 = vmatpush1.bf16.msra.mxu0 0
    %776 = vmatprep.subr.bf16.mxu0 0
    %777 = vmatpush1.bf16.msra.mxu0 0
    %778 = vmatprep.subr.bf16.mxu0 0
    %779 = vmatpush1.bf16.msra.mxu0 0
    %780 = vmatprep.subr.bf16.mxu0 0
    %781 = vmatpush1.bf16.msra.mxu0 0
    %782 = vmatprep.subr.bf16.mxu0 0
    %783 = vmatpush1.bf16.msra.mxu0 0
    %784 = vmatprep.mubr.bf16.mxu0 0
    %785 = vmatmul.mubr.bf16.gmra.mrb[0].mxu0 0
    %v786 = vpop.f32.mrb[0].mxu0
    %v787 = vadd.f32 0.0, %v786
    %v788 = vpop.f32.mrb[0].mxu0
    %v789 = vadd.f32 0.0, %v788
    %v790 = vpop.f32.mrb[0].mxu0
    %v791 = vpop.f32.mrb[0].mxu0
    %792 = vdwg.mxu0
    %793 = vmatprep.subr.bf16.mxu0 %v691
    %794 = vmatpush1.bf16.msra.mxu0 %v690
    %795 = vmatprep.subr.bf16.mxu0 %v695
    %796 = vmatpush1.bf16.msra.mxu0 %v694
    %797 = vmatprep.subr.bf16.mxu0 %v699
    %798 = vmatpush1.bf16.msra.mxu0 %v698
    %799 = vmatprep.subr.bf16.mxu0 %v703
    %800 = vmatpush1.bf16.msra.mxu0 %v702
    %801 = vmatprep.subr.bf16.mxu0 %v707
    %802 = vmatpush1.bf16.msra.mxu0 %v706
    %803 = vmatprep.subr.bf16.mxu0 %v711
    %804 = vmatpush1.bf16.msra.mxu0 %v710
    %805 = vmatprep.subr.bf16.mxu0 %v715
    %806 = vmatpush1.bf16.msra.mxu0 %v714
    %807 = vmatprep.subr.bf16.mxu0 %v719
    %808 = vmatpush1.bf16.msra.mxu0 %v718
    %809 = vmatprep.subr.bf16.mxu0 0
    %810 = vmatpush1.bf16.msra.mxu0 0
    %811 = vmatprep.subr.bf16.mxu0 0
    %812 = vmatpush1.bf16.msra.mxu0 0
    %813 = vmatprep.subr.bf16.mxu0 0
    %814 = vmatpush1.bf16.msra.mxu0 0
    %815 = vmatprep.subr.bf16.mxu0 0
    %816 = vmatpush1.bf16.msra.mxu0 0
    %817 = vmatprep.subr.bf16.mxu0 0
    %818 = vmatpush1.bf16.msra.mxu0 0
    %819 = vmatprep.subr.bf16.mxu0 0
    %820 = vmatpush1.bf16.msra.mxu0 0
    %821 = vmatprep.subr.bf16.mxu0 0
    %822 = vmatpush1.bf16.msra.mxu0 0
    %823 = vmatprep.subr.bf16.mxu0 0
    %824 = vmatpush1.bf16.msra.mxu0 0
    %825 = vmatprep.mubr.bf16.mxu0 0
    %826 = vmatmul.mubr.bf16.gmra.mrb[0].mxu0 0
    %v827 = vpop.f32.mrb[0].mxu0
    %v828 = vadd.f32 0.0, %v827
    %v829 = vpop.f32.mrb[0].mxu0
    %v830 = vadd.f32 0.0, %v829
    %v831 = vpop.f32.mrb[0].mxu0
    %v832 = vpop.f32.mrb[0].mxu0
    %833 = vdwg.mxu0
    %v838 = vrot.slane %v787, 1
    %v839 = vrot.slane %v789, 1
    %v840 = vrot.slane %v828, 1
    %v841 = vrot.slane %v830, 1
    %v842 = vrot.slane %v787, 2
    %v843 = vrot.slane %v789, 2
    %v844 = vrot.slane %v828, 2
    %v845 = vrot.slane %v830, 2
    %v846 = vrot.slane %v787, 3
    %v847 = vrot.slane %v789, 3
    %v848 = vrot.slane %v828, 3
    %v849 = vrot.slane %v830, 3
    %v850 = vrot.slane %v787, 4
    %v851 = vrot.slane %v789, 4
    %v852 = vrot.slane %v828, 4
    %v853 = vrot.slane %v830, 4
    %v854 = vrot.slane %v787, 5
    %v855 = vrot.slane %v789, 5
    %v856 = vrot.slane %v828, 5
    %v857 = vrot.slane %v830, 5
    %v858 = vrot.slane %v787, 6
    %v859 = vrot.slane %v789, 6
    %v860 = vrot.slane %v828, 6
    %v861 = vrot.slane %v830, 6
    %v862 = vrot.slane %v787, 7
    %v863 = vrot.slane %v789, 7
    %v864 = vrot.slane %v828, 7
    %v865 = vrot.slane %v830, 7
    %v898 = vadd.f32 %v449, %v787
    %v899 = vadd.f32 %v451, %v789
    %v900 = vadd.f32 %v522, %v828
    %v901 = vadd.f32 %v524, %v830
    %v902 = vadd.f32 %v453, %v838
    %v903 = vadd.f32 %v455, %v839
    %v904 = vadd.f32 %v526, %v840
    %v905 = vadd.f32 %v528, %v841
    %v906 = vadd.f32 %v459, %v842
    %v907 = vadd.f32 %v461, %v843
    %v908 = vadd.f32 %v532, %v844
    %v909 = vadd.f32 %v534, %v845
    %v910 = vadd.f32 %v463, %v846
    %v911 = vadd.f32 %v465, %v847
    %v912 = vadd.f32 %v536, %v848
    %v913 = vadd.f32 %v538, %v849
    %v914 = vadd.f32 %v469, %v850
    %v915 = vadd.f32 %v471, %v851
    %v916 = vadd.f32 %v542, %v852
    %v917 = vadd.f32 %v544, %v853
    %v918 = vadd.f32 %v473, %v854
    %v919 = vadd.f32 %v475, %v855
    %v920 = vadd.f32 %v546, %v856
    %v921 = vadd.f32 %v548, %v857
    %v922 = vadd.f32 %v479, %v858
    %v923 = vadd.f32 %v481, %v859
    %v924 = vadd.f32 %v552, %v860
    %v925 = vadd.f32 %v554, %v861
    %v926 = vadd.f32 %v483, %v862
    %v927 = vadd.f32 %v485, %v863
    %v928 = vadd.f32 %v556, %v864
    %v929 = vadd.f32 %v558, %v865
    %v930 = vxor.u32 %v898, 2147483648
    %v931 = vxor.u32 %v902, 2147483648
    %v932 = vxor.u32 %v906, 2147483648
    %v933 = vxor.u32 %v910, 2147483648
    %v934 = vxor.u32 %v914, 2147483648
    %v935 = vxor.u32 %v918, 2147483648
    %v936 = vxor.u32 %v922, 2147483648
    %v937 = vxor.u32 %v926, 2147483648
    %v938 = vmul.f32 %v930, 1.442695
    %v939 = vpow.pop %v938
    %v940 = vmul.f32 %v931, 1.442695
    %v941 = vpow.pop %v940
    %v942 = vmul.f32 %v932, 1.442695
    %v943 = vpow.pop %v942
    %v944 = vmul.f32 %v933, 1.442695
    %v945 = vpow.pop %v944
    %v946 = vmul.f32 %v934, 1.442695
    %v947 = vpow.pop %v946
    %v948 = vmul.f32 %v935, 1.442695
    %v949 = vpow.pop %v948
    %v950 = vmul.f32 %v936, 1.442695
    %v951 = vpow.pop %v950
    %v952 = vmul.f32 %v937, 1.442695
    %v953 = vpow.pop %v952
    %v954 = vadd.f32 %v939, 1.0
    %v955 = vadd.f32 %v941, 1.0
    %v956 = vadd.f32 %v943, 1.0
    %v957 = vadd.f32 %v945, 1.0
    %v958 = vadd.f32 %v947, 1.0
    %v959 = vadd.f32 %v949, 1.0
    %v960 = vadd.f32 %v951, 1.0
    %v961 = vadd.f32 %v953, 1.0
    %v962 = vrcp.pop %v954
    %v963 = vmul.f32 1.0, %v962
    %v964 = vrcp.pop %v955
    %v965 = vmul.f32 1.0, %v964
    %v966 = vrcp.pop %v956
    %v967 = vmul.f32 1.0, %v966
    %v968 = vrcp.pop %v957
    %v969 = vmul.f32 1.0, %v968
    %v970 = vrcp.pop %v958
    %v971 = vmul.f32 1.0, %v970
    %v972 = vrcp.pop %v959
    %v973 = vmul.f32 1.0, %v972
    %v974 = vrcp.pop %v960
    %v975 = vmul.f32 1.0, %v974
    %v976 = vrcp.pop %v961
    %v977 = vmul.f32 1.0, %v976
    %v978 = vxor.u32 %v899, 2147483648
    %v979 = vxor.u32 %v903, 2147483648
    %v980 = vxor.u32 %v907, 2147483648
    %v981 = vxor.u32 %v911, 2147483648
    %v982 = vxor.u32 %v915, 2147483648
    %v983 = vxor.u32 %v919, 2147483648
    %v984 = vxor.u32 %v923, 2147483648
    %v985 = vxor.u32 %v927, 2147483648
    %v986 = vmul.f32 %v978, 1.442695
    %v987 = vpow.pop %v986
    %v988 = vmul.f32 %v979, 1.442695
    %v989 = vpow.pop %v988
    %v990 = vmul.f32 %v980, 1.442695
    %v991 = vpow.pop %v990
    %v992 = vmul.f32 %v981, 1.442695
    %v993 = vpow.pop %v992
    %v994 = vmul.f32 %v982, 1.442695
    %v995 = vpow.pop %v994
    %v996 = vmul.f32 %v983, 1.442695
    %v997 = vpow.pop %v996
    %v998 = vmul.f32 %v984, 1.442695
    %v999 = vpow.pop %v998
    %v1000 = vmul.f32 %v985, 1.442695
    %v1001 = vpow.pop %v1000
    %v1002 = vadd.f32 %v987, 1.0
    %v1003 = vadd.f32 %v989, 1.0
    %v1004 = vadd.f32 %v991, 1.0
    %v1005 = vadd.f32 %v993, 1.0
    %v1006 = vadd.f32 %v995, 1.0
    %v1007 = vadd.f32 %v997, 1.0
    %v1008 = vadd.f32 %v999, 1.0
    %v1009 = vadd.f32 %v1001, 1.0
    %v1010 = vrcp.pop %v1002
    %v1011 = vmul.f32 1.0, %v1010
    %v1012 = vrcp.pop %v1003
    %v1013 = vmul.f32 1.0, %v1012
    %v1014 = vrcp.pop %v1004
    %v1015 = vmul.f32 1.0, %v1014
    %v1016 = vrcp.pop %v1005
    %v1017 = vmul.f32 1.0, %v1016
    %v1018 = vrcp.pop %v1006
    %v1019 = vmul.f32 1.0, %v1018
    %v1020 = vrcp.pop %v1007
    %v1021 = vmul.f32 1.0, %v1020
    %v1022 = vrcp.pop %v1008
    %v1023 = vmul.f32 1.0, %v1022
    %v1024 = vrcp.pop %v1009
    %v1025 = vmul.f32 1.0, %v1024
    %v1026 = vtanh.pop %v900
    %v1027 = vtanh.pop %v904
    %v1028 = vtanh.pop %v908
    %v1029 = vtanh.pop %v912
    %v1030 = vtanh.pop %v916
    %v1031 = vtanh.pop %v920
    %v1032 = vtanh.pop %v924
    %v1033 = vtanh.pop %v928
    %v1034 = vxor.u32 %v901, 2147483648
    %v1035 = vxor.u32 %v905, 2147483648
    %v1036 = vxor.u32 %v909, 2147483648
    %v1037 = vxor.u32 %v913, 2147483648
    %v1038 = vxor.u32 %v917, 2147483648
    %v1039 = vxor.u32 %v921, 2147483648
    %v1040 = vxor.u32 %v925, 2147483648
    %v1041 = vxor.u32 %v929, 2147483648
    %v1042 = vmul.f32 %v1034, 1.442695
    %v1043 = vpow.pop %v1042
    %v1044 = vmul.f32 %v1035, 1.442695
    %v1045 = vpow.pop %v1044
    %v1046 = vmul.f32 %v1036, 1.442695
    %v1047 = vpow.pop %v1046
    %v1048 = vmul.f32 %v1037, 1.442695
    %v1049 = vpow.pop %v1048
    %v1050 = vmul.f32 %v1038, 1.442695
    %v1051 = vpow.pop %v1050
    %v1052 = vmul.f32 %v1039, 1.442695
    %v1053 = vpow.pop %v1052
    %v1054 = vmul.f32 %v1040, 1.442695
    %v1055 = vpow.pop %v1054
    %v1056 = vmul.f32 %v1041, 1.442695
    %v1057 = vpow.pop %v1056
    %v1058 = vadd.f32 %v1043, 1.0
    %v1059 = vadd.f32 %v1045, 1.0
    %v1060 = vadd.f32 %v1047, 1.0
    %v1061 = vadd.f32 %v1049, 1.0
    %v1062 = vadd.f32 %v1051, 1.0
    %v1063 = vadd.f32 %v1053, 1.0
    %v1064 = vadd.f32 %v1055, 1.0
    %v1065 = vadd.f32 %v1057, 1.0
    %v1066 = vrcp.pop %v1058
    %v1067 = vmul.f32 1.0, %v1066
    %v1068 = vrcp.pop %v1059
    %v1069 = vmul.f32 1.0, %v1068
    %v1070 = vrcp.pop %v1060
    %v1071 = vmul.f32 1.0, %v1070
    %v1072 = vrcp.pop %v1061
    %v1073 = vmul.f32 1.0, %v1072
    %v1074 = vrcp.pop %v1062
    %v1075 = vmul.f32 1.0, %v1074
    %v1076 = vrcp.pop %v1063
    %v1077 = vmul.f32 1.0, %v1076
    %v1078 = vrcp.pop %v1064
    %v1079 = vmul.f32 1.0, %v1078
    %v1080 = vrcp.pop %v1065
    %v1081 = vmul.f32 1.0, %v1080
    %v1082 = vmul.f32 %v1011, 0.0
    %v1083 = vmul.f32 %v1013, 0.0
    %v1084 = vmul.f32 %v1015, 0.0
    %v1085 = vmul.f32 %v1017, 0.0
    %v1086 = vmul.f32 %v1019, 0.0
    %v1087 = vmul.f32 %v1021, 0.0
    %v1088 = vmul.f32 %v1023, 0.0
    %v1089 = vmul.f32 %v1025, 0.0
    %v1090 = vmul.f32 %v963, %v1026
    %v1091 = vmul.f32 %v965, %v1027
    %v1092 = vmul.f32 %v967, %v1028
    %v1093 = vmul.f32 %v969, %v1029
    %v1094 = vmul.f32 %v971, %v1030
    %v1095 = vmul.f32 %v973, %v1031
    %v1096 = vmul.f32 %v975, %v1032
    %v1097 = vmul.f32 %v977, %v1033
    %v1098 = vadd.f32 %v1082, %v1090
    %v1099 = vadd.f32 %v1083, %v1091
    %v1100 = vadd.f32 %v1084, %v1092
    %v1101 = vadd.f32 %v1085, %v1093
    %v1102 = vadd.f32 %v1086, %v1094
    %v1103 = vadd.f32 %v1087, %v1095
    %v1104 = vadd.f32 %v1088, %v1096
    %v1105 = vadd.f32 %v1089, %v1097
    %v1106 = vtanh.pop %v1098
    %v1107 = vtanh.pop %v1099
    %v1108 = vtanh.pop %v1100
    %v1109 = vtanh.pop %v1101
    %v1110 = vtanh.pop %v1102
    %v1111 = vtanh.pop %v1103
    %v1112 = vtanh.pop %v1104
    %v1113 = vtanh.pop %v1105
    %v1114 = vmul.f32 %v1067, %v1106
    %v1115 = vmul.f32 %v1069, %v1107
    %v1116 = vmul.f32 %v1071, %v1108
    %v1117 = vmul.f32 %v1073, %v1109
    %v1118 = vmul.f32 %v1075, %v1110
    %v1119 = vmul.f32 %v1077, %v1111
    %v1120 = vmul.f32 %v1079, %v1112
    %v1121 = vmul.f32 %v1081, %v1113
    %v1122 = vpack.c.bf16 %v1114, %v1114
    %v1123 = vpack.c.bf16 %v1115, %v1115
    %v1124 = vpack.c.bf16 %v1116, %v1116
    %v1125 = vpack.c.bf16 %v1117, %v1117
    %v1126 = vpack.c.bf16 %v1118, %v1118
    %v1127 = vpack.c.bf16 %v1119, %v1119
    %v1128 = vpack.c.bf16 %v1120, %v1120
    %v1129 = vpack.c.bf16 %v1121, %v1121
    %v1138 = vunpack.c.l.b16 %v1122
    %v1139 = vunpack.c.l.b16 %v1123
    %v1140 = vunpack.c.l.b16 %v1124
    %v1141 = vunpack.c.l.b16 %v1125
    %v1142 = vunpack.c.l.b16 %v1126
    %v1143 = vunpack.c.l.b16 %v1127
    %v1144 = vunpack.c.l.b16 %v1128
    %v1145 = vunpack.c.l.b16 %v1129
    %v1146 = vrot.slane %v1139, 7
    %vm1147 = vcmask 1041409
    %v1148 = vsel %vm1147, %v1146, %v1138
    %v1149 = vrot.slane %v1140, 6
    %vm1150 = vcmask 1042434
    %v1151 = vsel %vm1150, %v1149, %v1148
    %v1152 = vrot.slane %v1141, 5
    %vm1153 = vcmask 1043459
    %v1154 = vsel %vm1153, %v1152, %v1151
    %v1155 = vrot.slane %v1142, 4
    %vm1156 = vcmask 1044484
    %v1157 = vsel %vm1156, %v1155, %v1154
    %v1158 = vrot.slane %v1143, 3
    %vm1159 = vcmask 1045509
    %v1160 = vsel %vm1159, %v1158, %v1157
    %v1161 = vrot.slane %v1144, 2
    %vm1162 = vcmask 1046534
    %v1163 = vsel %vm1162, %v1161, %v1160
    %v1164 = vrot.slane %v1145, 1
    %vm1165 = vcmask 1047559
    %v1166 = vsel %vm1165, %v1164, %v1163
    %v1167 = vpack.c.b16 %v1166, %v1166
    %1169 = vmatprep.subr.bf16.mxu0 %v689
    %1170 = vmatpush1.bf16.msra.mxu0 %v688
    %1171 = vmatprep.subr.bf16.mxu0 %v693
    %1172 = vmatpush1.bf16.msra.mxu0 %v692
    %1173 = vmatprep.subr.bf16.mxu0 %v697
    %1174 = vmatpush1.bf16.msra.mxu0 %v696
    %1175 = vmatprep.subr.bf16.mxu0 %v701
    %1176 = vmatpush1.bf16.msra.mxu0 %v700
    %1177 = vmatprep.subr.bf16.mxu0 %v705
    %1178 = vmatpush1.bf16.msra.mxu0 %v704
    %1179 = vmatprep.subr.bf16.mxu0 %v709
    %1180 = vmatpush1.bf16.msra.mxu0 %v708
    %1181 = vmatprep.subr.bf16.mxu0 %v713
    %1182 = vmatpush1.bf16.msra.mxu0 %v712
    %1183 = vmatprep.subr.bf16.mxu0 %v717
    %1184 = vmatpush1.bf16.msra.mxu0 %v716
    %1185 = vmatprep.subr.bf16.mxu0 0
    %1186 = vmatpush1.bf16.msra.mxu0 0
    %1187 = vmatprep.subr.bf16.mxu0 0
    %1188 = vmatpush1.bf16.msra.mxu0 0
    %1189 = vmatprep.subr.bf16.mxu0 0
    %1190 = vmatpush1.bf16.msra.mxu0 0
    %1191 = vmatprep.subr.bf16.mxu0 0
    %1192 = vmatpush1.bf16.msra.mxu0 0
    %1193 = vmatprep.subr.bf16.mxu0 0
    %1194 = vmatpush1.bf16.msra.mxu0 0
    %1195 = vmatprep.subr.bf16.mxu0 0
    %1196 = vmatpush1.bf16.msra.mxu0 0
    %1197 = vmatprep.subr.bf16.mxu0 0
    %1198 = vmatpush1.bf16.msra.mxu0 0
    %1199 = vmatprep.subr.bf16.mxu0 0
    %1200 = vmatpush1.bf16.msra.mxu0 0
    %1201 = vmatprep.mubr.bf16.mxu0 0
    %1202 = vmatmul.mubr.bf16.gmra.mrb[0].mxu0 %v1167
    %v1203 = vpop.f32.mrb[0].mxu0
    %v1204 = vadd.f32 0.0, %v1203
    %v1205 = vpop.f32.mrb[0].mxu0
    %v1206 = vadd.f32 0.0, %v1205
    %v1207 = vpop.f32.mrb[0].mxu0
    %v1208 = vpop.f32.mrb[0].mxu0
    %1209 = vdwg.mxu0
    %1210 = vmatprep.subr.bf16.mxu0 %v691
    %1211 = vmatpush1.bf16.msra.mxu0 %v690
    %1212 = vmatprep.subr.bf16.mxu0 %v695
    %1213 = vmatpush1.bf16.msra.mxu0 %v694
    %1214 = vmatprep.subr.bf16.mxu0 %v699
    %1215 = vmatpush1.bf16.msra.mxu0 %v698
    %1216 = vmatprep.subr.bf16.mxu0 %v703
    %1217 = vmatpush1.bf16.msra.mxu0 %v702
    %1218 = vmatprep.subr.bf16.mxu0 %v707
    %1219 = vmatpush1.bf16.msra.mxu0 %v706
    %1220 = vmatprep.subr.bf16.mxu0 %v711
    %1221 = vmatpush1.bf16.msra.mxu0 %v710
    %1222 = vmatprep.subr.bf16.mxu0 %v715
    %1223 = vmatpush1.bf16.msra.mxu0 %v714
    %1224 = vmatprep.subr.bf16.mxu0 %v719
    %1225 = vmatpush1.bf16.msra.mxu0 %v718
    %1226 = vmatprep.subr.bf16.mxu0 0
    %1227 = vmatpush1.bf16.msra.mxu0 0
    %1228 = vmatprep.subr.bf16.mxu0 0
    %1229 = vmatpush1.bf16.msra.mxu0 0
    %1230 = vmatprep.subr.bf16.mxu0 0
    %1231 = vmatpush1.bf16.msra.mxu0 0
    %1232 = vmatprep.subr.bf16.mxu0 0
    %1233 = vmatpush1.bf16.msra.mxu0 0
    %1234 = vmatprep.subr.bf16.mxu0 0
    %1235 = vmatpush1.bf16.msra.mxu0 0
    %1236 = vmatprep.subr.bf16.mxu0 0
    %1237 = vmatpush1.bf16.msra.mxu0 0
    %1238 = vmatprep.subr.bf16.mxu0 0
    %1239 = vmatpush1.bf16.msra.mxu0 0
    %1240 = vmatprep.subr.bf16.mxu0 0
    %1241 = vmatpush1.bf16.msra.mxu0 0
    %1242 = vmatprep.mubr.bf16.mxu0 0
    %1243 = vmatmul.mubr.bf16.gmra.mrb[0].mxu0 %v1167
    %v1244 = vpop.f32.mrb[0].mxu0
    %v1245 = vadd.f32 0.0, %v1244
    %v1246 = vpop.f32.mrb[0].mxu0
    %v1247 = vadd.f32 0.0, %v1246
    %v1248 = vpop.f32.mrb[0].mxu0
    %v1249 = vpop.f32.mrb[0].mxu0
    %1250 = vdwg.mxu0
    %v1255 = vrot.slane %v1204, 7
    %v1256 = vrot.slane %v1206, 7
    %v1257 = vrot.slane %v1245, 7
    %v1258 = vrot.slane %v1247, 7
    %v1259 = vrot.slane %v1204, 1
    %v1260 = vrot.slane %v1206, 1
    %v1261 = vrot.slane %v1245, 1
    %v1262 = vrot.slane %v1247, 1
    %v1263 = vrot.slane %v1204, 2
    %v1264 = vrot.slane %v1206, 2
    %v1265 = vrot.slane %v1245, 2
    %v1266 = vrot.slane %v1247, 2
    %v1267 = vrot.slane %v1204, 3
    %v1268 = vrot.slane %v1206, 3
    %v1269 = vrot.slane %v1245, 3
    %v1270 = vrot.slane %v1247, 3
    %v1271 = vrot.slane %v1204, 4
    %v1272 = vrot.slane %v1206, 4
    %v1273 = vrot.slane %v1245, 4
    %v1274 = vrot.slane %v1247, 4
    %v1275 = vrot.slane %v1204, 5
    %v1276 = vrot.slane %v1206, 5
    %v1277 = vrot.slane %v1245, 5
    %v1278 = vrot.slane %v1247, 5
    %v1279 = vrot.slane %v1204, 6
    %v1280 = vrot.slane %v1206, 6
    %v1281 = vrot.slane %v1245, 6
    %v1282 = vrot.slane %v1247, 6
    %v1315 = vadd.f32 %v449, %v1255
    %v1316 = vadd.f32 %v451, %v1256
    %v1317 = vadd.f32 %v522, %v1257
    %v1318 = vadd.f32 %v524, %v1258
    %v1319 = vadd.f32 %v453, %v1204
    %v1320 = vadd.f32 %v455, %v1206
    %v1321 = vadd.f32 %v526, %v1245
    %v1322 = vadd.f32 %v528, %v1247
    %v1323 = vadd.f32 %v459, %v1259
    %v1324 = vadd.f32 %v461, %v1260
    %v1325 = vadd.f32 %v532, %v1261
    %v1326 = vadd.f32 %v534, %v1262
    %v1327 = vadd.f32 %v463, %v1263
    %v1328 = vadd.f32 %v465, %v1264
    %v1329 = vadd.f32 %v536, %v1265
    %v1330 = vadd.f32 %v538, %v1266
    %v1331 = vadd.f32 %v469, %v1267
    %v1332 = vadd.f32 %v471, %v1268
    %v1333 = vadd.f32 %v542, %v1269
    %v1334 = vadd.f32 %v544, %v1270
    %v1335 = vadd.f32 %v473, %v1271
    %v1336 = vadd.f32 %v475, %v1272
    %v1337 = vadd.f32 %v546, %v1273
    %v1338 = vadd.f32 %v548, %v1274
    %v1339 = vadd.f32 %v479, %v1275
    %v1340 = vadd.f32 %v481, %v1276
    %v1341 = vadd.f32 %v552, %v1277
    %v1342 = vadd.f32 %v554, %v1278
    %v1343 = vadd.f32 %v483, %v1279
    %v1344 = vadd.f32 %v485, %v1280
    %v1345 = vadd.f32 %v556, %v1281
    %v1346 = vadd.f32 %v558, %v1282
    %v1347 = vxor.u32 %v1315, 2147483648
    %v1348 = vxor.u32 %v1319, 2147483648
    %v1349 = vxor.u32 %v1323, 2147483648
    %v1350 = vxor.u32 %v1327, 2147483648
    %v1351 = vxor.u32 %v1331, 2147483648
    %v1352 = vxor.u32 %v1335, 2147483648
    %v1353 = vxor.u32 %v1339, 2147483648
    %v1354 = vxor.u32 %v1343, 2147483648
    %v1355 = vmul.f32 %v1347, 1.442695
    %v1356 = vpow.pop %v1355
    %v1357 = vmul.f32 %v1348, 1.442695
    %v1358 = vpow.pop %v1357
    %v1359 = vmul.f32 %v1349, 1.442695
    %v1360 = vpow.pop %v1359
    %v1361 = vmul.f32 %v1350, 1.442695
    %v1362 = vpow.pop %v1361
    %v1363 = vmul.f32 %v1351, 1.442695
    %v1364 = vpow.pop %v1363
    %v1365 = vmul.f32 %v1352, 1.442695
    %v1366 = vpow.pop %v1365
    %v1367 = vmul.f32 %v1353, 1.442695
    %v1368 = vpow.pop %v1367
    %v1369 = vmul.f32 %v1354, 1.442695
    %v1370 = vpow.pop %v1369
    %v1371 = vadd.f32 %v1356, 1.0
    %v1372 = vadd.f32 %v1358, 1.0
    %v1373 = vadd.f32 %v1360, 1.0
    %v1374 = vadd.f32 %v1362, 1.0
    %v1375 = vadd.f32 %v1364, 1.0
    %v1376 = vadd.f32 %v1366, 1.0
    %v1377 = vadd.f32 %v1368, 1.0
    %v1378 = vadd.f32 %v1370, 1.0
    %v1379 = vrcp.pop %v1371
    %v1380 = vmul.f32 1.0, %v1379
    %v1381 = vrcp.pop %v1372
    %v1382 = vmul.f32 1.0, %v1381
    %v1383 = vrcp.pop %v1373
    %v1384 = vmul.f32 1.0, %v1383
    %v1385 = vrcp.pop %v1374
    %v1386 = vmul.f32 1.0, %v1385
    %v1387 = vrcp.pop %v1375
    %v1388 = vmul.f32 1.0, %v1387
    %v1389 = vrcp.pop %v1376
    %v1390 = vmul.f32 1.0, %v1389
    %v1391 = vrcp.pop %v1377
    %v1392 = vmul.f32 1.0, %v1391
    %v1393 = vrcp.pop %v1378
    %v1394 = vmul.f32 1.0, %v1393
    %v1395 = vxor.u32 %v1316, 2147483648
    %v1396 = vxor.u32 %v1320, 2147483648
    %v1397 = vxor.u32 %v1324, 2147483648
    %v1398 = vxor.u32 %v1328, 2147483648
    %v1399 = vxor.u32 %v1332, 2147483648
    %v1400 = vxor.u32 %v1336, 2147483648
    %v1401 = vxor.u32 %v1340, 2147483648
    %v1402 = vxor.u32 %v1344, 2147483648
    %v1403 = vmul.f32 %v1395, 1.442695
    %v1404 = vpow.pop %v1403
    %v1405 = vmul.f32 %v1396, 1.442695
    %v1406 = vpow.pop %v1405
    %v1407 = vmul.f32 %v1397, 1.442695
    %v1408 = vpow.pop %v1407
    %v1409 = vmul.f32 %v1398, 1.442695
    %v1410 = vpow.pop %v1409
    %v1411 = vmul.f32 %v1399, 1.442695
    %v1412 = vpow.pop %v1411
    %v1413 = vmul.f32 %v1400, 1.442695
    %v1414 = vpow.pop %v1413
    %v1415 = vmul.f32 %v1401, 1.442695
    %v1416 = vpow.pop %v1415
    %v1417 = vmul.f32 %v1402, 1.442695
    %v1418 = vpow.pop %v1417
    %v1419 = vadd.f32 %v1404, 1.0
    %v1420 = vadd.f32 %v1406, 1.0
    %v1421 = vadd.f32 %v1408, 1.0
    %v1422 = vadd.f32 %v1410, 1.0
    %v1423 = vadd.f32 %v1412, 1.0
    %v1424 = vadd.f32 %v1414, 1.0
    %v1425 = vadd.f32 %v1416, 1.0
    %v1426 = vadd.f32 %v1418, 1.0
    %v1427 = vrcp.pop %v1419
    %v1428 = vmul.f32 1.0, %v1427
    %v1429 = vrcp.pop %v1420
    %v1430 = vmul.f32 1.0, %v1429
    %v1431 = vrcp.pop %v1421
    %v1432 = vmul.f32 1.0, %v1431
    %v1433 = vrcp.pop %v1422
    %v1434 = vmul.f32 1.0, %v1433
    %v1435 = vrcp.pop %v1423
    %v1436 = vmul.f32 1.0, %v1435
    %v1437 = vrcp.pop %v1424
    %v1438 = vmul.f32 1.0, %v1437
    %v1439 = vrcp.pop %v1425
    %v1440 = vmul.f32 1.0, %v1439
    %v1441 = vrcp.pop %v1426
    %v1442 = vmul.f32 1.0, %v1441
    %v1443 = vtanh.pop %v1317
    %v1444 = vtanh.pop %v1321
    %v1445 = vtanh.pop %v1325
    %v1446 = vtanh.pop %v1329
    %v1447 = vtanh.pop %v1333
    %v1448 = vtanh.pop %v1337
    %v1449 = vtanh.pop %v1341
    %v1450 = vtanh.pop %v1345
    %v1451 = vxor.u32 %v1318, 2147483648
    %v1452 = vxor.u32 %v1322, 2147483648
    %v1453 = vxor.u32 %v1326, 2147483648
    %v1454 = vxor.u32 %v1330, 2147483648
    %v1455 = vxor.u32 %v1334, 2147483648
    %v1456 = vxor.u32 %v1338, 2147483648
    %v1457 = vxor.u32 %v1342, 2147483648
    %v1458 = vxor.u32 %v1346, 2147483648
    %v1459 = vmul.f32 %v1451, 1.442695
    %v1460 = vpow.pop %v1459
    %v1461 = vmul.f32 %v1452, 1.442695
    %v1462 = vpow.pop %v1461
    %v1463 = vmul.f32 %v1453, 1.442695
    %v1464 = vpow.pop %v1463
    %v1465 = vmul.f32 %v1454, 1.442695
    %v1466 = vpow.pop %v1465
    %v1467 = vmul.f32 %v1455, 1.442695
    %v1468 = vpow.pop %v1467
    %v1469 = vmul.f32 %v1456, 1.442695
    %v1470 = vpow.pop %v1469
    %v1471 = vmul.f32 %v1457, 1.442695
    %v1472 = vpow.pop %v1471
    %v1473 = vmul.f32 %v1458, 1.442695
    %v1474 = vpow.pop %v1473
    %v1475 = vadd.f32 %v1460, 1.0
    %v1476 = vadd.f32 %v1462, 1.0
    %v1477 = vadd.f32 %v1464, 1.0
    %v1478 = vadd.f32 %v1466, 1.0
    %v1479 = vadd.f32 %v1468, 1.0
    %v1480 = vadd.f32 %v1470, 1.0
    %v1481 = vadd.f32 %v1472, 1.0
    %v1482 = vadd.f32 %v1474, 1.0
    %v1483 = vrcp.pop %v1475
    %v1484 = vmul.f32 1.0, %v1483
    %v1485 = vrcp.pop %v1476
    %v1486 = vmul.f32 1.0, %v1485
    %v1487 = vrcp.pop %v1477
    %v1488 = vmul.f32 1.0, %v1487
    %v1489 = vrcp.pop %v1478
    %v1490 = vmul.f32 1.0, %v1489
    %v1491 = vrcp.pop %v1479
    %v1492 = vmul.f32 1.0, %v1491
    %v1493 = vrcp.pop %v1480
    %v1494 = vmul.f32 1.0, %v1493
    %v1495 = vrcp.pop %v1481
    %v1496 = vmul.f32 1.0, %v1495
    %v1497 = vrcp.pop %v1482
    %v1498 = vmul.f32 1.0, %v1497
    %v1507 = vrot.slane %v1098, 7
    %v1508 = vrot.slane %v1099, 7
    %v1509 = vrot.slane %v1100, 7
    %v1510 = vrot.slane %v1101, 7
    %v1511 = vrot.slane %v1102, 7
    %v1512 = vrot.slane %v1103, 7
    %v1513 = vrot.slane %v1104, 7
    %v1514 = vrot.slane %v1105, 7
    %v1523 = vmul.f32 %v1428, %v1507
    %v1524 = vmul.f32 %v1430, %v1508
    %v1525 = vmul.f32 %v1432, %v1509
    %v1526 = vmul.f32 %v1434, %v1510
    %v1527 = vmul.f32 %v1436, %v1511
    %v1528 = vmul.f32 %v1438, %v1512
    %v1529 = vmul.f32 %v1440, %v1513
    %v1530 = vmul.f32 %v1442, %v1514
    %v1531 = vmul.f32 %v1380, %v1443
    %v1532 = vmul.f32 %v1382, %v1444
    %v1533 = vmul.f32 %v1384, %v1445
    %v1534 = vmul.f32 %v1386, %v1446
    %v1535 = vmul.f32 %v1388, %v1447
    %v1536 = vmul.f32 %v1390, %v1448
    %v1537 = vmul.f32 %v1392, %v1449
    %v1538 = vmul.f32 %v1394, %v1450
    %v1539 = vadd.f32 %v1523, %v1531
    %v1540 = vadd.f32 %v1524, %v1532
    %v1541 = vadd.f32 %v1525, %v1533
    %v1542 = vadd.f32 %v1526, %v1534
    %v1543 = vadd.f32 %v1527, %v1535
    %v1544 = vadd.f32 %v1528, %v1536
    %v1545 = vadd.f32 %v1529, %v1537
    %v1546 = vadd.f32 %v1530, %v1538
    %v1547 = vtanh.pop %v1539
    %v1548 = vtanh.pop %v1540
    %v1549 = vtanh.pop %v1541
    %v1550 = vtanh.pop %v1542
    %v1551 = vtanh.pop %v1543
    %v1552 = vtanh.pop %v1544
    %v1553 = vtanh.pop %v1545
    %v1554 = vtanh.pop %v1546
    %v1555 = vmul.f32 %v1484, %v1547
    %v1556 = vmul.f32 %v1486, %v1548
    %v1557 = vmul.f32 %v1488, %v1549
    %v1558 = vmul.f32 %v1490, %v1550
    %v1559 = vmul.f32 %v1492, %v1551
    %v1560 = vmul.f32 %v1494, %v1552
    %v1561 = vmul.f32 %v1496, %v1553
    %v1562 = vmul.f32 %v1498, %v1554
    %v1563 = vpack.c.bf16 %v1555, %v1555
    %v1564 = vpack.c.bf16 %v1556, %v1556
    %v1565 = vpack.c.bf16 %v1557, %v1557
    %v1566 = vpack.c.bf16 %v1558, %v1558
    %v1567 = vpack.c.bf16 %v1559, %v1559
    %v1568 = vpack.c.bf16 %v1560, %v1560
    %v1569 = vpack.c.bf16 %v1561, %v1561
    %v1570 = vpack.c.bf16 %v1562, %v1562
    %v1579 = vunpack.c.l.b16 %v1563
    %v1580 = vunpack.c.l.b16 %v1564
    %v1581 = vunpack.c.l.b16 %v1565
    %v1582 = vunpack.c.l.b16 %v1566
    %v1583 = vunpack.c.l.b16 %v1567
    %v1584 = vunpack.c.l.b16 %v1568
    %v1585 = vunpack.c.l.b16 %v1569
    %v1586 = vunpack.c.l.b16 %v1570
    %v1587 = vrot.slane %v1579, 1
    %v1588 = vsel %vm1147, %v1580, %v1587
    %v1589 = vrot.slane %v1581, 7
    %v1590 = vsel %vm1150, %v1589, %v1588
    %v1591 = vrot.slane %v1582, 6
    %v1592 = vsel %vm1153, %v1591, %v1590
    %v1593 = vrot.slane %v1583, 5
    %v1594 = vsel %vm1156, %v1593, %v1592
    %v1595 = vrot.slane %v1584, 4
    %v1596 = vsel %vm1159, %v1595, %v1594
    %v1597 = vrot.slane %v1585, 3
    %v1598 = vsel %vm1162, %v1597, %v1596
    %v1599 = vrot.slane %v1586, 2
    %v1600 = vsel %vm1165, %v1599, %v1598
    %v1601 = vpack.c.b16 %v1600, %v1600
    %1603 = vmatprep.subr.bf16.mxu0 %v689
    %1604 = vmatpush1.bf16.msra.mxu0 %v688
    %1605 = vmatprep.subr.bf16.mxu0 %v693
    %1606 = vmatpush1.bf16.msra.mxu0 %v692
    %1607 = vmatprep.subr.bf16.mxu0 %v697
    %1608 = vmatpush1.bf16.msra.mxu0 %v696
    %1609 = vmatprep.subr.bf16.mxu0 %v701
    %1610 = vmatpush1.bf16.msra.mxu0 %v700
    %1611 = vmatprep.subr.bf16.mxu0 %v705
    %1612 = vmatpush1.bf16.msra.mxu0 %v704
    %1613 = vmatprep.subr.bf16.mxu0 %v709
    %1614 = vmatpush1.bf16.msra.mxu0 %v708
    %1615 = vmatprep.subr.bf16.mxu0 %v713
    %1616 = vmatpush1.bf16.msra.mxu0 %v712
    %1617 = vmatprep.subr.bf16.mxu0 %v717
    %1618 = vmatpush1.bf16.msra.mxu0 %v716
    %1619 = vmatprep.subr.bf16.mxu0 0
    %1620 = vmatpush1.bf16.msra.mxu0 0
    %1621 = vmatprep.subr.bf16.mxu0 0
    %1622 = vmatpush1.bf16.msra.mxu0 0
    %1623 = vmatprep.subr.bf16.mxu0 0
    %1624 = vmatpush1.bf16.msra.mxu0 0
    %1625 = vmatprep.subr.bf16.mxu0 0
    %1626 = vmatpush1.bf16.msra.mxu0 0
    %1627 = vmatprep.subr.bf16.mxu0 0
    %1628 = vmatpush1.bf16.msra.mxu0 0
    %1629 = vmatprep.subr.bf16.mxu0 0
    %1630 = vmatpush1.bf16.msra.mxu0 0
    %1631 = vmatprep.subr.bf16.mxu0 0
    %1632 = vmatpush1.bf16.msra.mxu0 0
    %1633 = vmatprep.subr.bf16.mxu0 0
    %1634 = vmatpush1.bf16.msra.mxu0 0
    %1635 = vmatprep.mubr.bf16.mxu0 0
    %1636 = vmatmul.mubr.bf16.gmra.mrb[0].mxu0 %v1601
    %v1637 = vpop.f32.mrb[0].mxu0
    %v1638 = vadd.f32 0.0, %v1637
    %v1639 = vpop.f32.mrb[0].mxu0
    %v1640 = vadd.f32 0.0, %v1639
    %v1641 = vpop.f32.mrb[0].mxu0
    %v1642 = vpop.f32.mrb[0].mxu0
    %1643 = vdwg.mxu0
    %1644 = vmatprep.subr.bf16.mxu0 %v691
    %1645 = vmatpush1.bf16.msra.mxu0 %v690
    %1646 = vmatprep.subr.bf16.mxu0 %v695
    %1647 = vmatpush1.bf16.msra.mxu0 %v694
    %1648 = vmatprep.subr.bf16.mxu0 %v699
    %1649 = vmatpush1.bf16.msra.mxu0 %v698
    %1650 = vmatprep.subr.bf16.mxu0 %v703
    %1651 = vmatpush1.bf16.msra.mxu0 %v702
    %1652 = vmatprep.subr.bf16.mxu0 %v707
    %1653 = vmatpush1.bf16.msra.mxu0 %v706
    %1654 = vmatprep.subr.bf16.mxu0 %v711
    %1655 = vmatpush1.bf16.msra.mxu0 %v710
    %1656 = vmatprep.subr.bf16.mxu0 %v715
    %1657 = vmatpush1.bf16.msra.mxu0 %v714
    %1658 = vmatprep.subr.bf16.mxu0 %v719
    %1659 = vmatpush1.bf16.msra.mxu0 %v718
    %1660 = vmatprep.subr.bf16.mxu0 0
    %1661 = vmatpush1.bf16.msra.mxu0 0
    %1662 = vmatprep.subr.bf16.mxu0 0
    %1663 = vmatpush1.bf16.msra.mxu0 0
    %1664 = vmatprep.subr.bf16.mxu0 0
    %1665 = vmatpush1.bf16.msra.mxu0 0
    %1666 = vmatprep.subr.bf16.mxu0 0
    %1667 = vmatpush1.bf16.msra.mxu0 0
    %1668 = vmatprep.subr.bf16.mxu0 0
    %1669 = vmatpush1.bf16.msra.mxu0 0
    %1670 = vmatprep.subr.bf16.mxu0 0
    %1671 = vmatpush1.bf16.msra.mxu0 0
    %1672 = vmatprep.subr.bf16.mxu0 0
    %1673 = vmatpush1.bf16.msra.mxu0 0
    %1674 = vmatprep.subr.bf16.mxu0 0
    %1675 = vmatpush1.bf16.msra.mxu0 0
    %1676 = vmatprep.mubr.bf16.mxu0 0
    %1677 = vmatmul.mubr.bf16.gmra.mrb[0].mxu0 %v1601
    %v1678 = vpop.f32.mrb[0].mxu0
    %v1679 = vadd.f32 0.0, %v1678
    %v1680 = vpop.f32.mrb[0].mxu0
    %v1681 = vadd.f32 0.0, %v1680
    %v1682 = vpop.f32.mrb[0].mxu0
    %v1683 = vpop.f32.mrb[0].mxu0
    %1684 = vdwg.mxu0
    %v1689 = vrot.slane %v1638, 6
    %v1690 = vrot.slane %v1640, 6
    %v1691 = vrot.slane %v1679, 6
    %v1692 = vrot.slane %v1681, 6
    %v1693 = vrot.slane %v1638, 7
    %v1694 = vrot.slane %v1640, 7
    %v1695 = vrot.slane %v1679, 7
    %v1696 = vrot.slane %v1681, 7
    %v1697 = vrot.slane %v1638, 1
    %v1698 = vrot.slane %v1640, 1
    %v1699 = vrot.slane %v1679, 1
    %v1700 = vrot.slane %v1681, 1
    %v1701 = vrot.slane %v1638, 2
    %v1702 = vrot.slane %v1640, 2
    %v1703 = vrot.slane %v1679, 2
    %v1704 = vrot.slane %v1681, 2
    %v1705 = vrot.slane %v1638, 3
    %v1706 = vrot.slane %v1640, 3
    %v1707 = vrot.slane %v1679, 3
    %v1708 = vrot.slane %v1681, 3
    %v1709 = vrot.slane %v1638, 4
    %v1710 = vrot.slane %v1640, 4
    %v1711 = vrot.slane %v1679, 4
    %v1712 = vrot.slane %v1681, 4
    %v1713 = vrot.slane %v1638, 5
    %v1714 = vrot.slane %v1640, 5
    %v1715 = vrot.slane %v1679, 5
    %v1716 = vrot.slane %v1681, 5
    %v1749 = vadd.f32 %v449, %v1689
    %v1750 = vadd.f32 %v451, %v1690
    %v1751 = vadd.f32 %v522, %v1691
    %v1752 = vadd.f32 %v524, %v1692
    %v1753 = vadd.f32 %v453, %v1693
    %v1754 = vadd.f32 %v455, %v1694
    %v1755 = vadd.f32 %v526, %v1695
    %v1756 = vadd.f32 %v528, %v1696
    %v1757 = vadd.f32 %v459, %v1638
    %v1758 = vadd.f32 %v461, %v1640
    %v1759 = vadd.f32 %v532, %v1679
    %v1760 = vadd.f32 %v534, %v1681
    %v1761 = vadd.f32 %v463, %v1697
    %v1762 = vadd.f32 %v465, %v1698
    %v1763 = vadd.f32 %v536, %v1699
    %v1764 = vadd.f32 %v538, %v1700
    %v1765 = vadd.f32 %v469, %v1701
    %v1766 = vadd.f32 %v471, %v1702
    %v1767 = vadd.f32 %v542, %v1703
    %v1768 = vadd.f32 %v544, %v1704
    %v1769 = vadd.f32 %v473, %v1705
    %v1770 = vadd.f32 %v475, %v1706
    %v1771 = vadd.f32 %v546, %v1707
    %v1772 = vadd.f32 %v548, %v1708
    %v1773 = vadd.f32 %v479, %v1709
    %v1774 = vadd.f32 %v481, %v1710
    %v1775 = vadd.f32 %v552, %v1711
    %v1776 = vadd.f32 %v554, %v1712
    %v1777 = vadd.f32 %v483, %v1713
    %v1778 = vadd.f32 %v485, %v1714
    %v1779 = vadd.f32 %v556, %v1715
    %v1780 = vadd.f32 %v558, %v1716
    %v1781 = vxor.u32 %v1749, 2147483648
    %v1782 = vxor.u32 %v1753, 2147483648
    %v1783 = vxor.u32 %v1757, 2147483648
    %v1784 = vxor.u32 %v1761, 2147483648
    %v1785 = vxor.u32 %v1765, 2147483648
    %v1786 = vxor.u32 %v1769, 2147483648
    %v1787 = vxor.u32 %v1773, 2147483648
    %v1788 = vxor.u32 %v1777, 2147483648
    %v1789 = vmul.f32 %v1781, 1.442695
    %v1790 = vpow.pop %v1789
    %v1791 = vmul.f32 %v1782, 1.442695
    %v1792 = vpow.pop %v1791
    %v1793 = vmul.f32 %v1783, 1.442695
    %v1794 = vpow.pop %v1793
    %v1795 = vmul.f32 %v1784, 1.442695
    %v1796 = vpow.pop %v1795
    %v1797 = vmul.f32 %v1785, 1.442695
    %v1798 = vpow.pop %v1797
    %v1799 = vmul.f32 %v1786, 1.442695
    %v1800 = vpow.pop %v1799
    %v1801 = vmul.f32 %v1787, 1.442695
    %v1802 = vpow.pop %v1801
    %v1803 = vmul.f32 %v1788, 1.442695
    %v1804 = vpow.pop %v1803
    %v1805 = vadd.f32 %v1790, 1.0
    %v1806 = vadd.f32 %v1792, 1.0
    %v1807 = vadd.f32 %v1794, 1.0
    %v1808 = vadd.f32 %v1796, 1.0
    %v1809 = vadd.f32 %v1798, 1.0
    %v1810 = vadd.f32 %v1800, 1.0
    %v1811 = vadd.f32 %v1802, 1.0
    %v1812 = vadd.f32 %v1804, 1.0
    %v1813 = vrcp.pop %v1805
    %v1814 = vmul.f32 1.0, %v1813
    %v1815 = vrcp.pop %v1806
    %v1816 = vmul.f32 1.0, %v1815
    %v1817 = vrcp.pop %v1807
    %v1818 = vmul.f32 1.0, %v1817
    %v1819 = vrcp.pop %v1808
    %v1820 = vmul.f32 1.0, %v1819
    %v1821 = vrcp.pop %v1809
    %v1822 = vmul.f32 1.0, %v1821
    %v1823 = vrcp.pop %v1810
    %v1824 = vmul.f32 1.0, %v1823
    %v1825 = vrcp.pop %v1811
    %v1826 = vmul.f32 1.0, %v1825
    %v1827 = vrcp.pop %v1812
    %v1828 = vmul.f32 1.0, %v1827
    %v1829 = vxor.u32 %v1750, 2147483648
    %v1830 = vxor.u32 %v1754, 2147483648
    %v1831 = vxor.u32 %v1758, 2147483648
    %v1832 = vxor.u32 %v1762, 2147483648
    %v1833 = vxor.u32 %v1766, 2147483648
    %v1834 = vxor.u32 %v1770, 2147483648
    %v1835 = vxor.u32 %v1774, 2147483648
    %v1836 = vxor.u32 %v1778, 2147483648
    %v1837 = vmul.f32 %v1829, 1.442695
    %v1838 = vpow.pop %v1837
    %v1839 = vmul.f32 %v1830, 1.442695
    %v1840 = vpow.pop %v1839
    %v1841 = vmul.f32 %v1831, 1.442695
    %v1842 = vpow.pop %v1841
    %v1843 = vmul.f32 %v1832, 1.442695
    %v1844 = vpow.pop %v1843
    %v1845 = vmul.f32 %v1833, 1.442695
    %v1846 = vpow.pop %v1845
    %v1847 = vmul.f32 %v1834, 1.442695
    %v1848 = vpow.pop %v1847
    %v1849 = vmul.f32 %v1835, 1.442695
    %v1850 = vpow.pop %v1849
    %v1851 = vmul.f32 %v1836, 1.442695
    %v1852 = vpow.pop %v1851
    %v1853 = vadd.f32 %v1838, 1.0
    %v1854 = vadd.f32 %v1840, 1.0
    %v1855 = vadd.f32 %v1842, 1.0
    %v1856 = vadd.f32 %v1844, 1.0
    %v1857 = vadd.f32 %v1846, 1.0
    %v1858 = vadd.f32 %v1848, 1.0
    %v1859 = vadd.f32 %v1850, 1.0
    %v1860 = vadd.f32 %v1852, 1.0
    %v1861 = vrcp.pop %v1853
    %v1862 = vmul.f32 1.0, %v1861
    %v1863 = vrcp.pop %v1854
    %v1864 = vmul.f32 1.0, %v1863
    %v1865 = vrcp.pop %v1855
    %v1866 = vmul.f32 1.0, %v1865
    %v1867 = vrcp.pop %v1856
    %v1868 = vmul.f32 1.0, %v1867
    %v1869 = vrcp.pop %v1857
    %v1870 = vmul.f32 1.0, %v1869
    %v1871 = vrcp.pop %v1858
    %v1872 = vmul.f32 1.0, %v1871
    %v1873 = vrcp.pop %v1859
    %v1874 = vmul.f32 1.0, %v1873
    %v1875 = vrcp.pop %v1860
    %v1876 = vmul.f32 1.0, %v1875
    %v1877 = vtanh.pop %v1751
    %v1878 = vtanh.pop %v1755
    %v1879 = vtanh.pop %v1759
    %v1880 = vtanh.pop %v1763
    %v1881 = vtanh.pop %v1767
    %v1882 = vtanh.pop %v1771
    %v1883 = vtanh.pop %v1775
    %v1884 = vtanh.pop %v1779
    %v1885 = vxor.u32 %v1752, 2147483648
    %v1886 = vxor.u32 %v1756, 2147483648
    %v1887 = vxor.u32 %v1760, 2147483648
    %v1888 = vxor.u32 %v1764, 2147483648
    %v1889 = vxor.u32 %v1768, 2147483648
    %v1890 = vxor.u32 %v1772, 2147483648
    %v1891 = vxor.u32 %v1776, 2147483648
    %v1892 = vxor.u32 %v1780, 2147483648
    %v1893 = vmul.f32 %v1885, 1.442695
    %v1894 = vpow.pop %v1893
    %v1895 = vmul.f32 %v1886, 1.442695
    %v1896 = vpow.pop %v1895
    %v1897 = vmul.f32 %v1887, 1.442695
    %v1898 = vpow.pop %v1897
    %v1899 = vmul.f32 %v1888, 1.442695
    %v1900 = vpow.pop %v1899
    %v1901 = vmul.f32 %v1889, 1.442695
    %v1902 = vpow.pop %v1901
    %v1903 = vmul.f32 %v1890, 1.442695
    %v1904 = vpow.pop %v1903
    %v1905 = vmul.f32 %v1891, 1.442695
    %v1906 = vpow.pop %v1905
    %v1907 = vmul.f32 %v1892, 1.442695
    %v1908 = vpow.pop %v1907
    %v1909 = vadd.f32 %v1894, 1.0
    %v1910 = vadd.f32 %v1896, 1.0
    %v1911 = vadd.f32 %v1898, 1.0
    %v1912 = vadd.f32 %v1900, 1.0
    %v1913 = vadd.f32 %v1902, 1.0
    %v1914 = vadd.f32 %v1904, 1.0
    %v1915 = vadd.f32 %v1906, 1.0
    %v1916 = vadd.f32 %v1908, 1.0
    %v1917 = vrcp.pop %v1909
    %v1918 = vmul.f32 1.0, %v1917
    %v1919 = vrcp.pop %v1910
    %v1920 = vmul.f32 1.0, %v1919
    %v1921 = vrcp.pop %v1911
    %v1922 = vmul.f32 1.0, %v1921
    %v1923 = vrcp.pop %v1912
    %v1924 = vmul.f32 1.0, %v1923
    %v1925 = vrcp.pop %v1913
    %v1926 = vmul.f32 1.0, %v1925
    %v1927 = vrcp.pop %v1914
    %v1928 = vmul.f32 1.0, %v1927
    %v1929 = vrcp.pop %v1915
    %v1930 = vmul.f32 1.0, %v1929
    %v1931 = vrcp.pop %v1916
    %v1932 = vmul.f32 1.0, %v1931
    %v1941 = vrot.slane %v1539, 7
    %v1942 = vrot.slane %v1540, 7
    %v1943 = vrot.slane %v1541, 7
    %v1944 = vrot.slane %v1542, 7
    %v1945 = vrot.slane %v1543, 7
    %v1946 = vrot.slane %v1544, 7
    %v1947 = vrot.slane %v1545, 7
    %v1948 = vrot.slane %v1546, 7
    %v1957 = vmul.f32 %v1862, %v1941
    %v1958 = vmul.f32 %v1864, %v1942
    %v1959 = vmul.f32 %v1866, %v1943
    %v1960 = vmul.f32 %v1868, %v1944
    %v1961 = vmul.f32 %v1870, %v1945
    %v1962 = vmul.f32 %v1872, %v1946
    %v1963 = vmul.f32 %v1874, %v1947
    %v1964 = vmul.f32 %v1876, %v1948
    %v1965 = vmul.f32 %v1814, %v1877
    %v1966 = vmul.f32 %v1816, %v1878
    %v1967 = vmul.f32 %v1818, %v1879
    %v1968 = vmul.f32 %v1820, %v1880
    %v1969 = vmul.f32 %v1822, %v1881
    %v1970 = vmul.f32 %v1824, %v1882
    %v1971 = vmul.f32 %v1826, %v1883
    %v1972 = vmul.f32 %v1828, %v1884
    %v1973 = vadd.f32 %v1957, %v1965
    %v1974 = vadd.f32 %v1958, %v1966
    %v1975 = vadd.f32 %v1959, %v1967
    %v1976 = vadd.f32 %v1960, %v1968
    %v1977 = vadd.f32 %v1961, %v1969
    %v1978 = vadd.f32 %v1962, %v1970
    %v1979 = vadd.f32 %v1963, %v1971
    %v1980 = vadd.f32 %v1964, %v1972
    %v1981 = vtanh.pop %v1973
    %v1982 = vtanh.pop %v1974
    %v1983 = vtanh.pop %v1975
    %v1984 = vtanh.pop %v1976
    %v1985 = vtanh.pop %v1977
    %v1986 = vtanh.pop %v1978
    %v1987 = vtanh.pop %v1979
    %v1988 = vtanh.pop %v1980
    %v1989 = vmul.f32 %v1918, %v1981
    %v1990 = vmul.f32 %v1920, %v1982
    %v1991 = vmul.f32 %v1922, %v1983
    %v1992 = vmul.f32 %v1924, %v1984
    %v1993 = vmul.f32 %v1926, %v1985
    %v1994 = vmul.f32 %v1928, %v1986
    %v1995 = vmul.f32 %v1930, %v1987
    %v1996 = vmul.f32 %v1932, %v1988
    %v1997 = vpack.c.bf16 %v1989, %v1989
    %v1998 = vpack.c.bf16 %v1990, %v1990
    %v1999 = vpack.c.bf16 %v1991, %v1991
    %v2000 = vpack.c.bf16 %v1992, %v1992
    %v2001 = vpack.c.bf16 %v1993, %v1993
    %v2002 = vpack.c.bf16 %v1994, %v1994
    %v2003 = vpack.c.bf16 %v1995, %v1995
    %v2004 = vpack.c.bf16 %v1996, %v1996
    %v2013 = vunpack.c.l.b16 %v1997
    %v2014 = vunpack.c.l.b16 %v1998
    %v2015 = vunpack.c.l.b16 %v1999
    %v2016 = vunpack.c.l.b16 %v2000
    %v2017 = vunpack.c.l.b16 %v2001
    %v2018 = vunpack.c.l.b16 %v2002
    %v2019 = vunpack.c.l.b16 %v2003
    %v2020 = vunpack.c.l.b16 %v2004
    %v2021 = vrot.slane %v2013, 2
    %v2022 = vrot.slane %v2014, 1
    %v2023 = vsel %vm1147, %v2022, %v2021
    %v2024 = vsel %vm1150, %v2015, %v2023
    %v2025 = vrot.slane %v2016, 7
    %v2026 = vsel %vm1153, %v2025, %v2024
    %v2027 = vrot.slane %v2017, 6
    %v2028 = vsel %vm1156, %v2027, %v2026
    %v2029 = vrot.slane %v2018, 5
    %v2030 = vsel %vm1159, %v2029, %v2028
    %v2031 = vrot.slane %v2019, 4
    %v2032 = vsel %vm1162, %v2031, %v2030
    %v2033 = vrot.slane %v2020, 3
    %v2034 = vsel %vm1165, %v2033, %v2032
    %v2035 = vpack.c.b16 %v2034, %v2034
    %2037 = vmatprep.subr.bf16.mxu0 %v689
    %2038 = vmatpush1.bf16.msra.mxu0 %v688
    %2039 = vmatprep.subr.bf16.mxu0 %v693
    %2040 = vmatpush1.bf16.msra.mxu0 %v692
    %2041 = vmatprep.subr.bf16.mxu0 %v697
    %2042 = vmatpush1.bf16.msra.mxu0 %v696
    %2043 = vmatprep.subr.bf16.mxu0 %v701
    %2044 = vmatpush1.bf16.msra.mxu0 %v700
    %2045 = vmatprep.subr.bf16.mxu0 %v705
    %2046 = vmatpush1.bf16.msra.mxu0 %v704
    %2047 = vmatprep.subr.bf16.mxu0 %v709
    %2048 = vmatpush1.bf16.msra.mxu0 %v708
    %2049 = vmatprep.subr.bf16.mxu0 %v713
    %2050 = vmatpush1.bf16.msra.mxu0 %v712
    %2051 = vmatprep.subr.bf16.mxu0 %v717
    %2052 = vmatpush1.bf16.msra.mxu0 %v716
    %2053 = vmatprep.subr.bf16.mxu0 0
    %2054 = vmatpush1.bf16.msra.mxu0 0
    %2055 = vmatprep.subr.bf16.mxu0 0
    %2056 = vmatpush1.bf16.msra.mxu0 0
    %2057 = vmatprep.subr.bf16.mxu0 0
    %2058 = vmatpush1.bf16.msra.mxu0 0
    %2059 = vmatprep.subr.bf16.mxu0 0
    %2060 = vmatpush1.bf16.msra.mxu0 0
    %2061 = vmatprep.subr.bf16.mxu0 0
    %2062 = vmatpush1.bf16.msra.mxu0 0
    %2063 = vmatprep.subr.bf16.mxu0 0
    %2064 = vmatpush1.bf16.msra.mxu0 0
    %2065 = vmatprep.subr.bf16.mxu0 0
    %2066 = vmatpush1.bf16.msra.mxu0 0
    %2067 = vmatprep.subr.bf16.mxu0 0
    %2068 = vmatpush1.bf16.msra.mxu0 0
    %2069 = vmatprep.mubr.bf16.mxu0 0
    %2070 = vmatmul.mubr.bf16.gmra.mrb[0].mxu0 %v2035
    %v2071 = vpop.f32.mrb[0].mxu0
    %v2072 = vadd.f32 0.0, %v2071
    %v2073 = vpop.f32.mrb[0].mxu0
    %v2074 = vadd.f32 0.0, %v2073
    %v2075 = vpop.f32.mrb[0].mxu0
    %v2076 = vpop.f32.mrb[0].mxu0
    %2077 = vdwg.mxu0
    %2078 = vmatprep.subr.bf16.mxu0 %v691
    %2079 = vmatpush1.bf16.msra.mxu0 %v690
    %2080 = vmatprep.subr.bf16.mxu0 %v695
    %2081 = vmatpush1.bf16.msra.mxu0 %v694
    %2082 = vmatprep.subr.bf16.mxu0 %v699
    %2083 = vmatpush1.bf16.msra.mxu0 %v698
    %2084 = vmatprep.subr.bf16.mxu0 %v703
    %2085 = vmatpush1.bf16.msra.mxu0 %v702
    %2086 = vmatprep.subr.bf16.mxu0 %v707
    %2087 = vmatpush1.bf16.msra.mxu0 %v706
    %2088 = vmatprep.subr.bf16.mxu0 %v711
    %2089 = vmatpush1.bf16.msra.mxu0 %v710
    %2090 = vmatprep.subr.bf16.mxu0 %v715
    %2091 = vmatpush1.bf16.msra.mxu0 %v714
    %2092 = vmatprep.subr.bf16.mxu0 %v719
    %2093 = vmatpush1.bf16.msra.mxu0 %v718
    %2094 = vmatprep.subr.bf16.mxu0 0
    %2095 = vmatpush1.bf16.msra.mxu0 0
    %2096 = vmatprep.subr.bf16.mxu0 0
    %2097 = vmatpush1.bf16.msra.mxu0 0
    %2098 = vmatprep.subr.bf16.mxu0 0
    %2099 = vmatpush1.bf16.msra.mxu0 0
    %2100 = vmatprep.subr.bf16.mxu0 0
    %2101 = vmatpush1.bf16.msra.mxu0 0
    %2102 = vmatprep.subr.bf16.mxu0 0
    %2103 = vmatpush1.bf16.msra.mxu0 0
    %2104 = vmatprep.subr.bf16.mxu0 0
    %2105 = vmatpush1.bf16.msra.mxu0 0
    %2106 = vmatprep.subr.bf16.mxu0 0
    %2107 = vmatpush1.bf16.msra.mxu0 0
    %2108 = vmatprep.subr.bf16.mxu0 0
    %2109 = vmatpush1.bf16.msra.mxu0 0
    %2110 = vmatprep.mubr.bf16.mxu0 0
    %2111 = vmatmul.mubr.bf16.gmra.mrb[0].mxu0 %v2035
    %v2112 = vpop.f32.mrb[0].mxu0
    %v2113 = vadd.f32 0.0, %v2112
    %v2114 = vpop.f32.mrb[0].mxu0
    %v2115 = vadd.f32 0.0, %v2114
    %v2116 = vpop.f32.mrb[0].mxu0
    %v2117 = vpop.f32.mrb[0].mxu0
    %2118 = vdwg.mxu0
    %v2123 = vrot.slane %v2072, 5
    %v2124 = vrot.slane %v2074, 5
    %v2125 = vrot.slane %v2113, 5
    %v2126 = vrot.slane %v2115, 5
    %v2127 = vrot.slane %v2072, 6
    %v2128 = vrot.slane %v2074, 6
    %v2129 = vrot.slane %v2113, 6
    %v2130 = vrot.slane %v2115, 6
    %v2131 = vrot.slane %v2072, 7
    %v2132 = vrot.slane %v2074, 7
    %v2133 = vrot.slane %v2113, 7
    %v2134 = vrot.slane %v2115, 7
    %v2135 = vrot.slane %v2072, 1
    %v2136 = vrot.slane %v2074, 1
    %v2137 = vrot.slane %v2113, 1
    %v2138 = vrot.slane %v2115, 1
    %v2139 = vrot.slane %v2072, 2
    %v2140 = vrot.slane %v2074, 2
    %v2141 = vrot.slane %v2113, 2
    %v2142 = vrot.slane %v2115, 2
    %v2143 = vrot.slane %v2072, 3
    %v2144 = vrot.slane %v2074, 3
    %v2145 = vrot.slane %v2113, 3
    %v2146 = vrot.slane %v2115, 3
    %v2147 = vrot.slane %v2072, 4
    %v2148 = vrot.slane %v2074, 4
    %v2149 = vrot.slane %v2113, 4
    %v2150 = vrot.slane %v2115, 4
    %v2183 = vadd.f32 %v449, %v2123
    %v2184 = vadd.f32 %v451, %v2124
    %v2185 = vadd.f32 %v522, %v2125
    %v2186 = vadd.f32 %v524, %v2126
    %v2187 = vadd.f32 %v453, %v2127
    %v2188 = vadd.f32 %v455, %v2128
    %v2189 = vadd.f32 %v526, %v2129
    %v2190 = vadd.f32 %v528, %v2130
    %v2191 = vadd.f32 %v459, %v2131
    %v2192 = vadd.f32 %v461, %v2132
    %v2193 = vadd.f32 %v532, %v2133
    %v2194 = vadd.f32 %v534, %v2134
    %v2195 = vadd.f32 %v463, %v2072
    %v2196 = vadd.f32 %v465, %v2074
    %v2197 = vadd.f32 %v536, %v2113
    %v2198 = vadd.f32 %v538, %v2115
    %v2199 = vadd.f32 %v469, %v2135
    %v2200 = vadd.f32 %v471, %v2136
    %v2201 = vadd.f32 %v542, %v2137
    %v2202 = vadd.f32 %v544, %v2138
    %v2203 = vadd.f32 %v473, %v2139
    %v2204 = vadd.f32 %v475, %v2140
    %v2205 = vadd.f32 %v546, %v2141
    %v2206 = vadd.f32 %v548, %v2142
    %v2207 = vadd.f32 %v479, %v2143
    %v2208 = vadd.f32 %v481, %v2144
    %v2209 = vadd.f32 %v552, %v2145
    %v2210 = vadd.f32 %v554, %v2146
    %v2211 = vadd.f32 %v483, %v2147
    %v2212 = vadd.f32 %v485, %v2148
    %v2213 = vadd.f32 %v556, %v2149
    %v2214 = vadd.f32 %v558, %v2150
    %v2215 = vxor.u32 %v2183, 2147483648
    %v2216 = vxor.u32 %v2187, 2147483648
    %v2217 = vxor.u32 %v2191, 2147483648
    %v2218 = vxor.u32 %v2195, 2147483648
    %v2219 = vxor.u32 %v2199, 2147483648
    %v2220 = vxor.u32 %v2203, 2147483648
    %v2221 = vxor.u32 %v2207, 2147483648
    %v2222 = vxor.u32 %v2211, 2147483648
    %v2223 = vmul.f32 %v2215, 1.442695
    %v2224 = vpow.pop %v2223
    %v2225 = vmul.f32 %v2216, 1.442695
    %v2226 = vpow.pop %v2225
    %v2227 = vmul.f32 %v2217, 1.442695
    %v2228 = vpow.pop %v2227
    %v2229 = vmul.f32 %v2218, 1.442695
    %v2230 = vpow.pop %v2229
    %v2231 = vmul.f32 %v2219, 1.442695
    %v2232 = vpow.pop %v2231
    %v2233 = vmul.f32 %v2220, 1.442695
    %v2234 = vpow.pop %v2233
    %v2235 = vmul.f32 %v2221, 1.442695
    %v2236 = vpow.pop %v2235
    %v2237 = vmul.f32 %v2222, 1.442695
    %v2238 = vpow.pop %v2237
    %v2239 = vadd.f32 %v2224, 1.0
    %v2240 = vadd.f32 %v2226, 1.0
    %v2241 = vadd.f32 %v2228, 1.0
    %v2242 = vadd.f32 %v2230, 1.0
    %v2243 = vadd.f32 %v2232, 1.0
    %v2244 = vadd.f32 %v2234, 1.0
    %v2245 = vadd.f32 %v2236, 1.0
    %v2246 = vadd.f32 %v2238, 1.0
    %v2247 = vrcp.pop %v2239
    %v2248 = vmul.f32 1.0, %v2247
    %v2249 = vrcp.pop %v2240
    %v2250 = vmul.f32 1.0, %v2249
    %v2251 = vrcp.pop %v2241
    %v2252 = vmul.f32 1.0, %v2251
    %v2253 = vrcp.pop %v2242
    %v2254 = vmul.f32 1.0, %v2253
    %v2255 = vrcp.pop %v2243
    %v2256 = vmul.f32 1.0, %v2255
    %v2257 = vrcp.pop %v2244
    %v2258 = vmul.f32 1.0, %v2257
    %v2259 = vrcp.pop %v2245
    %v2260 = vmul.f32 1.0, %v2259
    %v2261 = vrcp.pop %v2246
    %v2262 = vmul.f32 1.0, %v2261
    %v2263 = vxor.u32 %v2184, 2147483648
    %v2264 = vxor.u32 %v2188, 2147483648
    %v2265 = vxor.u32 %v2192, 2147483648
    %v2266 = vxor.u32 %v2196, 2147483648
    %v2267 = vxor.u32 %v2200, 2147483648
    %v2268 = vxor.u32 %v2204, 2147483648
    %v2269 = vxor.u32 %v2208, 2147483648
    %v2270 = vxor.u32 %v2212, 2147483648
    %v2271 = vmul.f32 %v2263, 1.442695
    %v2272 = vpow.pop %v2271
    %v2273 = vmul.f32 %v2264, 1.442695
    %v2274 = vpow.pop %v2273
    %v2275 = vmul.f32 %v2265, 1.442695
    %v2276 = vpow.pop %v2275
    %v2277 = vmul.f32 %v2266, 1.442695
    %v2278 = vpow.pop %v2277
    %v2279 = vmul.f32 %v2267, 1.442695
    %v2280 = vpow.pop %v2279
    %v2281 = vmul.f32 %v2268, 1.442695
    %v2282 = vpow.pop %v2281
    %v2283 = vmul.f32 %v2269, 1.442695
    %v2284 = vpow.pop %v2283
    %v2285 = vmul.f32 %v2270, 1.442695
    %v2286 = vpow.pop %v2285
    %v2287 = vadd.f32 %v2272, 1.0
    %v2288 = vadd.f32 %v2274, 1.0
    %v2289 = vadd.f32 %v2276, 1.0
    %v2290 = vadd.f32 %v2278, 1.0
    %v2291 = vadd.f32 %v2280, 1.0
    %v2292 = vadd.f32 %v2282, 1.0
    %v2293 = vadd.f32 %v2284, 1.0
    %v2294 = vadd.f32 %v2286, 1.0
    %v2295 = vrcp.pop %v2287
    %v2296 = vmul.f32 1.0, %v2295
    %v2297 = vrcp.pop %v2288
    %v2298 = vmul.f32 1.0, %v2297
    %v2299 = vrcp.pop %v2289
    %v2300 = vmul.f32 1.0, %v2299
    %v2301 = vrcp.pop %v2290
    %v2302 = vmul.f32 1.0, %v2301
    %v2303 = vrcp.pop %v2291
    %v2304 = vmul.f32 1.0, %v2303
    %v2305 = vrcp.pop %v2292
    %v2306 = vmul.f32 1.0, %v2305
    %v2307 = vrcp.pop %v2293
    %v2308 = vmul.f32 1.0, %v2307
    %v2309 = vrcp.pop %v2294
    %v2310 = vmul.f32 1.0, %v2309
    %v2311 = vtanh.pop %v2185
    %v2312 = vtanh.pop %v2189
    %v2313 = vtanh.pop %v2193
    %v2314 = vtanh.pop %v2197
    %v2315 = vtanh.pop %v2201
    %v2316 = vtanh.pop %v2205
    %v2317 = vtanh.pop %v2209
    %v2318 = vtanh.pop %v2213
    %v2319 = vxor.u32 %v2186, 2147483648
    %v2320 = vxor.u32 %v2190, 2147483648
    %v2321 = vxor.u32 %v2194, 2147483648
    %v2322 = vxor.u32 %v2198, 2147483648
    %v2323 = vxor.u32 %v2202, 2147483648
    %v2324 = vxor.u32 %v2206, 2147483648
    %v2325 = vxor.u32 %v2210, 2147483648
    %v2326 = vxor.u32 %v2214, 2147483648
    %v2327 = vmul.f32 %v2319, 1.442695
    %v2328 = vpow.pop %v2327
    %v2329 = vmul.f32 %v2320, 1.442695
    %v2330 = vpow.pop %v2329
    %v2331 = vmul.f32 %v2321, 1.442695
    %v2332 = vpow.pop %v2331
    %v2333 = vmul.f32 %v2322, 1.442695
    %v2334 = vpow.pop %v2333
    %v2335 = vmul.f32 %v2323, 1.442695
    %v2336 = vpow.pop %v2335
    %v2337 = vmul.f32 %v2324, 1.442695
    %v2338 = vpow.pop %v2337
    %v2339 = vmul.f32 %v2325, 1.442695
    %v2340 = vpow.pop %v2339
    %v2341 = vmul.f32 %v2326, 1.442695
    %v2342 = vpow.pop %v2341
    %v2343 = vadd.f32 %v2328, 1.0
    %v2344 = vadd.f32 %v2330, 1.0
    %v2345 = vadd.f32 %v2332, 1.0
    %v2346 = vadd.f32 %v2334, 1.0
    %v2347 = vadd.f32 %v2336, 1.0
    %v2348 = vadd.f32 %v2338, 1.0
    %v2349 = vadd.f32 %v2340, 1.0
    %v2350 = vadd.f32 %v2342, 1.0
    %v2351 = vrcp.pop %v2343
    %v2352 = vmul.f32 1.0, %v2351
    %v2353 = vrcp.pop %v2344
    %v2354 = vmul.f32 1.0, %v2353
    %v2355 = vrcp.pop %v2345
    %v2356 = vmul.f32 1.0, %v2355
    %v2357 = vrcp.pop %v2346
    %v2358 = vmul.f32 1.0, %v2357
    %v2359 = vrcp.pop %v2347
    %v2360 = vmul.f32 1.0, %v2359
    %v2361 = vrcp.pop %v2348
    %v2362 = vmul.f32 1.0, %v2361
    %v2363 = vrcp.pop %v2349
    %v2364 = vmul.f32 1.0, %v2363
    %v2365 = vrcp.pop %v2350
    %v2366 = vmul.f32 1.0, %v2365
    %v2375 = vrot.slane %v1973, 7
    %v2376 = vrot.slane %v1974, 7
    %v2377 = vrot.slane %v1975, 7
    %v2378 = vrot.slane %v1976, 7
    %v2379 = vrot.slane %v1977, 7
    %v2380 = vrot.slane %v1978, 7
    %v2381 = vrot.slane %v1979, 7
    %v2382 = vrot.slane %v1980, 7
    %v2391 = vmul.f32 %v2296, %v2375
    %v2392 = vmul.f32 %v2298, %v2376
    %v2393 = vmul.f32 %v2300, %v2377
    %v2394 = vmul.f32 %v2302, %v2378
    %v2395 = vmul.f32 %v2304, %v2379
    %v2396 = vmul.f32 %v2306, %v2380
    %v2397 = vmul.f32 %v2308, %v2381
    %v2398 = vmul.f32 %v2310, %v2382
    %v2399 = vmul.f32 %v2248, %v2311
    %v2400 = vmul.f32 %v2250, %v2312
    %v2401 = vmul.f32 %v2252, %v2313
    %v2402 = vmul.f32 %v2254, %v2314
    %v2403 = vmul.f32 %v2256, %v2315
    %v2404 = vmul.f32 %v2258, %v2316
    %v2405 = vmul.f32 %v2260, %v2317
    %v2406 = vmul.f32 %v2262, %v2318
    %v2407 = vadd.f32 %v2391, %v2399
    %v2408 = vadd.f32 %v2392, %v2400
    %v2409 = vadd.f32 %v2393, %v2401
    %v2410 = vadd.f32 %v2394, %v2402
    %v2411 = vadd.f32 %v2395, %v2403
    %v2412 = vadd.f32 %v2396, %v2404
    %v2413 = vadd.f32 %v2397, %v2405
    %v2414 = vadd.f32 %v2398, %v2406
    %v2415 = vtanh.pop %v2407
    %v2416 = vtanh.pop %v2408
    %v2417 = vtanh.pop %v2409
    %v2418 = vtanh.pop %v2410
    %v2419 = vtanh.pop %v2411
    %v2420 = vtanh.pop %v2412
    %v2421 = vtanh.pop %v2413
    %v2422 = vtanh.pop %v2414
    %v2423 = vmul.f32 %v2352, %v2415
    %v2424 = vmul.f32 %v2354, %v2416
    %v2425 = vmul.f32 %v2356, %v2417
    %v2426 = vmul.f32 %v2358, %v2418
    %v2427 = vmul.f32 %v2360, %v2419
    %v2428 = vmul.f32 %v2362, %v2420
    %v2429 = vmul.f32 %v2364, %v2421
    %v2430 = vmul.f32 %v2366, %v2422
    %v2431 = vpack.c.bf16 %v2423, %v2423
    %v2432 = vpack.c.bf16 %v2424, %v2424
    %v2433 = vpack.c.bf16 %v2425, %v2425
    %v2434 = vpack.c.bf16 %v2426, %v2426
    %v2435 = vpack.c.bf16 %v2427, %v2427
    %v2436 = vpack.c.bf16 %v2428, %v2428
    %v2437 = vpack.c.bf16 %v2429, %v2429
    %v2438 = vpack.c.bf16 %v2430, %v2430
    %v2447 = vunpack.c.l.b16 %v2431
    %v2448 = vunpack.c.l.b16 %v2432
    %v2449 = vunpack.c.l.b16 %v2433
    %v2450 = vunpack.c.l.b16 %v2434
    %v2451 = vunpack.c.l.b16 %v2435
    %v2452 = vunpack.c.l.b16 %v2436
    %v2453 = vunpack.c.l.b16 %v2437
    %v2454 = vunpack.c.l.b16 %v2438
    %v2455 = vrot.slane %v2447, 3
    %v2456 = vrot.slane %v2448, 2
    %v2457 = vsel %vm1147, %v2456, %v2455
    %v2458 = vrot.slane %v2449, 1
    %v2459 = vsel %vm1150, %v2458, %v2457
    %v2460 = vsel %vm1153, %v2450, %v2459
    %v2461 = vrot.slane %v2451, 7
    %v2462 = vsel %vm1156, %v2461, %v2460
    %v2463 = vrot.slane %v2452, 6
    %v2464 = vsel %vm1159, %v2463, %v2462
    %v2465 = vrot.slane %v2453, 5
    %v2466 = vsel %vm1162, %v2465, %v2464
    %v2467 = vrot.slane %v2454, 4
    %v2468 = vsel %vm1165, %v2467, %v2466
    %v2469 = vpack.c.b16 %v2468, %v2468
    %2471 = vmatprep.subr.bf16.mxu0 %v689
    %2472 = vmatpush1.bf16.msra.mxu0 %v688
    %2473 = vmatprep.subr.bf16.mxu0 %v693
    %2474 = vmatpush1.bf16.msra.mxu0 %v692
    %2475 = vmatprep.subr.bf16.mxu0 %v697
    %2476 = vmatpush1.bf16.msra.mxu0 %v696
    %2477 = vmatprep.subr.bf16.mxu0 %v701
    %2478 = vmatpush1.bf16.msra.mxu0 %v700
    %2479 = vmatprep.subr.bf16.mxu0 %v705
    %2480 = vmatpush1.bf16.msra.mxu0 %v704
    %2481 = vmatprep.subr.bf16.mxu0 %v709
    %2482 = vmatpush1.bf16.msra.mxu0 %v708
    %2483 = vmatprep.subr.bf16.mxu0 %v713
    %2484 = vmatpush1.bf16.msra.mxu0 %v712
    %2485 = vmatprep.subr.bf16.mxu0 %v717
    %2486 = vmatpush1.bf16.msra.mxu0 %v716
    %2487 = vmatprep.subr.bf16.mxu0 0
    %2488 = vmatpush1.bf16.msra.mxu0 0
    %2489 = vmatprep.subr.bf16.mxu0 0
    %2490 = vmatpush1.bf16.msra.mxu0 0
    %2491 = vmatprep.subr.bf16.mxu0 0
    %2492 = vmatpush1.bf16.msra.mxu0 0
    %2493 = vmatprep.subr.bf16.mxu0 0
    %2494 = vmatpush1.bf16.msra.mxu0 0
    %2495 = vmatprep.subr.bf16.mxu0 0
    %2496 = vmatpush1.bf16.msra.mxu0 0
    %2497 = vmatprep.subr.bf16.mxu0 0
    %2498 = vmatpush1.bf16.msra.mxu0 0
    %2499 = vmatprep.subr.bf16.mxu0 0
    %2500 = vmatpush1.bf16.msra.mxu0 0
    %2501 = vmatprep.subr.bf16.mxu0 0
    %2502 = vmatpush1.bf16.msra.mxu0 0
    %2503 = vmatprep.mubr.bf16.mxu0 0
    %2504 = vmatmul.mubr.bf16.gmra.mrb[0].mxu0 %v2469
    %v2505 = vpop.f32.mrb[0].mxu0
    %v2506 = vadd.f32 0.0, %v2505
    %v2507 = vpop.f32.mrb[0].mxu0
    %v2508 = vadd.f32 0.0, %v2507
    %v2509 = vpop.f32.mrb[0].mxu0
    %v2510 = vpop.f32.mrb[0].mxu0
    %2511 = vdwg.mxu0
    %2512 = vmatprep.subr.bf16.mxu0 %v691
    %2513 = vmatpush1.bf16.msra.mxu0 %v690
    %2514 = vmatprep.subr.bf16.mxu0 %v695
    %2515 = vmatpush1.bf16.msra.mxu0 %v694
    %2516 = vmatprep.subr.bf16.mxu0 %v699
    %2517 = vmatpush1.bf16.msra.mxu0 %v698
    %2518 = vmatprep.subr.bf16.mxu0 %v703
    %2519 = vmatpush1.bf16.msra.mxu0 %v702
    %2520 = vmatprep.subr.bf16.mxu0 %v707
    %2521 = vmatpush1.bf16.msra.mxu0 %v706
    %2522 = vmatprep.subr.bf16.mxu0 %v711
    %2523 = vmatpush1.bf16.msra.mxu0 %v710
    %2524 = vmatprep.subr.bf16.mxu0 %v715
    %2525 = vmatpush1.bf16.msra.mxu0 %v714
    %2526 = vmatprep.subr.bf16.mxu0 %v719
    %2527 = vmatpush1.bf16.msra.mxu0 %v718
    %2528 = vmatprep.subr.bf16.mxu0 0
    %2529 = vmatpush1.bf16.msra.mxu0 0
    %2530 = vmatprep.subr.bf16.mxu0 0
    %2531 = vmatpush1.bf16.msra.mxu0 0
    %2532 = vmatprep.subr.bf16.mxu0 0
    %2533 = vmatpush1.bf16.msra.mxu0 0
    %2534 = vmatprep.subr.bf16.mxu0 0
    %2535 = vmatpush1.bf16.msra.mxu0 0
    %2536 = vmatprep.subr.bf16.mxu0 0
    %2537 = vmatpush1.bf16.msra.mxu0 0
    %2538 = vmatprep.subr.bf16.mxu0 0
    %2539 = vmatpush1.bf16.msra.mxu0 0
    %2540 = vmatprep.subr.bf16.mxu0 0
    %2541 = vmatpush1.bf16.msra.mxu0 0
    %2542 = vmatprep.subr.bf16.mxu0 0
    %2543 = vmatpush1.bf16.msra.mxu0 0
    %2544 = vmatprep.mubr.bf16.mxu0 0
    %2545 = vmatmul.mubr.bf16.gmra.mrb[0].mxu0 %v2469
    %v2546 = vpop.f32.mrb[0].mxu0
    %v2547 = vadd.f32 0.0, %v2546
    %v2548 = vpop.f32.mrb[0].mxu0
    %v2549 = vadd.f32 0.0, %v2548
    %v2550 = vpop.f32.mrb[0].mxu0
    %v2551 = vpop.f32.mrb[0].mxu0
    %2552 = vdwg.mxu0
    %v2557 = vrot.slane %v2506, 4
    %v2558 = vrot.slane %v2508, 4
    %v2559 = vrot.slane %v2547, 4
    %v2560 = vrot.slane %v2549, 4
    %v2561 = vrot.slane %v2506, 5
    %v2562 = vrot.slane %v2508, 5
    %v2563 = vrot.slane %v2547, 5
    %v2564 = vrot.slane %v2549, 5
    %v2565 = vrot.slane %v2506, 6
    %v2566 = vrot.slane %v2508, 6
    %v2567 = vrot.slane %v2547, 6
    %v2568 = vrot.slane %v2549, 6
    %v2569 = vrot.slane %v2506, 7
    %v2570 = vrot.slane %v2508, 7
    %v2571 = vrot.slane %v2547, 7
    %v2572 = vrot.slane %v2549, 7
    %v2573 = vrot.slane %v2506, 1
    %v2574 = vrot.slane %v2508, 1
    %v2575 = vrot.slane %v2547, 1
    %v2576 = vrot.slane %v2549, 1
    %v2577 = vrot.slane %v2506, 2
    %v2578 = vrot.slane %v2508, 2
    %v2579 = vrot.slane %v2547, 2
    %v2580 = vrot.slane %v2549, 2
    %v2581 = vrot.slane %v2506, 3
    %v2582 = vrot.slane %v2508, 3
    %v2583 = vrot.slane %v2547, 3
    %v2584 = vrot.slane %v2549, 3
    %v2617 = vadd.f32 %v449, %v2557
    %v2618 = vadd.f32 %v451, %v2558
    %v2619 = vadd.f32 %v522, %v2559
    %v2620 = vadd.f32 %v524, %v2560
    %v2621 = vadd.f32 %v453, %v2561
    %v2622 = vadd.f32 %v455, %v2562
    %v2623 = vadd.f32 %v526, %v2563
    %v2624 = vadd.f32 %v528, %v2564
    %v2625 = vadd.f32 %v459, %v2565
    %v2626 = vadd.f32 %v461, %v2566
    %v2627 = vadd.f32 %v532, %v2567
    %v2628 = vadd.f32 %v534, %v2568
    %v2629 = vadd.f32 %v463, %v2569
    %v2630 = vadd.f32 %v465, %v2570
    %v2631 = vadd.f32 %v536, %v2571
    %v2632 = vadd.f32 %v538, %v2572
    %v2633 = vadd.f32 %v469, %v2506
    %v2634 = vadd.f32 %v471, %v2508
    %v2635 = vadd.f32 %v542, %v2547
    %v2636 = vadd.f32 %v544, %v2549
    %v2637 = vadd.f32 %v473, %v2573
    %v2638 = vadd.f32 %v475, %v2574
    %v2639 = vadd.f32 %v546, %v2575
    %v2640 = vadd.f32 %v548, %v2576
    %v2641 = vadd.f32 %v479, %v2577
    %v2642 = vadd.f32 %v481, %v2578
    %v2643 = vadd.f32 %v552, %v2579
    %v2644 = vadd.f32 %v554, %v2580
    %v2645 = vadd.f32 %v483, %v2581
    %v2646 = vadd.f32 %v485, %v2582
    %v2647 = vadd.f32 %v556, %v2583
    %v2648 = vadd.f32 %v558, %v2584
    %v2649 = vxor.u32 %v2617, 2147483648
    %v2650 = vxor.u32 %v2621, 2147483648
    %v2651 = vxor.u32 %v2625, 2147483648
    %v2652 = vxor.u32 %v2629, 2147483648
    %v2653 = vxor.u32 %v2633, 2147483648
    %v2654 = vxor.u32 %v2637, 2147483648
    %v2655 = vxor.u32 %v2641, 2147483648
    %v2656 = vxor.u32 %v2645, 2147483648
    %v2657 = vmul.f32 %v2649, 1.442695
    %v2658 = vpow.pop %v2657
    %v2659 = vmul.f32 %v2650, 1.442695
    %v2660 = vpow.pop %v2659
    %v2661 = vmul.f32 %v2651, 1.442695
    %v2662 = vpow.pop %v2661
    %v2663 = vmul.f32 %v2652, 1.442695
    %v2664 = vpow.pop %v2663
    %v2665 = vmul.f32 %v2653, 1.442695
    %v2666 = vpow.pop %v2665
    %v2667 = vmul.f32 %v2654, 1.442695
    %v2668 = vpow.pop %v2667
    %v2669 = vmul.f32 %v2655, 1.442695
    %v2670 = vpow.pop %v2669
    %v2671 = vmul.f32 %v2656, 1.442695
    %v2672 = vpow.pop %v2671
    %v2673 = vadd.f32 %v2658, 1.0
    %v2674 = vadd.f32 %v2660, 1.0
    %v2675 = vadd.f32 %v2662, 1.0
    %v2676 = vadd.f32 %v2664, 1.0
    %v2677 = vadd.f32 %v2666, 1.0
    %v2678 = vadd.f32 %v2668, 1.0
    %v2679 = vadd.f32 %v2670, 1.0
    %v2680 = vadd.f32 %v2672, 1.0
    %v2681 = vrcp.pop %v2673
    %v2682 = vmul.f32 1.0, %v2681
    %v2683 = vrcp.pop %v2674
    %v2684 = vmul.f32 1.0, %v2683
    %v2685 = vrcp.pop %v2675
    %v2686 = vmul.f32 1.0, %v2685
    %v2687 = vrcp.pop %v2676
    %v2688 = vmul.f32 1.0, %v2687
    %v2689 = vrcp.pop %v2677
    %v2690 = vmul.f32 1.0, %v2689
    %v2691 = vrcp.pop %v2678
    %v2692 = vmul.f32 1.0, %v2691
    %v2693 = vrcp.pop %v2679
    %v2694 = vmul.f32 1.0, %v2693
    %v2695 = vrcp.pop %v2680
    %v2696 = vmul.f32 1.0, %v2695
    %v2697 = vxor.u32 %v2618, 2147483648
    %v2698 = vxor.u32 %v2622, 2147483648
    %v2699 = vxor.u32 %v2626, 2147483648
    %v2700 = vxor.u32 %v2630, 2147483648
    %v2701 = vxor.u32 %v2634, 2147483648
    %v2702 = vxor.u32 %v2638, 2147483648
    %v2703 = vxor.u32 %v2642, 2147483648
    %v2704 = vxor.u32 %v2646, 2147483648
    %v2705 = vmul.f32 %v2697, 1.442695
    %v2706 = vpow.pop %v2705
    %v2707 = vmul.f32 %v2698, 1.442695
    %v2708 = vpow.pop %v2707
    %v2709 = vmul.f32 %v2699, 1.442695
    %v2710 = vpow.pop %v2709
    %v2711 = vmul.f32 %v2700, 1.442695
    %v2712 = vpow.pop %v2711
    %v2713 = vmul.f32 %v2701, 1.442695
    %v2714 = vpow.pop %v2713
    %v2715 = vmul.f32 %v2702, 1.442695
    %v2716 = vpow.pop %v2715
    %v2717 = vmul.f32 %v2703, 1.442695
    %v2718 = vpow.pop %v2717
    %v2719 = vmul.f32 %v2704, 1.442695
    %v2720 = vpow.pop %v2719
    %v2721 = vadd.f32 %v2706, 1.0
    %v2722 = vadd.f32 %v2708, 1.0
    %v2723 = vadd.f32 %v2710, 1.0
    %v2724 = vadd.f32 %v2712, 1.0
    %v2725 = vadd.f32 %v2714, 1.0
    %v2726 = vadd.f32 %v2716, 1.0
    %v2727 = vadd.f32 %v2718, 1.0
    %v2728 = vadd.f32 %v2720, 1.0
    %v2729 = vrcp.pop %v2721
    %v2730 = vmul.f32 1.0, %v2729
    %v2731 = vrcp.pop %v2722
    %v2732 = vmul.f32 1.0, %v2731
    %v2733 = vrcp.pop %v2723
    %v2734 = vmul.f32 1.0, %v2733
    %v2735 = vrcp.pop %v2724
    %v2736 = vmul.f32 1.0, %v2735
    %v2737 = vrcp.pop %v2725
    %v2738 = vmul.f32 1.0, %v2737
    %v2739 = vrcp.pop %v2726
    %v2740 = vmul.f32 1.0, %v2739
    %v2741 = vrcp.pop %v2727
    %v2742 = vmul.f32 1.0, %v2741
    %v2743 = vrcp.pop %v2728
    %v2744 = vmul.f32 1.0, %v2743
    %v2745 = vtanh.pop %v2619
    %v2746 = vtanh.pop %v2623
    %v2747 = vtanh.pop %v2627
    %v2748 = vtanh.pop %v2631
    %v2749 = vtanh.pop %v2635
    %v2750 = vtanh.pop %v2639
    %v2751 = vtanh.pop %v2643
    %v2752 = vtanh.pop %v2647
    %v2753 = vxor.u32 %v2620, 2147483648
    %v2754 = vxor.u32 %v2624, 2147483648
    %v2755 = vxor.u32 %v2628, 2147483648
    %v2756 = vxor.u32 %v2632, 2147483648
    %v2757 = vxor.u32 %v2636, 2147483648
    %v2758 = vxor.u32 %v2640, 2147483648
    %v2759 = vxor.u32 %v2644, 2147483648
    %v2760 = vxor.u32 %v2648, 2147483648
    %v2761 = vmul.f32 %v2753, 1.442695
    %v2762 = vpow.pop %v2761
    %v2763 = vmul.f32 %v2754, 1.442695
    %v2764 = vpow.pop %v2763
    %v2765 = vmul.f32 %v2755, 1.442695
    %v2766 = vpow.pop %v2765
    %v2767 = vmul.f32 %v2756, 1.442695
    %v2768 = vpow.pop %v2767
    %v2769 = vmul.f32 %v2757, 1.442695
    %v2770 = vpow.pop %v2769
    %v2771 = vmul.f32 %v2758, 1.442695
    %v2772 = vpow.pop %v2771
    %v2773 = vmul.f32 %v2759, 1.442695
    %v2774 = vpow.pop %v2773
    %v2775 = vmul.f32 %v2760, 1.442695
    %v2776 = vpow.pop %v2775
    %v2777 = vadd.f32 %v2762, 1.0
    %v2778 = vadd.f32 %v2764, 1.0
    %v2779 = vadd.f32 %v2766, 1.0
    %v2780 = vadd.f32 %v2768, 1.0
    %v2781 = vadd.f32 %v2770, 1.0
    %v2782 = vadd.f32 %v2772, 1.0
    %v2783 = vadd.f32 %v2774, 1.0
    %v2784 = vadd.f32 %v2776, 1.0
    %v2785 = vrcp.pop %v2777
    %v2786 = vmul.f32 1.0, %v2785
    %v2787 = vrcp.pop %v2778
    %v2788 = vmul.f32 1.0, %v2787
    %v2789 = vrcp.pop %v2779
    %v2790 = vmul.f32 1.0, %v2789
    %v2791 = vrcp.pop %v2780
    %v2792 = vmul.f32 1.0, %v2791
    %v2793 = vrcp.pop %v2781
    %v2794 = vmul.f32 1.0, %v2793
    %v2795 = vrcp.pop %v2782
    %v2796 = vmul.f32 1.0, %v2795
    %v2797 = vrcp.pop %v2783
    %v2798 = vmul.f32 1.0, %v2797
    %v2799 = vrcp.pop %v2784
    %v2800 = vmul.f32 1.0, %v2799
    %v2809 = vrot.slane %v2407, 7
    %v2810 = vrot.slane %v2408, 7
    %v2811 = vrot.slane %v2409, 7
    %v2812 = vrot.slane %v2410, 7
    %v2813 = vrot.slane %v2411, 7
    %v2814 = vrot.slane %v2412, 7
    %v2815 = vrot.slane %v2413, 7
    %v2816 = vrot.slane %v2414, 7
    %v2825 = vmul.f32 %v2730, %v2809
    %v2826 = vmul.f32 %v2732, %v2810
    %v2827 = vmul.f32 %v2734, %v2811
    %v2828 = vmul.f32 %v2736, %v2812
    %v2829 = vmul.f32 %v2738, %v2813
    %v2830 = vmul.f32 %v2740, %v2814
    %v2831 = vmul.f32 %v2742, %v2815
    %v2832 = vmul.f32 %v2744, %v2816
    %v2833 = vmul.f32 %v2682, %v2745
    %v2834 = vmul.f32 %v2684, %v2746
    %v2835 = vmul.f32 %v2686, %v2747
    %v2836 = vmul.f32 %v2688, %v2748
    %v2837 = vmul.f32 %v2690, %v2749
    %v2838 = vmul.f32 %v2692, %v2750
    %v2839 = vmul.f32 %v2694, %v2751
    %v2840 = vmul.f32 %v2696, %v2752
    %v2841 = vadd.f32 %v2825, %v2833
    %v2842 = vadd.f32 %v2826, %v2834
    %v2843 = vadd.f32 %v2827, %v2835
    %v2844 = vadd.f32 %v2828, %v2836
    %v2845 = vadd.f32 %v2829, %v2837
    %v2846 = vadd.f32 %v2830, %v2838
    %v2847 = vadd.f32 %v2831, %v2839
    %v2848 = vadd.f32 %v2832, %v2840
    %v2849 = vtanh.pop %v2841
    %v2850 = vtanh.pop %v2842
    %v2851 = vtanh.pop %v2843
    %v2852 = vtanh.pop %v2844
    %v2853 = vtanh.pop %v2845
    %v2854 = vtanh.pop %v2846
    %v2855 = vtanh.pop %v2847
    %v2856 = vtanh.pop %v2848
    %v2857 = vmul.f32 %v2786, %v2849
    %v2858 = vmul.f32 %v2788, %v2850
    %v2859 = vmul.f32 %v2790, %v2851
    %v2860 = vmul.f32 %v2792, %v2852
    %v2861 = vmul.f32 %v2794, %v2853
    %v2862 = vmul.f32 %v2796, %v2854
    %v2863 = vmul.f32 %v2798, %v2855
    %v2864 = vmul.f32 %v2800, %v2856
    %v2865 = vpack.c.bf16 %v2857, %v2857
    %v2866 = vpack.c.bf16 %v2858, %v2858
    %v2867 = vpack.c.bf16 %v2859, %v2859
    %v2868 = vpack.c.bf16 %v2860, %v2860
    %v2869 = vpack.c.bf16 %v2861, %v2861
    %v2870 = vpack.c.bf16 %v2862, %v2862
    %v2871 = vpack.c.bf16 %v2863, %v2863
    %v2872 = vpack.c.bf16 %v2864, %v2864
    %v2881 = vunpack.c.l.b16 %v2865
    %v2882 = vunpack.c.l.b16 %v2866
    %v2883 = vunpack.c.l.b16 %v2867
    %v2884 = vunpack.c.l.b16 %v2868
    %v2885 = vunpack.c.l.b16 %v2869
    %v2886 = vunpack.c.l.b16 %v2870
    %v2887 = vunpack.c.l.b16 %v2871
    %v2888 = vunpack.c.l.b16 %v2872
    %v2889 = vrot.slane %v2881, 4
    %v2890 = vrot.slane %v2882, 3
    %v2891 = vsel %vm1147, %v2890, %v2889
    %v2892 = vrot.slane %v2883, 2
    %v2893 = vsel %vm1150, %v2892, %v2891
    %v2894 = vrot.slane %v2884, 1
    %v2895 = vsel %vm1153, %v2894, %v2893
    %v2896 = vsel %vm1156, %v2885, %v2895
    %v2897 = vrot.slane %v2886, 7
    %v2898 = vsel %vm1159, %v2897, %v2896
    %v2899 = vrot.slane %v2887, 6
    %v2900 = vsel %vm1162, %v2899, %v2898
    %v2901 = vrot.slane %v2888, 5
    %v2902 = vsel %vm1165, %v2901, %v2900
    %v2903 = vpack.c.b16 %v2902, %v2902
    %2905 = vmatprep.subr.bf16.mxu0 %v689
    %2906 = vmatpush1.bf16.msra.mxu0 %v688
    %2907 = vmatprep.subr.bf16.mxu0 %v693
    %2908 = vmatpush1.bf16.msra.mxu0 %v692
    %2909 = vmatprep.subr.bf16.mxu0 %v697
    %2910 = vmatpush1.bf16.msra.mxu0 %v696
    %2911 = vmatprep.subr.bf16.mxu0 %v701
    %2912 = vmatpush1.bf16.msra.mxu0 %v700
    %2913 = vmatprep.subr.bf16.mxu0 %v705
    %2914 = vmatpush1.bf16.msra.mxu0 %v704
    %2915 = vmatprep.subr.bf16.mxu0 %v709
    %2916 = vmatpush1.bf16.msra.mxu0 %v708
    %2917 = vmatprep.subr.bf16.mxu0 %v713
    %2918 = vmatpush1.bf16.msra.mxu0 %v712
    %2919 = vmatprep.subr.bf16.mxu0 %v717
    %2920 = vmatpush1.bf16.msra.mxu0 %v716
    %2921 = vmatprep.subr.bf16.mxu0 0
    %2922 = vmatpush1.bf16.msra.mxu0 0
    %2923 = vmatprep.subr.bf16.mxu0 0
    %2924 = vmatpush1.bf16.msra.mxu0 0
    %2925 = vmatprep.subr.bf16.mxu0 0
    %2926 = vmatpush1.bf16.msra.mxu0 0
    %2927 = vmatprep.subr.bf16.mxu0 0
    %2928 = vmatpush1.bf16.msra.mxu0 0
    %2929 = vmatprep.subr.bf16.mxu0 0
    %2930 = vmatpush1.bf16.msra.mxu0 0
    %2931 = vmatprep.subr.bf16.mxu0 0
    %2932 = vmatpush1.bf16.msra.mxu0 0
    %2933 = vmatprep.subr.bf16.mxu0 0
    %2934 = vmatpush1.bf16.msra.mxu0 0
    %2935 = vmatprep.subr.bf16.mxu0 0
    %2936 = vmatpush1.bf16.msra.mxu0 0
    %2937 = vmatprep.mubr.bf16.mxu0 0
    %2938 = vmatmul.mubr.bf16.gmra.mrb[0].mxu0 %v2903
    %v2939 = vpop.f32.mrb[0].mxu0
    %v2940 = vadd.f32 0.0, %v2939
    %v2941 = vpop.f32.mrb[0].mxu0
    %v2942 = vadd.f32 0.0, %v2941
    %v2943 = vpop.f32.mrb[0].mxu0
    %v2944 = vpop.f32.mrb[0].mxu0
    %2945 = vdwg.mxu0
    %2946 = vmatprep.subr.bf16.mxu0 %v691
    %2947 = vmatpush1.bf16.msra.mxu0 %v690
    %2948 = vmatprep.subr.bf16.mxu0 %v695
    %2949 = vmatpush1.bf16.msra.mxu0 %v694
    %2950 = vmatprep.subr.bf16.mxu0 %v699
    %2951 = vmatpush1.bf16.msra.mxu0 %v698
    %2952 = vmatprep.subr.bf16.mxu0 %v703
    %2953 = vmatpush1.bf16.msra.mxu0 %v702
    %2954 = vmatprep.subr.bf16.mxu0 %v707
    %2955 = vmatpush1.bf16.msra.mxu0 %v706
    %2956 = vmatprep.subr.bf16.mxu0 %v711
    %2957 = vmatpush1.bf16.msra.mxu0 %v710
    %2958 = vmatprep.subr.bf16.mxu0 %v715
    %2959 = vmatpush1.bf16.msra.mxu0 %v714
    %2960 = vmatprep.subr.bf16.mxu0 %v719
    %2961 = vmatpush1.bf16.msra.mxu0 %v718
    %2962 = vmatprep.subr.bf16.mxu0 0
    %2963 = vmatpush1.bf16.msra.mxu0 0
    %2964 = vmatprep.subr.bf16.mxu0 0
    %2965 = vmatpush1.bf16.msra.mxu0 0
    %2966 = vmatprep.subr.bf16.mxu0 0
    %2967 = vmatpush1.bf16.msra.mxu0 0
    %2968 = vmatprep.subr.bf16.mxu0 0
    %2969 = vmatpush1.bf16.msra.mxu0 0
    %2970 = vmatprep.subr.bf16.mxu0 0
    %2971 = vmatpush1.bf16.msra.mxu0 0
    %2972 = vmatprep.subr.bf16.mxu0 0
    %2973 = vmatpush1.bf16.msra.mxu0 0
    %2974 = vmatprep.subr.bf16.mxu0 0
    %2975 = vmatpush1.bf16.msra.mxu0 0
    %2976 = vmatprep.subr.bf16.mxu0 0
    %2977 = vmatpush1.bf16.msra.mxu0 0
    %2978 = vmatprep.mubr.bf16.mxu0 0
    %2979 = vmatmul.mubr.bf16.gmra.mrb[0].mxu0 %v2903
    %v2980 = vpop.f32.mrb[0].mxu0
    %v2981 = vadd.f32 0.0, %v2980
    %v2982 = vpop.f32.mrb[0].mxu0
    %v2983 = vadd.f32 0.0, %v2982
    %v2984 = vpop.f32.mrb[0].mxu0
    %v2985 = vpop.f32.mrb[0].mxu0
    %2986 = vdwg.mxu0
    %v2991 = vrot.slane %v2940, 3
    %v2992 = vrot.slane %v2942, 3
    %v2993 = vrot.slane %v2981, 3
    %v2994 = vrot.slane %v2983, 3
    %v2995 = vrot.slane %v2940, 4
    %v2996 = vrot.slane %v2942, 4
    %v2997 = vrot.slane %v2981, 4
    %v2998 = vrot.slane %v2983, 4
    %v2999 = vrot.slane %v2940, 5
    %v3000 = vrot.slane %v2942, 5
    %v3001 = vrot.slane %v2981, 5
    %v3002 = vrot.slane %v2983, 5
    %v3003 = vrot.slane %v2940, 6
    %v3004 = vrot.slane %v2942, 6
    %v3005 = vrot.slane %v2981, 6
    %v3006 = vrot.slane %v2983, 6
    %v3007 = vrot.slane %v2940, 7
    %v3008 = vrot.slane %v2942, 7
    %v3009 = vrot.slane %v2981, 7
    %v3010 = vrot.slane %v2983, 7
    %v3011 = vrot.slane %v2940, 1
    %v3012 = vrot.slane %v2942, 1
    %v3013 = vrot.slane %v2981, 1
    %v3014 = vrot.slane %v2983, 1
    %v3015 = vrot.slane %v2940, 2
    %v3016 = vrot.slane %v2942, 2
    %v3017 = vrot.slane %v2981, 2
    %v3018 = vrot.slane %v2983, 2
    %v3051 = vadd.f32 %v449, %v2991
    %v3052 = vadd.f32 %v451, %v2992
    %v3053 = vadd.f32 %v522, %v2993
    %v3054 = vadd.f32 %v524, %v2994
    %v3055 = vadd.f32 %v453, %v2995
    %v3056 = vadd.f32 %v455, %v2996
    %v3057 = vadd.f32 %v526, %v2997
    %v3058 = vadd.f32 %v528, %v2998
    %v3059 = vadd.f32 %v459, %v2999
    %v3060 = vadd.f32 %v461, %v3000
    %v3061 = vadd.f32 %v532, %v3001
    %v3062 = vadd.f32 %v534, %v3002
    %v3063 = vadd.f32 %v463, %v3003
    %v3064 = vadd.f32 %v465, %v3004
    %v3065 = vadd.f32 %v536, %v3005
    %v3066 = vadd.f32 %v538, %v3006
    %v3067 = vadd.f32 %v469, %v3007
    %v3068 = vadd.f32 %v471, %v3008
    %v3069 = vadd.f32 %v542, %v3009
    %v3070 = vadd.f32 %v544, %v3010
    %v3071 = vadd.f32 %v473, %v2940
    %v3072 = vadd.f32 %v475, %v2942
    %v3073 = vadd.f32 %v546, %v2981
    %v3074 = vadd.f32 %v548, %v2983
    %v3075 = vadd.f32 %v479, %v3011
    %v3076 = vadd.f32 %v481, %v3012
    %v3077 = vadd.f32 %v552, %v3013
    %v3078 = vadd.f32 %v554, %v3014
    %v3079 = vadd.f32 %v483, %v3015
    %v3080 = vadd.f32 %v485, %v3016
    %v3081 = vadd.f32 %v556, %v3017
    %v3082 = vadd.f32 %v558, %v3018
    %v3083 = vxor.u32 %v3051, 2147483648
    %v3084 = vxor.u32 %v3055, 2147483648
    %v3085 = vxor.u32 %v3059, 2147483648
    %v3086 = vxor.u32 %v3063, 2147483648
    %v3087 = vxor.u32 %v3067, 2147483648
    %v3088 = vxor.u32 %v3071, 2147483648
    %v3089 = vxor.u32 %v3075, 2147483648
    %v3090 = vxor.u32 %v3079, 2147483648
    %v3091 = vmul.f32 %v3083, 1.442695
    %v3092 = vpow.pop %v3091
    %v3093 = vmul.f32 %v3084, 1.442695
    %v3094 = vpow.pop %v3093
    %v3095 = vmul.f32 %v3085, 1.442695
    %v3096 = vpow.pop %v3095
    %v3097 = vmul.f32 %v3086, 1.442695
    %v3098 = vpow.pop %v3097
    %v3099 = vmul.f32 %v3087, 1.442695
    %v3100 = vpow.pop %v3099
    %v3101 = vmul.f32 %v3088, 1.442695
    %v3102 = vpow.pop %v3101
    %v3103 = vmul.f32 %v3089, 1.442695
    %v3104 = vpow.pop %v3103
    %v3105 = vmul.f32 %v3090, 1.442695
    %v3106 = vpow.pop %v3105
    %v3107 = vadd.f32 %v3092, 1.0
    %v3108 = vadd.f32 %v3094, 1.0
    %v3109 = vadd.f32 %v3096, 1.0
    %v3110 = vadd.f32 %v3098, 1.0
    %v3111 = vadd.f32 %v3100, 1.0
    %v3112 = vadd.f32 %v3102, 1.0
    %v3113 = vadd.f32 %v3104, 1.0
    %v3114 = vadd.f32 %v3106, 1.0
    %v3115 = vrcp.pop %v3107
    %v3116 = vmul.f32 1.0, %v3115
    %v3117 = vrcp.pop %v3108
    %v3118 = vmul.f32 1.0, %v3117
    %v3119 = vrcp.pop %v3109
    %v3120 = vmul.f32 1.0, %v3119
    %v3121 = vrcp.pop %v3110
    %v3122 = vmul.f32 1.0, %v3121
    %v3123 = vrcp.pop %v3111
    %v3124 = vmul.f32 1.0, %v3123
    %v3125 = vrcp.pop %v3112
    %v3126 = vmul.f32 1.0, %v3125
    %v3127 = vrcp.pop %v3113
    %v3128 = vmul.f32 1.0, %v3127
    %v3129 = vrcp.pop %v3114
    %v3130 = vmul.f32 1.0, %v3129
    %v3131 = vxor.u32 %v3052, 2147483648
    %v3132 = vxor.u32 %v3056, 2147483648
    %v3133 = vxor.u32 %v3060, 2147483648
    %v3134 = vxor.u32 %v3064, 2147483648
    %v3135 = vxor.u32 %v3068, 2147483648
    %v3136 = vxor.u32 %v3072, 2147483648
    %v3137 = vxor.u32 %v3076, 2147483648
    %v3138 = vxor.u32 %v3080, 2147483648
    %v3139 = vmul.f32 %v3131, 1.442695
    %v3140 = vpow.pop %v3139
    %v3141 = vmul.f32 %v3132, 1.442695
    %v3142 = vpow.pop %v3141
    %v3143 = vmul.f32 %v3133, 1.442695
    %v3144 = vpow.pop %v3143
    %v3145 = vmul.f32 %v3134, 1.442695
    %v3146 = vpow.pop %v3145
    %v3147 = vmul.f32 %v3135, 1.442695
    %v3148 = vpow.pop %v3147
    %v3149 = vmul.f32 %v3136, 1.442695
    %v3150 = vpow.pop %v3149
    %v3151 = vmul.f32 %v3137, 1.442695
    %v3152 = vpow.pop %v3151
    %v3153 = vmul.f32 %v3138, 1.442695
    %v3154 = vpow.pop %v3153
    %v3155 = vadd.f32 %v3140, 1.0
    %v3156 = vadd.f32 %v3142, 1.0
    %v3157 = vadd.f32 %v3144, 1.0
    %v3158 = vadd.f32 %v3146, 1.0
    %v3159 = vadd.f32 %v3148, 1.0
    %v3160 = vadd.f32 %v3150, 1.0
    %v3161 = vadd.f32 %v3152, 1.0
    %v3162 = vadd.f32 %v3154, 1.0
    %v3163 = vrcp.pop %v3155
    %v3164 = vmul.f32 1.0, %v3163
    %v3165 = vrcp.pop %v3156
    %v3166 = vmul.f32 1.0, %v3165
    %v3167 = vrcp.pop %v3157
    %v3168 = vmul.f32 1.0, %v3167
    %v3169 = vrcp.pop %v3158
    %v3170 = vmul.f32 1.0, %v3169
    %v3171 = vrcp.pop %v3159
    %v3172 = vmul.f32 1.0, %v3171
    %v3173 = vrcp.pop %v3160
    %v3174 = vmul.f32 1.0, %v3173
    %v3175 = vrcp.pop %v3161
    %v3176 = vmul.f32 1.0, %v3175
    %v3177 = vrcp.pop %v3162
    %v3178 = vmul.f32 1.0, %v3177
    %v3179 = vtanh.pop %v3053
    %v3180 = vtanh.pop %v3057
    %v3181 = vtanh.pop %v3061
    %v3182 = vtanh.pop %v3065
    %v3183 = vtanh.pop %v3069
    %v3184 = vtanh.pop %v3073
    %v3185 = vtanh.pop %v3077
    %v3186 = vtanh.pop %v3081
    %v3187 = vxor.u32 %v3054, 2147483648
    %v3188 = vxor.u32 %v3058, 2147483648
    %v3189 = vxor.u32 %v3062, 2147483648
    %v3190 = vxor.u32 %v3066, 2147483648
    %v3191 = vxor.u32 %v3070, 2147483648
    %v3192 = vxor.u32 %v3074, 2147483648
    %v3193 = vxor.u32 %v3078, 2147483648
    %v3194 = vxor.u32 %v3082, 2147483648
    %v3195 = vmul.f32 %v3187, 1.442695
    %v3196 = vpow.pop %v3195
    %v3197 = vmul.f32 %v3188, 1.442695
    %v3198 = vpow.pop %v3197
    %v3199 = vmul.f32 %v3189, 1.442695
    %v3200 = vpow.pop %v3199
    %v3201 = vmul.f32 %v3190, 1.442695
    %v3202 = vpow.pop %v3201
    %v3203 = vmul.f32 %v3191, 1.442695
    %v3204 = vpow.pop %v3203
    %v3205 = vmul.f32 %v3192, 1.442695
    %v3206 = vpow.pop %v3205
    %v3207 = vmul.f32 %v3193, 1.442695
    %v3208 = vpow.pop %v3207
    %v3209 = vmul.f32 %v3194, 1.442695
    %v3210 = vpow.pop %v3209
    %v3211 = vadd.f32 %v3196, 1.0
    %v3212 = vadd.f32 %v3198, 1.0
    %v3213 = vadd.f32 %v3200, 1.0
    %v3214 = vadd.f32 %v3202, 1.0
    %v3215 = vadd.f32 %v3204, 1.0
    %v3216 = vadd.f32 %v3206, 1.0
    %v3217 = vadd.f32 %v3208, 1.0
    %v3218 = vadd.f32 %v3210, 1.0
    %v3219 = vrcp.pop %v3211
    %v3220 = vmul.f32 1.0, %v3219
    %v3221 = vrcp.pop %v3212
    %v3222 = vmul.f32 1.0, %v3221
    %v3223 = vrcp.pop %v3213
    %v3224 = vmul.f32 1.0, %v3223
    %v3225 = vrcp.pop %v3214
    %v3226 = vmul.f32 1.0, %v3225
    %v3227 = vrcp.pop %v3215
    %v3228 = vmul.f32 1.0, %v3227
    %v3229 = vrcp.pop %v3216
    %v3230 = vmul.f32 1.0, %v3229
    %v3231 = vrcp.pop %v3217
    %v3232 = vmul.f32 1.0, %v3231
    %v3233 = vrcp.pop %v3218
    %v3234 = vmul.f32 1.0, %v3233
    %v3243 = vrot.slane %v2841, 7
    %v3244 = vrot.slane %v2842, 7
    %v3245 = vrot.slane %v2843, 7
    %v3246 = vrot.slane %v2844, 7
    %v3247 = vrot.slane %v2845, 7
    %v3248 = vrot.slane %v2846, 7
    %v3249 = vrot.slane %v2847, 7
    %v3250 = vrot.slane %v2848, 7
    %v3259 = vmul.f32 %v3164, %v3243
    %v3260 = vmul.f32 %v3166, %v3244
    %v3261 = vmul.f32 %v3168, %v3245
    %v3262 = vmul.f32 %v3170, %v3246
    %v3263 = vmul.f32 %v3172, %v3247
    %v3264 = vmul.f32 %v3174, %v3248
    %v3265 = vmul.f32 %v3176, %v3249
    %v3266 = vmul.f32 %v3178, %v3250
    %v3267 = vmul.f32 %v3116, %v3179
    %v3268 = vmul.f32 %v3118, %v3180
    %v3269 = vmul.f32 %v3120, %v3181
    %v3270 = vmul.f32 %v3122, %v3182
    %v3271 = vmul.f32 %v3124, %v3183
    %v3272 = vmul.f32 %v3126, %v3184
    %v3273 = vmul.f32 %v3128, %v3185
    %v3274 = vmul.f32 %v3130, %v3186
    %v3275 = vadd.f32 %v3259, %v3267
    %v3276 = vadd.f32 %v3260, %v3268
    %v3277 = vadd.f32 %v3261, %v3269
    %v3278 = vadd.f32 %v3262, %v3270
    %v3279 = vadd.f32 %v3263, %v3271
    %v3280 = vadd.f32 %v3264, %v3272
    %v3281 = vadd.f32 %v3265, %v3273
    %v3282 = vadd.f32 %v3266, %v3274
    %v3283 = vtanh.pop %v3275
    %v3284 = vtanh.pop %v3276
    %v3285 = vtanh.pop %v3277
    %v3286 = vtanh.pop %v3278
    %v3287 = vtanh.pop %v3279
    %v3288 = vtanh.pop %v3280
    %v3289 = vtanh.pop %v3281
    %v3290 = vtanh.pop %v3282
    %v3291 = vmul.f32 %v3220, %v3283
    %v3292 = vmul.f32 %v3222, %v3284
    %v3293 = vmul.f32 %v3224, %v3285
    %v3294 = vmul.f32 %v3226, %v3286
    %v3295 = vmul.f32 %v3228, %v3287
    %v3296 = vmul.f32 %v3230, %v3288
    %v3297 = vmul.f32 %v3232, %v3289
    %v3298 = vmul.f32 %v3234, %v3290
    %v3299 = vpack.c.bf16 %v3291, %v3291
    %v3300 = vpack.c.bf16 %v3292, %v3292
    %v3301 = vpack.c.bf16 %v3293, %v3293
    %v3302 = vpack.c.bf16 %v3294, %v3294
    %v3303 = vpack.c.bf16 %v3295, %v3295
    %v3304 = vpack.c.bf16 %v3296, %v3296
    %v3305 = vpack.c.bf16 %v3297, %v3297
    %v3306 = vpack.c.bf16 %v3298, %v3298
    %v3315 = vunpack.c.l.b16 %v3299
    %v3316 = vunpack.c.l.b16 %v3300
    %v3317 = vunpack.c.l.b16 %v3301
    %v3318 = vunpack.c.l.b16 %v3302
    %v3319 = vunpack.c.l.b16 %v3303
    %v3320 = vunpack.c.l.b16 %v3304
    %v3321 = vunpack.c.l.b16 %v3305
    %v3322 = vunpack.c.l.b16 %v3306
    %v3323 = vrot.slane %v3315, 5
    %v3324 = vrot.slane %v3316, 4
    %v3325 = vsel %vm1147, %v3324, %v3323
    %v3326 = vrot.slane %v3317, 3
    %v3327 = vsel %vm1150, %v3326, %v3325
    %v3328 = vrot.slane %v3318, 2
    %v3329 = vsel %vm1153, %v3328, %v3327
    %v3330 = vrot.slane %v3319, 1
    %v3331 = vsel %vm1156, %v3330, %v3329
    %v3332 = vsel %vm1159, %v3320, %v3331
    %v3333 = vrot.slane %v3321, 7
    %v3334 = vsel %vm1162, %v3333, %v3332
    %v3335 = vrot.slane %v3322, 6
    %v3336 = vsel %vm1165, %v3335, %v3334
    %v3337 = vpack.c.b16 %v3336, %v3336
    %3339 = vmatprep.subr.bf16.mxu0 %v689
    %3340 = vmatpush1.bf16.msra.mxu0 %v688
    %3341 = vmatprep.subr.bf16.mxu0 %v693
    %3342 = vmatpush1.bf16.msra.mxu0 %v692
    %3343 = vmatprep.subr.bf16.mxu0 %v697
    %3344 = vmatpush1.bf16.msra.mxu0 %v696
    %3345 = vmatprep.subr.bf16.mxu0 %v701
    %3346 = vmatpush1.bf16.msra.mxu0 %v700
    %3347 = vmatprep.subr.bf16.mxu0 %v705
    %3348 = vmatpush1.bf16.msra.mxu0 %v704
    %3349 = vmatprep.subr.bf16.mxu0 %v709
    %3350 = vmatpush1.bf16.msra.mxu0 %v708
    %3351 = vmatprep.subr.bf16.mxu0 %v713
    %3352 = vmatpush1.bf16.msra.mxu0 %v712
    %3353 = vmatprep.subr.bf16.mxu0 %v717
    %3354 = vmatpush1.bf16.msra.mxu0 %v716
    %3355 = vmatprep.subr.bf16.mxu0 0
    %3356 = vmatpush1.bf16.msra.mxu0 0
    %3357 = vmatprep.subr.bf16.mxu0 0
    %3358 = vmatpush1.bf16.msra.mxu0 0
    %3359 = vmatprep.subr.bf16.mxu0 0
    %3360 = vmatpush1.bf16.msra.mxu0 0
    %3361 = vmatprep.subr.bf16.mxu0 0
    %3362 = vmatpush1.bf16.msra.mxu0 0
    %3363 = vmatprep.subr.bf16.mxu0 0
    %3364 = vmatpush1.bf16.msra.mxu0 0
    %3365 = vmatprep.subr.bf16.mxu0 0
    %3366 = vmatpush1.bf16.msra.mxu0 0
    %3367 = vmatprep.subr.bf16.mxu0 0
    %3368 = vmatpush1.bf16.msra.mxu0 0
    %3369 = vmatprep.subr.bf16.mxu0 0
    %3370 = vmatpush1.bf16.msra.mxu0 0
    %3371 = vmatprep.mubr.bf16.mxu0 0
    %3372 = vmatmul.mubr.bf16.gmra.mrb[0].mxu0 %v3337
    %v3373 = vpop.f32.mrb[0].mxu0
    %v3374 = vadd.f32 0.0, %v3373
    %v3375 = vpop.f32.mrb[0].mxu0
    %v3376 = vadd.f32 0.0, %v3375
    %v3377 = vpop.f32.mrb[0].mxu0
    %v3378 = vpop.f32.mrb[0].mxu0
    %3379 = vdwg.mxu0
    %3380 = vmatprep.subr.bf16.mxu0 %v691
    %3381 = vmatpush1.bf16.msra.mxu0 %v690
    %3382 = vmatprep.subr.bf16.mxu0 %v695
    %3383 = vmatpush1.bf16.msra.mxu0 %v694
    %3384 = vmatprep.subr.bf16.mxu0 %v699
    %3385 = vmatpush1.bf16.msra.mxu0 %v698
    %3386 = vmatprep.subr.bf16.mxu0 %v703
    %3387 = vmatpush1.bf16.msra.mxu0 %v702
    %3388 = vmatprep.subr.bf16.mxu0 %v707
    %3389 = vmatpush1.bf16.msra.mxu0 %v706
    %3390 = vmatprep.subr.bf16.mxu0 %v711
    %3391 = vmatpush1.bf16.msra.mxu0 %v710
    %3392 = vmatprep.subr.bf16.mxu0 %v715
    %3393 = vmatpush1.bf16.msra.mxu0 %v714
    %3394 = vmatprep.subr.bf16.mxu0 %v719
    %3395 = vmatpush1.bf16.msra.mxu0 %v718
    %3396 = vmatprep.subr.bf16.mxu0 0
    %3397 = vmatpush1.bf16.msra.mxu0 0
    %3398 = vmatprep.subr.bf16.mxu0 0
    %3399 = vmatpush1.bf16.msra.mxu0 0
    %3400 = vmatprep.subr.bf16.mxu0 0
    %3401 = vmatpush1.bf16.msra.mxu0 0
    %3402 = vmatprep.subr.bf16.mxu0 0
    %3403 = vmatpush1.bf16.msra.mxu0 0
    %3404 = vmatprep.subr.bf16.mxu0 0
    %3405 = vmatpush1.bf16.msra.mxu0 0
    %3406 = vmatprep.subr.bf16.mxu0 0
    %3407 = vmatpush1.bf16.msra.mxu0 0
    %3408 = vmatprep.subr.bf16.mxu0 0
    %3409 = vmatpush1.bf16.msra.mxu0 0
    %3410 = vmatprep.subr.bf16.mxu0 0
    %3411 = vmatpush1.bf16.msra.mxu0 0
    %3412 = vmatprep.mubr.bf16.mxu0 0
    %3413 = vmatmul.mubr.bf16.gmra.mrb[0].mxu0 %v3337
    %v3414 = vpop.f32.mrb[0].mxu0
    %v3415 = vadd.f32 0.0, %v3414
    %v3416 = vpop.f32.mrb[0].mxu0
    %v3417 = vadd.f32 0.0, %v3416
    %v3418 = vpop.f32.mrb[0].mxu0
    %v3419 = vpop.f32.mrb[0].mxu0
    %3420 = vdwg.mxu0
    %v3425 = vrot.slane %v3374, 2
    %v3426 = vrot.slane %v3376, 2
    %v3427 = vrot.slane %v3415, 2
    %v3428 = vrot.slane %v3417, 2
    %v3429 = vrot.slane %v3374, 3
    %v3430 = vrot.slane %v3376, 3
    %v3431 = vrot.slane %v3415, 3
    %v3432 = vrot.slane %v3417, 3
    %v3433 = vrot.slane %v3374, 4
    %v3434 = vrot.slane %v3376, 4
    %v3435 = vrot.slane %v3415, 4
    %v3436 = vrot.slane %v3417, 4
    %v3437 = vrot.slane %v3374, 5
    %v3438 = vrot.slane %v3376, 5
    %v3439 = vrot.slane %v3415, 5
    %v3440 = vrot.slane %v3417, 5
    %v3441 = vrot.slane %v3374, 6
    %v3442 = vrot.slane %v3376, 6
    %v3443 = vrot.slane %v3415, 6
    %v3444 = vrot.slane %v3417, 6
    %v3445 = vrot.slane %v3374, 7
    %v3446 = vrot.slane %v3376, 7
    %v3447 = vrot.slane %v3415, 7
    %v3448 = vrot.slane %v3417, 7
    %v3449 = vrot.slane %v3374, 1
    %v3450 = vrot.slane %v3376, 1
    %v3451 = vrot.slane %v3415, 1
    %v3452 = vrot.slane %v3417, 1
    %v3485 = vadd.f32 %v449, %v3425
    %v3486 = vadd.f32 %v451, %v3426
    %v3487 = vadd.f32 %v522, %v3427
    %v3488 = vadd.f32 %v524, %v3428
    %v3489 = vadd.f32 %v453, %v3429
    %v3490 = vadd.f32 %v455, %v3430
    %v3491 = vadd.f32 %v526, %v3431
    %v3492 = vadd.f32 %v528, %v3432
    %v3493 = vadd.f32 %v459, %v3433
    %v3494 = vadd.f32 %v461, %v3434
    %v3495 = vadd.f32 %v532, %v3435
    %v3496 = vadd.f32 %v534, %v3436
    %v3497 = vadd.f32 %v463, %v3437
    %v3498 = vadd.f32 %v465, %v3438
    %v3499 = vadd.f32 %v536, %v3439
    %v3500 = vadd.f32 %v538, %v3440
    %v3501 = vadd.f32 %v469, %v3441
    %v3502 = vadd.f32 %v471, %v3442
    %v3503 = vadd.f32 %v542, %v3443
    %v3504 = vadd.f32 %v544, %v3444
    %v3505 = vadd.f32 %v473, %v3445
    %v3506 = vadd.f32 %v475, %v3446
    %v3507 = vadd.f32 %v546, %v3447
    %v3508 = vadd.f32 %v548, %v3448
    %v3509 = vadd.f32 %v479, %v3374
    %v3510 = vadd.f32 %v481, %v3376
    %v3511 = vadd.f32 %v552, %v3415
    %v3512 = vadd.f32 %v554, %v3417
    %v3513 = vadd.f32 %v483, %v3449
    %v3514 = vadd.f32 %v485, %v3450
    %v3515 = vadd.f32 %v556, %v3451
    %v3516 = vadd.f32 %v558, %v3452
    %v3517 = vxor.u32 %v3485, 2147483648
    %v3518 = vxor.u32 %v3489, 2147483648
    %v3519 = vxor.u32 %v3493, 2147483648
    %v3520 = vxor.u32 %v3497, 2147483648
    %v3521 = vxor.u32 %v3501, 2147483648
    %v3522 = vxor.u32 %v3505, 2147483648
    %v3523 = vxor.u32 %v3509, 2147483648
    %v3524 = vxor.u32 %v3513, 2147483648
    %v3525 = vmul.f32 %v3517, 1.442695
    %v3526 = vpow.pop %v3525
    %v3527 = vmul.f32 %v3518, 1.442695
    %v3528 = vpow.pop %v3527
    %v3529 = vmul.f32 %v3519, 1.442695
    %v3530 = vpow.pop %v3529
    %v3531 = vmul.f32 %v3520, 1.442695
    %v3532 = vpow.pop %v3531
    %v3533 = vmul.f32 %v3521, 1.442695
    %v3534 = vpow.pop %v3533
    %v3535 = vmul.f32 %v3522, 1.442695
    %v3536 = vpow.pop %v3535
    %v3537 = vmul.f32 %v3523, 1.442695
    %v3538 = vpow.pop %v3537
    %v3539 = vmul.f32 %v3524, 1.442695
    %v3540 = vpow.pop %v3539
    %v3541 = vadd.f32 %v3526, 1.0
    %v3542 = vadd.f32 %v3528, 1.0
    %v3543 = vadd.f32 %v3530, 1.0
    %v3544 = vadd.f32 %v3532, 1.0
    %v3545 = vadd.f32 %v3534, 1.0
    %v3546 = vadd.f32 %v3536, 1.0
    %v3547 = vadd.f32 %v3538, 1.0
    %v3548 = vadd.f32 %v3540, 1.0
    %v3549 = vrcp.pop %v3541
    %v3550 = vmul.f32 1.0, %v3549
    %v3551 = vrcp.pop %v3542
    %v3552 = vmul.f32 1.0, %v3551
    %v3553 = vrcp.pop %v3543
    %v3554 = vmul.f32 1.0, %v3553
    %v3555 = vrcp.pop %v3544
    %v3556 = vmul.f32 1.0, %v3555
    %v3557 = vrcp.pop %v3545
    %v3558 = vmul.f32 1.0, %v3557
    %v3559 = vrcp.pop %v3546
    %v3560 = vmul.f32 1.0, %v3559
    %v3561 = vrcp.pop %v3547
    %v3562 = vmul.f32 1.0, %v3561
    %v3563 = vrcp.pop %v3548
    %v3564 = vmul.f32 1.0, %v3563
    %v3565 = vxor.u32 %v3486, 2147483648
    %v3566 = vxor.u32 %v3490, 2147483648
    %v3567 = vxor.u32 %v3494, 2147483648
    %v3568 = vxor.u32 %v3498, 2147483648
    %v3569 = vxor.u32 %v3502, 2147483648
    %v3570 = vxor.u32 %v3506, 2147483648
    %v3571 = vxor.u32 %v3510, 2147483648
    %v3572 = vxor.u32 %v3514, 2147483648
    %v3573 = vmul.f32 %v3565, 1.442695
    %v3574 = vpow.pop %v3573
    %v3575 = vmul.f32 %v3566, 1.442695
    %v3576 = vpow.pop %v3575
    %v3577 = vmul.f32 %v3567, 1.442695
    %v3578 = vpow.pop %v3577
    %v3579 = vmul.f32 %v3568, 1.442695
    %v3580 = vpow.pop %v3579
    %v3581 = vmul.f32 %v3569, 1.442695
    %v3582 = vpow.pop %v3581
    %v3583 = vmul.f32 %v3570, 1.442695
    %v3584 = vpow.pop %v3583
    %v3585 = vmul.f32 %v3571, 1.442695
    %v3586 = vpow.pop %v3585
    %v3587 = vmul.f32 %v3572, 1.442695
    %v3588 = vpow.pop %v3587
    %v3589 = vadd.f32 %v3574, 1.0
    %v3590 = vadd.f32 %v3576, 1.0
    %v3591 = vadd.f32 %v3578, 1.0
    %v3592 = vadd.f32 %v3580, 1.0
    %v3593 = vadd.f32 %v3582, 1.0
    %v3594 = vadd.f32 %v3584, 1.0
    %v3595 = vadd.f32 %v3586, 1.0
    %v3596 = vadd.f32 %v3588, 1.0
    %v3597 = vrcp.pop %v3589
    %v3598 = vmul.f32 1.0, %v3597
    %v3599 = vrcp.pop %v3590
    %v3600 = vmul.f32 1.0, %v3599
    %v3601 = vrcp.pop %v3591
    %v3602 = vmul.f32 1.0, %v3601
    %v3603 = vrcp.pop %v3592
    %v3604 = vmul.f32 1.0, %v3603
    %v3605 = vrcp.pop %v3593
    %v3606 = vmul.f32 1.0, %v3605
    %v3607 = vrcp.pop %v3594
    %v3608 = vmul.f32 1.0, %v3607
    %v3609 = vrcp.pop %v3595
    %v3610 = vmul.f32 1.0, %v3609
    %v3611 = vrcp.pop %v3596
    %v3612 = vmul.f32 1.0, %v3611
    %v3613 = vtanh.pop %v3487
    %v3614 = vtanh.pop %v3491
    %v3615 = vtanh.pop %v3495
    %v3616 = vtanh.pop %v3499
    %v3617 = vtanh.pop %v3503
    %v3618 = vtanh.pop %v3507
    %v3619 = vtanh.pop %v3511
    %v3620 = vtanh.pop %v3515
    %v3621 = vxor.u32 %v3488, 2147483648
    %v3622 = vxor.u32 %v3492, 2147483648
    %v3623 = vxor.u32 %v3496, 2147483648
    %v3624 = vxor.u32 %v3500, 2147483648
    %v3625 = vxor.u32 %v3504, 2147483648
    %v3626 = vxor.u32 %v3508, 2147483648
    %v3627 = vxor.u32 %v3512, 2147483648
    %v3628 = vxor.u32 %v3516, 2147483648
    %v3629 = vmul.f32 %v3621, 1.442695
    %v3630 = vpow.pop %v3629
    %v3631 = vmul.f32 %v3622, 1.442695
    %v3632 = vpow.pop %v3631
    %v3633 = vmul.f32 %v3623, 1.442695
    %v3634 = vpow.pop %v3633
    %v3635 = vmul.f32 %v3624, 1.442695
    %v3636 = vpow.pop %v3635
    %v3637 = vmul.f32 %v3625, 1.442695
    %v3638 = vpow.pop %v3637
    %v3639 = vmul.f32 %v3626, 1.442695
    %v3640 = vpow.pop %v3639
    %v3641 = vmul.f32 %v3627, 1.442695
    %v3642 = vpow.pop %v3641
    %v3643 = vmul.f32 %v3628, 1.442695
    %v3644 = vpow.pop %v3643
    %v3645 = vadd.f32 %v3630, 1.0
    %v3646 = vadd.f32 %v3632, 1.0
    %v3647 = vadd.f32 %v3634, 1.0
    %v3648 = vadd.f32 %v3636, 1.0
    %v3649 = vadd.f32 %v3638, 1.0
    %v3650 = vadd.f32 %v3640, 1.0
    %v3651 = vadd.f32 %v3642, 1.0
    %v3652 = vadd.f32 %v3644, 1.0
    %v3653 = vrcp.pop %v3645
    %v3654 = vmul.f32 1.0, %v3653
    %v3655 = vrcp.pop %v3646
    %v3656 = vmul.f32 1.0, %v3655
    %v3657 = vrcp.pop %v3647
    %v3658 = vmul.f32 1.0, %v3657
    %v3659 = vrcp.pop %v3648
    %v3660 = vmul.f32 1.0, %v3659
    %v3661 = vrcp.pop %v3649
    %v3662 = vmul.f32 1.0, %v3661
    %v3663 = vrcp.pop %v3650
    %v3664 = vmul.f32 1.0, %v3663
    %v3665 = vrcp.pop %v3651
    %v3666 = vmul.f32 1.0, %v3665
    %v3667 = vrcp.pop %v3652
    %v3668 = vmul.f32 1.0, %v3667
    %v3677 = vrot.slane %v3275, 7
    %v3678 = vrot.slane %v3276, 7
    %v3679 = vrot.slane %v3277, 7
    %v3680 = vrot.slane %v3278, 7
    %v3681 = vrot.slane %v3279, 7
    %v3682 = vrot.slane %v3280, 7
    %v3683 = vrot.slane %v3281, 7
    %v3684 = vrot.slane %v3282, 7
    %v3693 = vmul.f32 %v3598, %v3677
    %v3694 = vmul.f32 %v3600, %v3678
    %v3695 = vmul.f32 %v3602, %v3679
    %v3696 = vmul.f32 %v3604, %v3680
    %v3697 = vmul.f32 %v3606, %v3681
    %v3698 = vmul.f32 %v3608, %v3682
    %v3699 = vmul.f32 %v3610, %v3683
    %v3700 = vmul.f32 %v3612, %v3684
    %v3701 = vmul.f32 %v3550, %v3613
    %v3702 = vmul.f32 %v3552, %v3614
    %v3703 = vmul.f32 %v3554, %v3615
    %v3704 = vmul.f32 %v3556, %v3616
    %v3705 = vmul.f32 %v3558, %v3617
    %v3706 = vmul.f32 %v3560, %v3618
    %v3707 = vmul.f32 %v3562, %v3619
    %v3708 = vmul.f32 %v3564, %v3620
    %v3709 = vadd.f32 %v3693, %v3701
    %v3710 = vadd.f32 %v3694, %v3702
    %v3711 = vadd.f32 %v3695, %v3703
    %v3712 = vadd.f32 %v3696, %v3704
    %v3713 = vadd.f32 %v3697, %v3705
    %v3714 = vadd.f32 %v3698, %v3706
    %v3715 = vadd.f32 %v3699, %v3707
    %v3716 = vadd.f32 %v3700, %v3708
    %v3717 = vtanh.pop %v3709
    %v3718 = vtanh.pop %v3710
    %v3719 = vtanh.pop %v3711
    %v3720 = vtanh.pop %v3712
    %v3721 = vtanh.pop %v3713
    %v3722 = vtanh.pop %v3714
    %v3723 = vtanh.pop %v3715
    %v3724 = vtanh.pop %v3716
    %v3725 = vmul.f32 %v3654, %v3717
    %v3726 = vmul.f32 %v3656, %v3718
    %v3727 = vmul.f32 %v3658, %v3719
    %v3728 = vmul.f32 %v3660, %v3720
    %v3729 = vmul.f32 %v3662, %v3721
    %v3730 = vmul.f32 %v3664, %v3722
    %v3731 = vmul.f32 %v3666, %v3723
    %v3732 = vmul.f32 %v3668, %v3724
    %v3733 = vpack.c.bf16 %v3725, %v3725
    %v3734 = vpack.c.bf16 %v3726, %v3726
    %v3735 = vpack.c.bf16 %v3727, %v3727
    %v3736 = vpack.c.bf16 %v3728, %v3728
    %v3737 = vpack.c.bf16 %v3729, %v3729
    %v3738 = vpack.c.bf16 %v3730, %v3730
    %v3739 = vpack.c.bf16 %v3731, %v3731
    %v3740 = vpack.c.bf16 %v3732, %v3732
    %v3749 = vunpack.c.l.b16 %v3733
    %v3750 = vunpack.c.l.b16 %v3734
    %v3751 = vunpack.c.l.b16 %v3735
    %v3752 = vunpack.c.l.b16 %v3736
    %v3753 = vunpack.c.l.b16 %v3737
    %v3754 = vunpack.c.l.b16 %v3738
    %v3755 = vunpack.c.l.b16 %v3739
    %v3756 = vunpack.c.l.b16 %v3740
    %v3757 = vrot.slane %v3749, 6
    %v3758 = vrot.slane %v3750, 5
    %v3759 = vsel %vm1147, %v3758, %v3757
    %v3760 = vrot.slane %v3751, 4
    %v3761 = vsel %vm1150, %v3760, %v3759
    %v3762 = vrot.slane %v3752, 3
    %v3763 = vsel %vm1153, %v3762, %v3761
    %v3764 = vrot.slane %v3753, 2
    %v3765 = vsel %vm1156, %v3764, %v3763
    %v3766 = vrot.slane %v3754, 1
    %v3767 = vsel %vm1159, %v3766, %v3765
    %v3768 = vsel %vm1162, %v3755, %v3767
    %v3769 = vrot.slane %v3756, 7
    %v3770 = vsel %vm1165, %v3769, %v3768
    %v3771 = vpack.c.b16 %v3770, %v3770
    %3773 = vmatprep.subr.bf16.mxu0 %v689
    %3774 = vmatpush1.bf16.msra.mxu0 %v688
    %3775 = vmatprep.subr.bf16.mxu0 %v693
    %3776 = vmatpush1.bf16.msra.mxu0 %v692
    %3777 = vmatprep.subr.bf16.mxu0 %v697
    %3778 = vmatpush1.bf16.msra.mxu0 %v696
    %3779 = vmatprep.subr.bf16.mxu0 %v701
    %3780 = vmatpush1.bf16.msra.mxu0 %v700
    %3781 = vmatprep.subr.bf16.mxu0 %v705
    %3782 = vmatpush1.bf16.msra.mxu0 %v704
    %3783 = vmatprep.subr.bf16.mxu0 %v709
    %3784 = vmatpush1.bf16.msra.mxu0 %v708
    %3785 = vmatprep.subr.bf16.mxu0 %v713
    %3786 = vmatpush1.bf16.msra.mxu0 %v712
    %3787 = vmatprep.subr.bf16.mxu0 %v717
    %3788 = vmatpush1.bf16.msra.mxu0 %v716
    %3789 = vmatprep.subr.bf16.mxu0 0
    %3790 = vmatpush1.bf16.msra.mxu0 0
    %3791 = vmatprep.subr.bf16.mxu0 0
    %3792 = vmatpush1.bf16.msra.mxu0 0
    %3793 = vmatprep.subr.bf16.mxu0 0
    %3794 = vmatpush1.bf16.msra.mxu0 0
    %3795 = vmatprep.subr.bf16.mxu0 0
    %3796 = vmatpush1.bf16.msra.mxu0 0
    %3797 = vmatprep.subr.bf16.mxu0 0
    %3798 = vmatpush1.bf16.msra.mxu0 0
    %3799 = vmatprep.subr.bf16.mxu0 0
    %3800 = vmatpush1.bf16.msra.mxu0 0
    %3801 = vmatprep.subr.bf16.mxu0 0
    %3802 = vmatpush1.bf16.msra.mxu0 0
    %3803 = vmatprep.subr.bf16.mxu0 0
    %3804 = vmatpush1.bf16.msra.mxu0 0
    %3805 = vmatprep.mubr.bf16.mxu0 0
    %3806 = vmatmul.mubr.bf16.gmra.mrb[0].mxu0 %v3771
    %v3807 = vpop.f32.mrb[0].mxu0
    %v3808 = vadd.f32 0.0, %v3807
    %v3809 = vpop.f32.mrb[0].mxu0
    %v3810 = vadd.f32 0.0, %v3809
    %v3811 = vpop.f32.mrb[0].mxu0
    %v3812 = vpop.f32.mrb[0].mxu0
    %3813 = vdwg.mxu0
    %3814 = vmatprep.subr.bf16.mxu0 %v691
    %3815 = vmatpush1.bf16.msra.mxu0 %v690
    %3816 = vmatprep.subr.bf16.mxu0 %v695
    %3817 = vmatpush1.bf16.msra.mxu0 %v694
    %3818 = vmatprep.subr.bf16.mxu0 %v699
    %3819 = vmatpush1.bf16.msra.mxu0 %v698
    %3820 = vmatprep.subr.bf16.mxu0 %v703
    %3821 = vmatpush1.bf16.msra.mxu0 %v702
    %3822 = vmatprep.subr.bf16.mxu0 %v707
    %3823 = vmatpush1.bf16.msra.mxu0 %v706
    %3824 = vmatprep.subr.bf16.mxu0 %v711
    %3825 = vmatpush1.bf16.msra.mxu0 %v710
    %3826 = vmatprep.subr.bf16.mxu0 %v715
    %3827 = vmatpush1.bf16.msra.mxu0 %v714
    %3828 = vmatprep.subr.bf16.mxu0 %v719
    %3829 = vmatpush1.bf16.msra.mxu0 %v718
    %3830 = vmatprep.subr.bf16.mxu0 0
    %3831 = vmatpush1.bf16.msra.mxu0 0
    %3832 = vmatprep.subr.bf16.mxu0 0
    %3833 = vmatpush1.bf16.msra.mxu0 0
    %3834 = vmatprep.subr.bf16.mxu0 0
    %3835 = vmatpush1.bf16.msra.mxu0 0
    %3836 = vmatprep.subr.bf16.mxu0 0
    %3837 = vmatpush1.bf16.msra.mxu0 0
    %3838 = vmatprep.subr.bf16.mxu0 0
    %3839 = vmatpush1.bf16.msra.mxu0 0
    %3840 = vmatprep.subr.bf16.mxu0 0
    %3841 = vmatpush1.bf16.msra.mxu0 0
    %3842 = vmatprep.subr.bf16.mxu0 0
    %3843 = vmatpush1.bf16.msra.mxu0 0
    %3844 = vmatprep.subr.bf16.mxu0 0
    %3845 = vmatpush1.bf16.msra.mxu0 0
    %3846 = vmatprep.mubr.bf16.mxu0 0
    %3847 = vmatmul.mubr.bf16.gmra.mrb[0].mxu0 %v3771
    %v3848 = vpop.f32.mrb[0].mxu0
    %v3849 = vadd.f32 0.0, %v3848
    %v3850 = vpop.f32.mrb[0].mxu0
    %v3851 = vadd.f32 0.0, %v3850
    %v3852 = vpop.f32.mrb[0].mxu0
    %v3853 = vpop.f32.mrb[0].mxu0
    %3854 = vdwg.mxu0
    %v3859 = vrot.slane %v3808, 1
    %v3860 = vrot.slane %v3810, 1
    %v3861 = vrot.slane %v3849, 1
    %v3862 = vrot.slane %v3851, 1
    %v3863 = vrot.slane %v3808, 2
    %v3864 = vrot.slane %v3810, 2
    %v3865 = vrot.slane %v3849, 2
    %v3866 = vrot.slane %v3851, 2
    %v3867 = vrot.slane %v3808, 3
    %v3868 = vrot.slane %v3810, 3
    %v3869 = vrot.slane %v3849, 3
    %v3870 = vrot.slane %v3851, 3
    %v3871 = vrot.slane %v3808, 4
    %v3872 = vrot.slane %v3810, 4
    %v3873 = vrot.slane %v3849, 4
    %v3874 = vrot.slane %v3851, 4
    %v3875 = vrot.slane %v3808, 5
    %v3876 = vrot.slane %v3810, 5
    %v3877 = vrot.slane %v3849, 5
    %v3878 = vrot.slane %v3851, 5
    %v3879 = vrot.slane %v3808, 6
    %v3880 = vrot.slane %v3810, 6
    %v3881 = vrot.slane %v3849, 6
    %v3882 = vrot.slane %v3851, 6
    %v3883 = vrot.slane %v3808, 7
    %v3884 = vrot.slane %v3810, 7
    %v3885 = vrot.slane %v3849, 7
    %v3886 = vrot.slane %v3851, 7
    %v3919 = vadd.f32 %v449, %v3859
    %v3920 = vadd.f32 %v451, %v3860
    %v3921 = vadd.f32 %v522, %v3861
    %v3922 = vadd.f32 %v524, %v3862
    %v3923 = vadd.f32 %v453, %v3863
    %v3924 = vadd.f32 %v455, %v3864
    %v3925 = vadd.f32 %v526, %v3865
    %v3926 = vadd.f32 %v528, %v3866
    %v3927 = vadd.f32 %v459, %v3867
    %v3928 = vadd.f32 %v461, %v3868
    %v3929 = vadd.f32 %v532, %v3869
    %v3930 = vadd.f32 %v534, %v3870
    %v3931 = vadd.f32 %v463, %v3871
    %v3932 = vadd.f32 %v465, %v3872
    %v3933 = vadd.f32 %v536, %v3873
    %v3934 = vadd.f32 %v538, %v3874
    %v3935 = vadd.f32 %v469, %v3875
    %v3936 = vadd.f32 %v471, %v3876
    %v3937 = vadd.f32 %v542, %v3877
    %v3938 = vadd.f32 %v544, %v3878
    %v3939 = vadd.f32 %v473, %v3879
    %v3940 = vadd.f32 %v475, %v3880
    %v3941 = vadd.f32 %v546, %v3881
    %v3942 = vadd.f32 %v548, %v3882
    %v3943 = vadd.f32 %v479, %v3883
    %v3944 = vadd.f32 %v481, %v3884
    %v3945 = vadd.f32 %v552, %v3885
    %v3946 = vadd.f32 %v554, %v3886
    %v3947 = vadd.f32 %v483, %v3808
    %v3948 = vadd.f32 %v485, %v3810
    %v3949 = vadd.f32 %v556, %v3849
    %v3950 = vadd.f32 %v558, %v3851
    %v3951 = vxor.u32 %v3919, 2147483648
    %v3952 = vxor.u32 %v3923, 2147483648
    %v3953 = vxor.u32 %v3927, 2147483648
    %v3954 = vxor.u32 %v3931, 2147483648
    %v3955 = vxor.u32 %v3935, 2147483648
    %v3956 = vxor.u32 %v3939, 2147483648
    %v3957 = vxor.u32 %v3943, 2147483648
    %v3958 = vxor.u32 %v3947, 2147483648
    %v3959 = vmul.f32 %v3951, 1.442695
    %v3960 = vpow.pop %v3959
    %v3961 = vmul.f32 %v3952, 1.442695
    %v3962 = vpow.pop %v3961
    %v3963 = vmul.f32 %v3953, 1.442695
    %v3964 = vpow.pop %v3963
    %v3965 = vmul.f32 %v3954, 1.442695
    %v3966 = vpow.pop %v3965
    %v3967 = vmul.f32 %v3955, 1.442695
    %v3968 = vpow.pop %v3967
    %v3969 = vmul.f32 %v3956, 1.442695
    %v3970 = vpow.pop %v3969
    %v3971 = vmul.f32 %v3957, 1.442695
    %v3972 = vpow.pop %v3971
    %v3973 = vmul.f32 %v3958, 1.442695
    %v3974 = vpow.pop %v3973
    %v3975 = vadd.f32 %v3960, 1.0
    %v3976 = vadd.f32 %v3962, 1.0
    %v3977 = vadd.f32 %v3964, 1.0
    %v3978 = vadd.f32 %v3966, 1.0
    %v3979 = vadd.f32 %v3968, 1.0
    %v3980 = vadd.f32 %v3970, 1.0
    %v3981 = vadd.f32 %v3972, 1.0
    %v3982 = vadd.f32 %v3974, 1.0
    %v3983 = vrcp.pop %v3975
    %v3984 = vmul.f32 1.0, %v3983
    %v3985 = vrcp.pop %v3976
    %v3986 = vmul.f32 1.0, %v3985
    %v3987 = vrcp.pop %v3977
    %v3988 = vmul.f32 1.0, %v3987
    %v3989 = vrcp.pop %v3978
    %v3990 = vmul.f32 1.0, %v3989
    %v3991 = vrcp.pop %v3979
    %v3992 = vmul.f32 1.0, %v3991
    %v3993 = vrcp.pop %v3980
    %v3994 = vmul.f32 1.0, %v3993
    %v3995 = vrcp.pop %v3981
    %v3996 = vmul.f32 1.0, %v3995
    %v3997 = vrcp.pop %v3982
    %v3998 = vmul.f32 1.0, %v3997
    %v3999 = vxor.u32 %v3920, 2147483648
    %v4000 = vxor.u32 %v3924, 2147483648
    %v4001 = vxor.u32 %v3928, 2147483648
    %v4002 = vxor.u32 %v3932, 2147483648
    %v4003 = vxor.u32 %v3936, 2147483648
    %v4004 = vxor.u32 %v3940, 2147483648
    %v4005 = vxor.u32 %v3944, 2147483648
    %v4006 = vxor.u32 %v3948, 2147483648
    %v4007 = vmul.f32 %v3999, 1.442695
    %v4008 = vpow.pop %v4007
    %v4009 = vmul.f32 %v4000, 1.442695
    %v4010 = vpow.pop %v4009
    %v4011 = vmul.f32 %v4001, 1.442695
    %v4012 = vpow.pop %v4011
    %v4013 = vmul.f32 %v4002, 1.442695
    %v4014 = vpow.pop %v4013
    %v4015 = vmul.f32 %v4003, 1.442695
    %v4016 = vpow.pop %v4015
    %v4017 = vmul.f32 %v4004, 1.442695
    %v4018 = vpow.pop %v4017
    %v4019 = vmul.f32 %v4005, 1.442695
    %v4020 = vpow.pop %v4019
    %v4021 = vmul.f32 %v4006, 1.442695
    %v4022 = vpow.pop %v4021
    %v4023 = vadd.f32 %v4008, 1.0
    %v4024 = vadd.f32 %v4010, 1.0
    %v4025 = vadd.f32 %v4012, 1.0
    %v4026 = vadd.f32 %v4014, 1.0
    %v4027 = vadd.f32 %v4016, 1.0
    %v4028 = vadd.f32 %v4018, 1.0
    %v4029 = vadd.f32 %v4020, 1.0
    %v4030 = vadd.f32 %v4022, 1.0
    %v4031 = vrcp.pop %v4023
    %v4032 = vmul.f32 1.0, %v4031
    %v4033 = vrcp.pop %v4024
    %v4034 = vmul.f32 1.0, %v4033
    %v4035 = vrcp.pop %v4025
    %v4036 = vmul.f32 1.0, %v4035
    %v4037 = vrcp.pop %v4026
    %v4038 = vmul.f32 1.0, %v4037
    %v4039 = vrcp.pop %v4027
    %v4040 = vmul.f32 1.0, %v4039
    %v4041 = vrcp.pop %v4028
    %v4042 = vmul.f32 1.0, %v4041
    %v4043 = vrcp.pop %v4029
    %v4044 = vmul.f32 1.0, %v4043
    %v4045 = vrcp.pop %v4030
    %v4046 = vmul.f32 1.0, %v4045
    %v4047 = vtanh.pop %v3921
    %v4048 = vtanh.pop %v3925
    %v4049 = vtanh.pop %v3929
    %v4050 = vtanh.pop %v3933
    %v4051 = vtanh.pop %v3937
    %v4052 = vtanh.pop %v3941
    %v4053 = vtanh.pop %v3945
    %v4054 = vtanh.pop %v3949
    %v4055 = vxor.u32 %v3922, 2147483648
    %v4056 = vxor.u32 %v3926, 2147483648
    %v4057 = vxor.u32 %v3930, 2147483648
    %v4058 = vxor.u32 %v3934, 2147483648
    %v4059 = vxor.u32 %v3938, 2147483648
    %v4060 = vxor.u32 %v3942, 2147483648
    %v4061 = vxor.u32 %v3946, 2147483648
    %v4062 = vxor.u32 %v3950, 2147483648
    %v4063 = vmul.f32 %v4055, 1.442695
    %v4064 = vpow.pop %v4063
    %v4065 = vmul.f32 %v4056, 1.442695
    %v4066 = vpow.pop %v4065
    %v4067 = vmul.f32 %v4057, 1.442695
    %v4068 = vpow.pop %v4067
    %v4069 = vmul.f32 %v4058, 1.442695
    %v4070 = vpow.pop %v4069
    %v4071 = vmul.f32 %v4059, 1.442695
    %v4072 = vpow.pop %v4071
    %v4073 = vmul.f32 %v4060, 1.442695
    %v4074 = vpow.pop %v4073
    %v4075 = vmul.f32 %v4061, 1.442695
    %v4076 = vpow.pop %v4075
    %v4077 = vmul.f32 %v4062, 1.442695
    %v4078 = vpow.pop %v4077
    %v4079 = vadd.f32 %v4064, 1.0
    %v4080 = vadd.f32 %v4066, 1.0
    %v4081 = vadd.f32 %v4068, 1.0
    %v4082 = vadd.f32 %v4070, 1.0
    %v4083 = vadd.f32 %v4072, 1.0
    %v4084 = vadd.f32 %v4074, 1.0
    %v4085 = vadd.f32 %v4076, 1.0
    %v4086 = vadd.f32 %v4078, 1.0
    %v4087 = vrcp.pop %v4079
    %v4088 = vmul.f32 1.0, %v4087
    %v4089 = vrcp.pop %v4080
    %v4090 = vmul.f32 1.0, %v4089
    %v4091 = vrcp.pop %v4081
    %v4092 = vmul.f32 1.0, %v4091
    %v4093 = vrcp.pop %v4082
    %v4094 = vmul.f32 1.0, %v4093
    %v4095 = vrcp.pop %v4083
    %v4096 = vmul.f32 1.0, %v4095
    %v4097 = vrcp.pop %v4084
    %v4098 = vmul.f32 1.0, %v4097
    %v4099 = vrcp.pop %v4085
    %v4100 = vmul.f32 1.0, %v4099
    %v4101 = vrcp.pop %v4086
    %v4102 = vmul.f32 1.0, %v4101
    %v4111 = vrot.slane %v3709, 7
    %v4112 = vrot.slane %v3710, 7
    %v4113 = vrot.slane %v3711, 7
    %v4114 = vrot.slane %v3712, 7
    %v4115 = vrot.slane %v3713, 7
    %v4116 = vrot.slane %v3714, 7
    %v4117 = vrot.slane %v3715, 7
    %v4118 = vrot.slane %v3716, 7
    %v4127 = vmul.f32 %v4032, %v4111
    %v4128 = vmul.f32 %v4034, %v4112
    %v4129 = vmul.f32 %v4036, %v4113
    %v4130 = vmul.f32 %v4038, %v4114
    %v4131 = vmul.f32 %v4040, %v4115
    %v4132 = vmul.f32 %v4042, %v4116
    %v4133 = vmul.f32 %v4044, %v4117
    %v4134 = vmul.f32 %v4046, %v4118
    %v4135 = vmul.f32 %v3984, %v4047
    %v4136 = vmul.f32 %v3986, %v4048
    %v4137 = vmul.f32 %v3988, %v4049
    %v4138 = vmul.f32 %v3990, %v4050
    %v4139 = vmul.f32 %v3992, %v4051
    %v4140 = vmul.f32 %v3994, %v4052
    %v4141 = vmul.f32 %v3996, %v4053
    %v4142 = vmul.f32 %v3998, %v4054
    %v4143 = vadd.f32 %v4127, %v4135
    %v4144 = vadd.f32 %v4128, %v4136
    %v4145 = vadd.f32 %v4129, %v4137
    %v4146 = vadd.f32 %v4130, %v4138
    %v4147 = vadd.f32 %v4131, %v4139
    %v4148 = vadd.f32 %v4132, %v4140
    %v4149 = vadd.f32 %v4133, %v4141
    %v4150 = vadd.f32 %v4134, %v4142
    %v4151 = vtanh.pop %v4143
    %v4152 = vtanh.pop %v4144
    %v4153 = vtanh.pop %v4145
    %v4154 = vtanh.pop %v4146
    %v4155 = vtanh.pop %v4147
    %v4156 = vtanh.pop %v4148
    %v4157 = vtanh.pop %v4149
    %v4158 = vtanh.pop %v4150
    %v4159 = vmul.f32 %v4088, %v4151
    %v4160 = vmul.f32 %v4090, %v4152
    %v4161 = vmul.f32 %v4092, %v4153
    %v4162 = vmul.f32 %v4094, %v4154
    %v4163 = vmul.f32 %v4096, %v4155
    %v4164 = vmul.f32 %v4098, %v4156
    %v4165 = vmul.f32 %v4100, %v4157
    %v4166 = vmul.f32 %v4102, %v4158
    %v4167 = vpack.c.bf16 %v4159, %v4159
    %v4168 = vpack.c.bf16 %v4160, %v4160
    %v4169 = vpack.c.bf16 %v4161, %v4161
    %v4170 = vpack.c.bf16 %v4162, %v4162
    %v4171 = vpack.c.bf16 %v4163, %v4163
    %v4172 = vpack.c.bf16 %v4164, %v4164
    %v4173 = vpack.c.bf16 %v4165, %v4165
    %v4174 = vpack.c.bf16 %v4166, %v4166
    %v4175 = vld [vmem:[%s6] sm:$0xf]
    %v4176 = vld [vmem:[%s6 + $0x4] sm:$0xf]
    %v4177 = vld [vmem:[%s6 + $0x8] sm:$0xf]
    %v4178 = vld [vmem:[%s6 + $0xc] sm:$0xf]
    %v4179 = vld [vmem:[%s6 + $0x10] sm:$0xf]
    %v4180 = vld [vmem:[%s6 + $0x14] sm:$0xf]
    %v4181 = vld [vmem:[%s6 + $0x18] sm:$0xf]
    %v4182 = vld [vmem:[%s6 + $0x1c] sm:$0xf]
    %v4183 = vld [vmem:[%s6 + $0x20] sm:$0xf]
    %v4184 = vld [vmem:[%s6 + $0x24] sm:$0xf]
    %v4185 = vld [vmem:[%s6 + $0x28] sm:$0xf]
    %v4186 = vld [vmem:[%s6 + $0x2c] sm:$0xf]
    %v4187 = vld [vmem:[%s6 + $0x30] sm:$0xf]
    %v4188 = vld [vmem:[%s6 + $0x34] sm:$0xf]
    %v4189 = vld [vmem:[%s6 + $0x38] sm:$0xf]
    %v4190 = vld [vmem:[%s6 + $0x3c] sm:$0xf]
    %v4191 = vld [vmem:[%s7] sm:$0x1]
    %v4193 = vlaneseq
    %v4194 = vshrl.u32 %v4193, 7
    %v4195 = vsub.s32 0, %v4194
    %v4196 = vrot.slane %v4191, %v4195
    %v4206 = vunpack.c.l.b16 %v4167
    %v4207 = vunpack.c.l.b16 %v4168
    %v4208 = vunpack.c.l.b16 %v4169
    %v4209 = vunpack.c.l.b16 %v4170
    %v4210 = vunpack.c.l.b16 %v4171
    %v4211 = vunpack.c.l.b16 %v4172
    %v4212 = vunpack.c.l.b16 %v4173
    %v4213 = vunpack.c.l.b16 %v4174
    %v4214 = vrot.slane %v4206, 7
    %v4215 = vrot.slane %v4207, 6
    %v4216 = vsel %vm1147, %v4215, %v4214
    %v4217 = vrot.slane %v4208, 5
    %v4218 = vsel %vm1150, %v4217, %v4216
    %v4219 = vrot.slane %v4209, 4
    %v4220 = vsel %vm1153, %v4219, %v4218
    %v4221 = vrot.slane %v4210, 3
    %v4222 = vsel %vm1156, %v4221, %v4220
    %v4223 = vrot.slane %v4211, 2
    %v4224 = vsel %vm1159, %v4223, %v4222
    %v4225 = vrot.slane %v4212, 1
    %v4226 = vsel %vm1162, %v4225, %v4224
    %v4227 = vsel %vm1165, %v4213, %v4226
    %v4228 = vpack.c.b16 %v4227, %v4227
    %v4246 = vunpack.c.l.b16 %v4175
    %v4247 = vunpack.c.l.b16 %v4176
    %v4248 = vunpack.c.l.b16 %v4177
    %v4249 = vunpack.c.l.b16 %v4178
    %v4250 = vunpack.c.l.b16 %v4179
    %v4251 = vunpack.c.l.b16 %v4180
    %v4252 = vunpack.c.l.b16 %v4181
    %v4253 = vunpack.c.l.b16 %v4182
    %v4254 = vunpack.c.l.b16 %v4183
    %v4255 = vunpack.c.l.b16 %v4184
    %v4256 = vunpack.c.l.b16 %v4185
    %v4257 = vunpack.c.l.b16 %v4186
    %v4258 = vunpack.c.l.b16 %v4187
    %v4259 = vunpack.c.l.b16 %v4188
    %v4260 = vunpack.c.l.b16 %v4189
    %v4261 = vunpack.c.l.b16 %v4190
    %v4262 = vpack.c.b16 %v4247, %v4246
    %v4263 = vpack.c.b16 %v4249, %v4248
    %v4264 = vpack.c.b16 %v4251, %v4250
    %v4265 = vpack.c.b16 %v4253, %v4252
    %v4266 = vpack.c.b16 %v4255, %v4254
    %v4267 = vpack.c.b16 %v4257, %v4256
    %v4268 = vpack.c.b16 %v4259, %v4258
    %v4269 = vpack.c.b16 %v4261, %v4260
    %4278 = vmatprep.subr.bf16.mxu0 0
    %4279 = vmatpush1.bf16.msra.mxu0 %v4262
    %4280 = vmatprep.subr.bf16.mxu0 0
    %4281 = vmatpush1.bf16.msra.mxu0 %v4263
    %4282 = vmatprep.subr.bf16.mxu0 0
    %4283 = vmatpush1.bf16.msra.mxu0 %v4264
    %4284 = vmatprep.subr.bf16.mxu0 0
    %4285 = vmatpush1.bf16.msra.mxu0 %v4265
    %4286 = vmatprep.subr.bf16.mxu0 0
    %4287 = vmatpush1.bf16.msra.mxu0 %v4266
    %4288 = vmatprep.subr.bf16.mxu0 0
    %4289 = vmatpush1.bf16.msra.mxu0 %v4267
    %4290 = vmatprep.subr.bf16.mxu0 0
    %4291 = vmatpush1.bf16.msra.mxu0 %v4268
    %4292 = vmatprep.subr.bf16.mxu0 0
    %4293 = vmatpush1.bf16.msra.mxu0 %v4269
    %4294 = vmatprep.subr.bf16.mxu0 0
    %4295 = vmatpush1.bf16.msra.mxu0 0
    %4296 = vmatprep.subr.bf16.mxu0 0
    %4297 = vmatpush1.bf16.msra.mxu0 0
    %4298 = vmatprep.subr.bf16.mxu0 0
    %4299 = vmatpush1.bf16.msra.mxu0 0
    %4300 = vmatprep.subr.bf16.mxu0 0
    %4301 = vmatpush1.bf16.msra.mxu0 0
    %4302 = vmatprep.subr.bf16.mxu0 0
    %4303 = vmatpush1.bf16.msra.mxu0 0
    %4304 = vmatprep.subr.bf16.mxu0 0
    %4305 = vmatpush1.bf16.msra.mxu0 0
    %4306 = vmatprep.subr.bf16.mxu0 0
    %4307 = vmatpush1.bf16.msra.mxu0 0
    %4308 = vmatprep.subr.bf16.mxu0 0
    %4309 = vmatpush1.bf16.msra.mxu0 0
    %4310 = vmatprep.mubr.bf16.mxu0 0
    %4311 = vmatmul.mubr.bf16.gmra.mrb[0].mxu0 %v4228
    %v4312 = vpop.f32.mrb[0].mxu0
    %v4313 = vadd.f32 %v4196, %v4312
    %v4314 = vpop.f32.mrb[0].mxu0
    %v4315 = vpop.f32.mrb[0].mxu0
    %v4316 = vpop.f32.mrb[0].mxu0
    %4317 = vdwg.mxu0
    %4318 = vst [vmem:[#allocation8] sm:$0xff] %v4313
    // Predicated region
    $region46: #{tpu_custom_call.1} parent=1 // pred_check
      _
    $region47: #{tpu_custom_call.1} parent=1 // pred_check_branch
      %4320 = sbr.rel (0) target = $region49
    $region48: #{tpu_custom_call.1} parent=1 // pred_region
      %s4322 = ssub.s32 128, 128
      %4323 = vsyncadd [#allocation4], %s4322
      %s4325 = sshll.u32 [#allocation8], 4
      %s4326 = int_to_ptr.vmem [resolvable:$true] %s4325
      %4328 = dma.vmem_to_hbm [thread:$0]  %s4326, 128, %s8, [#allocation4]
    $region49: #{tpu_custom_call.1} parent=1 // pred_fallthru
      _
    // Predicated region
    $region50: #{tpu_custom_call.1} parent=1 // pred_check
      _
    $region51: #{tpu_custom_call.1} parent=1 // pred_check_branch
      %4330 = sbr.rel (0) target = $region53
    $region52: #{tpu_custom_call.1} parent=1 // pred_region
      %4331 = dma.done [#allocation4], 128
    $region53: #{tpu_custom_call.1} parent=1 // pred_fallthru
      _
    %4332 = vsyncpa [#allocation3], 1
    %4333 = vsyncpa [#allocation6], 1
    %4334 = vsyncpa [#allocation4], 1

</llo_original>
